<compile_context>
chip_gen: v7x
topology: tpu7x:2x2x1
jax: 0.10.0
libtpu: 0.0.40
codegen_flags: <defaults>
</compile_context>

<pallas_src>
import jax
import jax.numpy as jnp
from jax import lax
from jax.experimental import pallas as pl
from jax.experimental.pallas import tpu as pltpu


# --------------------------- fused Pallas kernel ---------------------------

def _build_upblock_kernel(block_meta, Ho, Kpad):
    """Whole up_block forward for one lane-packed group of images.

    refs = (x1, x2, lh, rch, bch, <per-block weights...>, out, pad_scratch)
    per block: s1, b1, m1, s2, b2, m2 [, ssc, bsc, msc]
    """
    def kernel(*refs):
        x1_ref, x2_ref, lh_ref, rch_ref, bch_ref = refs[:5]
        o_ref = refs[-2]
        pad = refs[-1]

        # Only the two vertical halo rows of the pad scratch ever need to be
        # zero; rows 1..Ho are fully overwritten by every conv.  Zeroed every
        # grid step -> correct on megacore (each core re-initialises its own
        # scratch), and only 2 row-stores instead of a full-slab fill.
        zrow = jnp.zeros((1, Kpad), pad.dtype)
        pad[pl.ds(0, 1), pl.ds(0, Kpad)] = zrow
        pad[pl.ds(Ho + 1, 1), pl.ds(0, Kpad)] = zrow

        # Fused bilinear upsample (align_corners=True) + 1x1 conv_ch + bias:
        #   x1c = L_h @ (x1 @ R) + b,  R = (width-interp) composed with conv_ch.
        x1 = x1_ref[0].astype(jnp.bfloat16)                        # (H1, B*W1*Cin)
        t = jnp.dot(x1, rch_ref[...], preferred_element_type=jnp.float32)
        x1c = (jnp.dot(lh_ref[...], t, preferred_element_type=jnp.float32)
               + bch_ref[...])                                     # (Ho, B*Wo*Cout)

        # torch.cat([x2, x1], dim=1) realised as a lane-axis concat; the first
        # block's weights are row-permuted to this [x2 | x1c] split layout.
        cur = jnp.concatenate([x2_ref[0].astype(jnp.float32), x1c], axis=-1)

        idx = 5
        for meta in block_meta:
            kin, kout, has_sc = meta["kin"], meta["kout"], meta["has_sc"]
            if has_sc:
                s1, b1, m1, s2, b2, m2, ssc, bsc, msc = refs[idx:idx + 9]
                idx += 9
            else:
                s1, b1, m1, s2, b2, m2 = refs[idx:idx + 6]
                idx += 6

            # BN1 + ReLU + conv1 (3x3, pad=1): three vertical-tap banded matmuls.
            y1 = jnp.maximum(cur * s1[...] + b1[...], 0.0)
            pad[pl.ds(1, Ho), pl.ds(0, kin)] = y1
            t1 = (jnp.dot(pad[pl.ds(0, Ho), pl.ds(0, kin)].astype(jnp.bfloat16),
                          m1[0], preferred_element_type=jnp.float32)
                  + jnp.dot(pad[pl.ds(1, Ho), pl.ds(0, kin)].astype(jnp.bfloat16),
                            m1[1], preferred_element_type=jnp.float32)
                  + jnp.dot(pad[pl.ds(2, Ho), pl.ds(0, kin)].astype(jnp.bfloat16),
                            m1[2], preferred_element_type=jnp.float32))

            # BN2 + ReLU + conv2 (3x3, pad=1).
            y2 = jnp.maximum(t1 * s2[...] + b2[...], 0.0)
            pad[pl.ds(1, Ho), pl.ds(0, kout)] = y2
            out = (jnp.dot(pad[pl.ds(0, Ho), pl.ds(0, kout)].astype(jnp.bfloat16),
                           m2[0], preferred_element_type=jnp.float32)
                   + jnp.dot(pad[pl.ds(1, Ho), pl.ds(0, kout)].astype(jnp.bfloat16),
                             m2[1], preferred_element_type=jnp.float32)
                   + jnp.dot(pad[pl.ds(2, Ho), pl.ds(0, kout)].astype(jnp.bfloat16),
                             m2[2], preferred_element_type=jnp.float32))

            # Shortcut / identity residual accumulated in-register (no zero DMA).
            if has_sc:
                r = jnp.maximum(cur * ssc[...] + bsc[...], 0.0).astype(jnp.bfloat16)
                out = out + jnp.dot(r, msc[...], preferred_element_type=jnp.float32)
            else:
                out = out + cur          # kin == kout asserted at build time
            cur = out

        o_ref[0] = cur.astype(o_ref.dtype)

    return kernel


# --------------------------- weight repacking (JAX glue) ---------------------------

def bn_fold(gamma, beta, mean, var, eps=1e-5):
    scale = gamma / jnp.sqrt(var + eps)
    shift = beta - mean * scale
    return scale, shift


def _interp_matrix(n_in, n_out):
    """align_corners=True linear-interp matrix M (n_out, n_in): out = M @ in."""
    if n_in == 1:
        return jnp.ones((n_out, 1), jnp.float32)
    if n_out == 1:
        return jax.nn.one_hot(jnp.zeros((1,), jnp.int32), n_in, dtype=jnp.float32)
    t = jnp.arange(n_out, dtype=jnp.float32) * (n_in - 1) / (n_out - 1)
    i0 = jnp.clip(jnp.floor(t).astype(jnp.int32), 0, n_in - 2)
    f = t - i0.astype(jnp.float32)
    return (jax.nn.one_hot(i0, n_in, dtype=jnp.float32) * (1.0 - f)[:, None]
            + jax.nn.one_hot(i0 + 1, n_in, dtype=jnp.float32) * f[:, None])


def _conv3x3_banded(w_hwio, W):
    """(3,3,Cin,Cout) HWIO -> (3, W*Cin, W*Cout) banded per-ky matrices.

    M[ky][win*Cin+ci, wout*Cout+co] = w[ky, win-wout+1, ci, co] (else 0); the
    horizontal zero padding is implicit in the band structure.
    """
    Cin, Cout = w_hwio.shape[2], w_hwio.shape[3]
    wi = jnp.arange(W)
    kx = jnp.arange(3)
    sel = (wi[None, :, None] == wi[None, None, :] + kx[:, None, None] - 1)
    sel = sel.astype(jnp.float32)                                  # (3, Win, Wout)
    m = jnp.einsum('xab,yxio->yaibo', sel, w_hwio.astype(jnp.float32))
    return m.reshape(3, W * Cin, W * Cout)


def _conv1x1_block_diag(w_io, W):
    return jnp.kron(jnp.eye(W, dtype=jnp.float32), w_io.astype(jnp.float32))


def _lane_pack_mat(m, B):
    """Block-diag duplicate a (K, N) weight across B lane-packed images."""
    return jnp.kron(jnp.eye(B, dtype=jnp.float32), m)


def _lane_pack_taps(m3, B):
    return jnp.stack([_lane_pack_mat(m3[i], B) for i in range(m3.shape[0])], axis=0)


def _tile_row(v, reps):
    """(C,) per-channel vector -> (1, reps*C) row matching the lane-dense slab."""
    return jnp.tile(v.astype(jnp.float32), reps).reshape(1, -1)


def _block_mats(blk, Wo, B, split):
    """Build the lane-packed banded weights / BN rows for one ResConvBlock.

    If `split` is not None, the block input is the lane concat [x2 | x1c] and the
    weights are row-permuted accordingly (first `split` input channels = x2).
    """
    w1, w2 = blk["w1"], blk["w2"]
    cin, cout = w1.shape[2], w1.shape[3]
    has_sc = "w_sc" in blk
    if not has_sc:
        assert cin == cout, (cin, cout)   # identity residual needs matching widths

    def row(v):
        if split is None:
            return _tile_row(v, B * Wo)
        return jnp.concatenate([_tile_row(v[:split], B * Wo),
                                _tile_row(v[split:], B * Wo)], axis=1)

    def banded(w):
        if split is None:
            return _lane_pack_taps(_conv3x3_banded(w, Wo), B)
        return jnp.concatenate(
            [_lane_pack_taps(_conv3x3_banded(w[:, :, :split, :], Wo), B),
             _lane_pack_taps(_conv3x3_banded(w[:, :, split:, :], Wo), B)], axis=1)

    s1, b1 = blk["bn1"]
    s2, b2 = blk["bn2"]
    mats = {
        "s1": row(s1), "b1": row(b1),
        "m1": banded(w1).astype(jnp.bfloat16),
        "s2": _tile_row(s2, B * Wo), "b2": _tile_row(b2, B * Wo),
        "m2": _lane_pack_taps(_conv3x3_banded(w2, Wo), B).astype(jnp.bfloat16),
    }
    meta = {"has_sc": has_sc, "kin": B * Wo * cin, "kout": B * Wo * cout}
    if has_sc:
        ssc, bsc = blk["bn_sc"]
        wsc = blk["w_sc"]
        mats["ssc"] = row(ssc)
        mats["bsc"] = row(bsc)
        if split is None:
            msc = _lane_pack_mat(_conv1x1_block_diag(wsc, Wo), B)
        else:
            msc = jnp.concatenate(
                [_lane_pack_mat(_conv1x1_block_diag(wsc[:split], Wo), B),
                 _lane_pack_mat(_conv1x1_block_diag(wsc[split:], Wo), B)], axis=0)
        mats["msc"] = msc.astype(jnp.bfloat16)
    return mats, meta


def _const_spec(a):
    zeros = (0,) * a.ndim
    return pl.BlockSpec(a.shape, lambda n, _z=zeros: _z)


# --------------------------- forward wrapper ---------------------------

def up_block_forward(x1, x2, params, scale=(2, 2)):
    # x1: (N, H1, W1, in_ch), x2: (N, Ho, Wo, out_ch)   [NHWC]
    N, H1, W1, in_ch = x1.shape
    N2, Ho, Wo, c_x2 = x2.shape
    out_ch = params["conv_ch_w"].shape[1]
    assert N2 == N and Ho == H1 * scale[0] and Wo == W1 * scale[1]
    assert c_x2 == out_ch

    # Lane-pack factor: make the dominant lane width (B*Wo*out_ch) >= 128.
    B = max(1, min(8, -(-128 // (Wo * out_ch))))
    Npad = -(-N // B) * B
    if Npad != N:
        padw = ((0, Npad - N), (0, 0), (0, 0), (0, 0))
        x1 = jnp.pad(x1, padw)
        x2 = jnp.pad(x2, padw)
    G = Npad // B

    def pack(x):
        n, h, w, c = x.shape
        return (x.reshape(G, B, h, w * c).transpose(0, 2, 1, 3)
                .reshape(G, h, B * w * c))

    x1p, x2p = pack(x1), pack(x2)
    Kx1 = B * W1 * in_ch
    Kx2 = B * Wo * out_ch

    # Fused (upsample + conv_ch) weights: x1c = L_h @ (x1 @ R) + b.
    lh = _interp_matrix(H1, Ho)                                        # (Ho, H1) f32
    mw = _interp_matrix(W1, Wo)                                        # (Wo, W1)
    rch = _lane_pack_mat(jnp.kron(mw.T, params["conv_ch_w"].astype(jnp.float32)),
                         B).astype(jnp.bfloat16)                       # (Kx1, Kx2)
    bch = _tile_row(params["conv_ch_b"], B * Wo)                       # (1, Kx2)

    args = [x1p, x2p, lh, rch, bch]
    in_specs = [
        pl.BlockSpec((1, H1, Kx1), lambda n: (n, 0, 0)),
        pl.BlockSpec((1, Ho, Kx2), lambda n: (n, 0, 0)),
        _const_spec(lh), _const_spec(rch), _const_spec(bch),
    ]

    block_meta = []
    split = c_x2
    for bi, blk in enumerate(params["blocks"]):
        mats, meta = _block_mats(blk, Wo, B, split if bi == 0 else None)
        block_meta.append(meta)
        keys = ["s1", "b1", "m1", "s2", "b2", "m2"]
        if meta["has_sc"]:
            keys += ["ssc", "bsc", "msc"]
        for k in keys:
            args.append(mats[k])
            in_specs.append(_const_spec(mats[k]))

    Kpad = max(max(m["kin"], m["kout"]) for m in block_meta)
    Klast = block_meta[-1]["kout"]

    out = pl.pallas_call(
        _build_upblock_kernel(block_meta, Ho, Kpad),
        out_shape=jax.ShapeDtypeStruct((G, Ho, Klast), jnp.float32),
        grid=(G,),
        in_specs=in_specs,
        out_specs=pl.BlockSpec((1, Ho, Klast), lambda n: (n, 0, 0)),
        scratch_shapes=[pltpu.VMEM((Ho + 2, Kpad), jnp.float32)],
        compiler_params=pltpu.CompilerParams(
            dimension_semantics=("parallel",),
            vmem_limit_bytes=32 * 1024 * 1024),
    )(*args)

    cout = Klast // (B * Wo)
    out = (out.reshape(G, Ho, B, Wo * cout).transpose(0, 2, 1, 3)
              .reshape(Npad, Ho, Wo, cout))
    return out[:N]


# --------------------------- pure-JAX reference (verification) ---------------------------

def upsample_bilinear_align_corners(x, sh, sw):
    N, H, W, C = x.shape
    Ho, Wo = H * sh, W * sw

    def src_idx(n_in, n_out):
        if n_out == 1 or n_in == 1:
            return jnp.zeros((n_out,), jnp.int32), jnp.zeros((n_out,), jnp.float32)
        t = jnp.arange(n_out, dtype=jnp.float32) * (n_in - 1) / (n_out - 1)
        i0 = jnp.clip(jnp.floor(t).astype(jnp.int32), 0, n_in - 2)
        return i0, t - i0.astype(jnp.float32)

    h0, hf = src_idx(H, Ho)
    w0, wf = src_idx(W, Wo)
    h1 = jnp.clip(h0 + 1, 0, H - 1)
    w1 = jnp.clip(w0 + 1, 0, W - 1)
    top = (x[:, h0, :, :] * (1.0 - hf)[None, :, None, None]
           + x[:, h1, :, :] * hf[None, :, None, None])
    return (top[:, :, w0, :] * (1.0 - wf)[None, None, :, None]
            + top[:, :, w1, :] * wf[None, None, :, None])


def _conv_ref(x, w_hwio, padding):
    return lax.conv_general_dilated(
        x, w_hwio, window_strides=(1, 1), padding=padding,
        dimension_numbers=("NHWC", "HWIO", "NHWC"),
        precision=lax.Precision.HIGHEST)


def up_block_reference(x1, x2, params, scale=(2, 2)):
    x1u = upsample_bilinear_align_corners(x1, *scale)
    x1c = _conv_ref(x1u, params["conv_ch_w"][None, None], ((0, 0), (0, 0))) + params["conv_ch_b"]
    out = jnp.concatenate([x2, x1c], axis=-1)
    for blk in params["blocks"]:
        s1, b1 = blk["bn1"]
        s2, b2 = blk["bn2"]
        y = jnp.maximum(out * s1 + b1, 0.0)
        y = _conv_ref(y, blk["w1"], ((1, 1), (1, 1)))
        y = jnp.maximum(y * s2 + b2, 0.0)
        y = _conv_ref(y, blk["w2"], ((1, 1), (1, 1)))
        if "w_sc" in blk:
            ss, sb = blk["bn_sc"]
            r = jnp.maximum(out * ss + sb, 0.0)
            r = _conv_ref(r, blk["w_sc"][None, None], ((0, 0), (0, 0)))
        else:
            r = out
        out = y + r
    return out


# --------------------------- params ---------------------------

def init_params(key, in_ch, out_ch, num_block):
    state = {"key": key}

    def take(shape, kind="normal"):
        state["key"], sub = jax.random.split(state["key"])
        if kind == "normal":
            return 0.1 * jax.random.normal(sub, shape, jnp.float32)
        return jax.random.uniform(sub, shape, jnp.float32, 0.5, 1.5)

    def bn(ch):
        gamma = take((ch,), "uniform")
        beta = take((ch,))
        mean = take((ch,))
        var = take((ch,), "uniform")
        return bn_fold(gamma, beta, mean, var)

    params = {
        "conv_ch_w": take((in_ch, out_ch)),   # 1x1 conv weight as (Cin, Cout)
        "conv_ch_b": take((out_ch,)),
    }
    blocks = []
    ch = 2 * out_ch
    for _ in range(num_block):
        blk = {
            "bn1": bn(ch),
            "w1": take((3, 3, ch, out_ch)),   # HWIO
            "bn2": bn(out_ch),
            "w2": take((3, 3, out_ch, out_ch)),
        }
        if ch != out_ch:                       # shortcut: BN -> ReLU -> 1x1 conv
            blk["bn_sc"] = bn(ch)
            blk["w_sc"] = take((ch, out_ch))
        blocks.append(blk)
        ch = out_ch
    params["blocks"] = blocks
    return params


# --------------------------- main ---------------------------

if __name__ == "__main__":
    N, in_ch, out_ch, H, W, num_block = 2, 8, 4, 8, 8, 2
    key = jax.random.PRNGKey(0)
    k1, k2, k3 = jax.random.split(key, 3)

    # PyTorch-equivalent NCHW inputs would be x1:(2,8,8,8), x2:(2,4,16,16); here NHWC.
    x1 = jax.random.normal(k1, (N, H, W, in_ch), jnp.float32)
    x2 = jax.random.normal(k2, (N, 2 * H, 2 * W, out_ch), jnp.float32)
    params = init_params(k3, in_ch, out_ch, num_block)

    fwd = jax.jit(up_block_forward)
    out = jax.block_until_ready(fwd(x1, x2, params))
    assert out.shape == (N, 2 * H, 2 * W, out_ch), out.shape

    ref = jax.block_until_ready(up_block_reference(x1, x2, params, scale=(2, 2)))
    max_err = float(jnp.max(jnp.abs(out - ref)))
    # bf16 MXU operands (f32 accumulation) vs the f32 / Precision.HIGHEST
    # reference give ~1e-2-scale absolute deviations; 5e-2 is the bf16 budget.
    if max_err < 5e-2:
        print("KERNEL_OK")
    else:
        raise AssertionError(f"Pallas output mismatch vs reference: max_err={max_err}")
</pallas_src>

<mosaic_0001>
module attributes {stable_mosaic.version = 11 : i64} {
  func.func @kernel(%arg0: i32, %arg1: memref<1x8x128xf32, #tpu.memory_space<vmem>>, %arg2: memref<1x16x128xf32, #tpu.memory_space<vmem>>, %arg3: memref<16x8xf32, #tpu.memory_space<vmem>>, %arg4: memref<128x128xbf16, #tpu.memory_space<vmem>>, %arg5: memref<1x128xf32, #tpu.memory_space<vmem>>, %arg6: memref<1x256xf32, #tpu.memory_space<vmem>>, %arg7: memref<1x256xf32, #tpu.memory_space<vmem>>, %arg8: memref<3x256x128xbf16, #tpu.memory_space<vmem>>, %arg9: memref<1x128xf32, #tpu.memory_space<vmem>>, %arg10: memref<1x128xf32, #tpu.memory_space<vmem>>, %arg11: memref<3x128x128xbf16, #tpu.memory_space<vmem>>, %arg12: memref<1x256xf32, #tpu.memory_space<vmem>>, %arg13: memref<1x256xf32, #tpu.memory_space<vmem>>, %arg14: memref<256x128xbf16, #tpu.memory_space<vmem>>, %arg15: memref<1x128xf32, #tpu.memory_space<vmem>>, %arg16: memref<1x128xf32, #tpu.memory_space<vmem>>, %arg17: memref<3x128x128xbf16, #tpu.memory_space<vmem>>, %arg18: memref<1x128xf32, #tpu.memory_space<vmem>>, %arg19: memref<1x128xf32, #tpu.memory_space<vmem>>, %arg20: memref<3x128x128xbf16, #tpu.memory_space<vmem>>, %arg21: memref<1x16x128xf32, #tpu.memory_space<vmem>>, %arg22: memref<18x256xf32, #tpu.memory_space<vmem>>) attributes {dimension_semantics = [#tpu.dimension_semantics<parallel>], iteration_bounds = array<i64: 1>, scalar_prefetch = 0 : i64, scratch_operands = 1 : i64, tpu.core_type = #tpu.core_type<tc>, window_params = [{transform_indices = @transform_0, window_bounds = array<i64: 1, 8, 128>}, {transform_indices = @transform_1, window_bounds = array<i64: 1, 16, 128>}, {pipeline_mode = #tpu.pipeline_mode<synchronous>, transform_indices = @transform_2, window_bounds = array<i64: 16, 8>}, {pipeline_mode = #tpu.pipeline_mode<synchronous>, transform_indices = @transform_3, window_bounds = array<i64: 128, 128>}, {pipeline_mode = #tpu.pipeline_mode<synchronous>, transform_indices = @transform_4, window_bounds = array<i64: 1, 128>}, {pipeline_mode = #tpu.pipeline_mode<synchronous>, transform_indices = @transform_5, window_bounds = array<i64: 1, 256>}, {pipeline_mode = #tpu.pipeline_mode<synchronous>, transform_indices = @transform_6, window_bounds = array<i64: 1, 256>}, {pipeline_mode = #tpu.pipeline_mode<synchronous>, transform_indices = @transform_7, window_bounds = array<i64: 3, 256, 128>}, {pipeline_mode = #tpu.pipeline_mode<synchronous>, transform_indices = @transform_8, window_bounds = array<i64: 1, 128>}, {pipeline_mode = #tpu.pipeline_mode<synchronous>, transform_indices = @transform_9, window_bounds = array<i64: 1, 128>}, {pipeline_mode = #tpu.pipeline_mode<synchronous>, transform_indices = @transform_10, window_bounds = array<i64: 3, 128, 128>}, {pipeline_mode = #tpu.pipeline_mode<synchronous>, transform_indices = @transform_11, window_bounds = array<i64: 1, 256>}, {pipeline_mode = #tpu.pipeline_mode<synchronous>, transform_indices = @transform_12, window_bounds = array<i64: 1, 256>}, {pipeline_mode = #tpu.pipeline_mode<synchronous>, transform_indices = @transform_13, window_bounds = array<i64: 256, 128>}, {pipeline_mode = #tpu.pipeline_mode<synchronous>, transform_indices = @transform_14, window_bounds = array<i64: 1, 128>}, {pipeline_mode = #tpu.pipeline_mode<synchronous>, transform_indices = @transform_15, window_bounds = array<i64: 1, 128>}, {pipeline_mode = #tpu.pipeline_mode<synchronous>, transform_indices = @transform_16, window_bounds = array<i64: 3, 128, 128>}, {pipeline_mode = #tpu.pipeline_mode<synchronous>, transform_indices = @transform_17, window_bounds = array<i64: 1, 128>}, {pipeline_mode = #tpu.pipeline_mode<synchronous>, transform_indices = @transform_18, window_bounds = array<i64: 1, 128>}, {pipeline_mode = #tpu.pipeline_mode<synchronous>, transform_indices = @transform_19, window_bounds = array<i64: 3, 128, 128>}, {transform_indices = @transform_20, window_bounds = array<i64: 1, 16, 128>}]} {
    %cst = arith.constant 0.000000e+00 : f32
    %0 = vector.broadcast %cst : f32 to vector<1x256xf32>
    %c0 = arith.constant 0 : index
    %c0_0 = arith.constant 0 : index
    %1 = vector.load %arg22[%c0, %c0_0] : memref<18x256xf32, #tpu.memory_space<vmem>>, vector<1x256xf32>
    tpu.vector_store %arg22[%c0, %c0_0], %0 {strides = array<i32>} : memref<18x256xf32, #tpu.memory_space<vmem>>, vector<1x256xf32>,
    %c17 = arith.constant 17 : index
    %c0_1 = arith.constant 0 : index
    %2 = vector.load %arg22[%c17, %c0_1] : memref<18x256xf32, #tpu.memory_space<vmem>>, vector<1x256xf32>
    tpu.vector_store %arg22[%c17, %c0_1], %0 {strides = array<i32>} : memref<18x256xf32, #tpu.memory_space<vmem>>, vector<1x256xf32>,
    %c0_2 = arith.constant 0 : index
    %c0_3 = arith.constant 0 : index
    %c0_4 = arith.constant 0 : index
    %3 = vector.load %arg1[%c0_2, %c0_3, %c0_4] : memref<1x8x128xf32, #tpu.memory_space<vmem>>, vector<1x8x128xf32>
    %4 = vector.shape_cast %3 : vector<1x8x128xf32> to vector<8x128xf32>
    %5 = arith.truncf %4 : vector<8x128xf32> to vector<8x128xbf16>
    %c0_5 = arith.constant 0 : index
    %c0_6 = arith.constant 0 : index
    %6 = vector.load %arg4[%c0_5, %c0_6] : memref<128x128xbf16, #tpu.memory_space<vmem>>, vector<128x128xbf16>
    %cst_7 = arith.constant dense<0.000000e+00> : vector<8x128xf32>
    %7 = tpu.matmul %5, %6, %cst_7 {dimension_numbers = #tpu.dot_dimension_numbers<[1], [0], [0], [1], [0, 0, 1, 1], [], []>} : vector<8x128xbf16>, vector<128x128xbf16>, vector<8x128xf32> -> vector<8x128xf32>
    %c0_8 = arith.constant 0 : index
    %c0_9 = arith.constant 0 : index
    %8 = vector.load %arg3[%c0_8, %c0_9] : memref<16x8xf32, #tpu.memory_space<vmem>>, vector<16x8xf32>
    %cst_10 = arith.constant dense<0.000000e+00> : vector<16x128xf32>
    %9 = tpu.matmul %8, %7, %cst_10 {dimension_numbers = #tpu.dot_dimension_numbers<[1], [0], [0], [1], [0, 0, 1, 1], [], []>} : vector<16x8xf32>, vector<8x128xf32>, vector<16x128xf32> -> vector<16x128xf32>
    %c0_11 = arith.constant 0 : index
    %c0_12 = arith.constant 0 : index
    %10 = vector.load %arg5[%c0_11, %c0_12] : memref<1x128xf32, #tpu.memory_space<vmem>>, vector<1x128xf32>
    %11 = vector.broadcast %10 : vector<1x128xf32> to vector<16x128xf32>
    %12 = arith.addf %9, %11 : vector<16x128xf32>
    %c0_13 = arith.constant 0 : index
    %c0_14 = arith.constant 0 : index
    %c0_15 = arith.constant 0 : index
    %13 = vector.load %arg2[%c0_13, %c0_14, %c0_15] : memref<1x16x128xf32, #tpu.memory_space<vmem>>, vector<1x16x128xf32>
    %14 = vector.shape_cast %13 : vector<1x16x128xf32> to vector<16x128xf32>
    %15 = tpu.concatenate %14, %12 in 1 : vector<16x128xf32>, vector<16x128xf32> -> vector<16x256xf32>
    %c0_16 = arith.constant 0 : index
    %c0_17 = arith.constant 0 : index
    %16 = vector.load %arg6[%c0_16, %c0_17] : memref<1x256xf32, #tpu.memory_space<vmem>>, vector<1x256xf32>
    %17 = vector.broadcast %16 : vector<1x256xf32> to vector<16x256xf32>
    %18 = arith.mulf %15, %17 : vector<16x256xf32>
    %c0_18 = arith.constant 0 : index
    %c0_19 = arith.constant 0 : index
    %19 = vector.load %arg7[%c0_18, %c0_19] : memref<1x256xf32, #tpu.memory_space<vmem>>, vector<1x256xf32>
    %20 = vector.broadcast %19 : vector<1x256xf32> to vector<16x256xf32>
    %21 = arith.addf %18, %20 : vector<16x256xf32>
    %cst_20 = arith.constant 0.000000e+00 : f32
    %22 = vector.broadcast %cst_20 : f32 to vector<16x256xf32>
    %23 = arith.maximumf %21, %22 : vector<16x256xf32>
    %c1 = arith.constant 1 : index
    %c0_21 = arith.constant 0 : index
    %24 = vector.load %arg22[%c1, %c0_21] : memref<18x256xf32, #tpu.memory_space<vmem>>, vector<16x256xf32>
    tpu.vector_store %arg22[%c1, %c0_21], %23 {strides = array<i32>} : memref<18x256xf32, #tpu.memory_space<vmem>>, vector<16x256xf32>,
    %c0_22 = arith.constant 0 : index
    %c0_23 = arith.constant 0 : index
    %25 = vector.load %arg22[%c0_22, %c0_23] : memref<18x256xf32, #tpu.memory_space<vmem>>, vector<16x256xf32>
    %26 = arith.truncf %25 : vector<16x256xf32> to vector<16x256xbf16>
    %c0_24 = arith.constant 0 : index
    %c0_25 = arith.constant 0 : index
    %c0_26 = arith.constant 0 : index
    %27 = vector.load %arg8[%c0_24, %c0_25, %c0_26] : memref<3x256x128xbf16, #tpu.memory_space<vmem>>, vector<1x256x128xbf16>
    %28 = vector.shape_cast %27 : vector<1x256x128xbf16> to vector<256x128xbf16>
    %cst_27 = arith.constant dense<0.000000e+00> : vector<16x128xf32>
    %29 = tpu.matmul %26, %28, %cst_27 {dimension_numbers = #tpu.dot_dimension_numbers<[1], [0], [0], [1], [0, 0, 1, 1], [], []>} : vector<16x256xbf16>, vector<256x128xbf16>, vector<16x128xf32> -> vector<16x128xf32>
    %c1_28 = arith.constant 1 : index
    %c0_29 = arith.constant 0 : index
    %30 = vector.load %arg22[%c1_28, %c0_29] : memref<18x256xf32, #tpu.memory_space<vmem>>, vector<16x256xf32>
    %31 = arith.truncf %30 : vector<16x256xf32> to vector<16x256xbf16>
    %c1_30 = arith.constant 1 : index
    %c0_31 = arith.constant 0 : index
    %c0_32 = arith.constant 0 : index
    %32 = vector.load %arg8[%c1_30, %c0_31, %c0_32] : memref<3x256x128xbf16, #tpu.memory_space<vmem>>, vector<1x256x128xbf16>
    %33 = vector.shape_cast %32 : vector<1x256x128xbf16> to vector<256x128xbf16>
    %cst_33 = arith.constant dense<0.000000e+00> : vector<16x128xf32>
    %34 = tpu.matmul %31, %33, %cst_33 {dimension_numbers = #tpu.dot_dimension_numbers<[1], [0], [0], [1], [0, 0, 1, 1], [], []>} : vector<16x256xbf16>, vector<256x128xbf16>, vector<16x128xf32> -> vector<16x128xf32>
    %35 = arith.addf %29, %34 : vector<16x128xf32>
    %c2 = arith.constant 2 : index
    %c0_34 = arith.constant 0 : index
    %36 = vector.load %arg22[%c2, %c0_34] : memref<18x256xf32, #tpu.memory_space<vmem>>, vector<16x256xf32>
    %37 = arith.truncf %36 : vector<16x256xf32> to vector<16x256xbf16>
    %c2_35 = arith.constant 2 : index
    %c0_36 = arith.constant 0 : index
    %c0_37 = arith.constant 0 : index
    %38 = vector.load %arg8[%c2_35, %c0_36, %c0_37] : memref<3x256x128xbf16, #tpu.memory_space<vmem>>, vector<1x256x128xbf16>
    %39 = vector.shape_cast %38 : vector<1x256x128xbf16> to vector<256x128xbf16>
    %cst_38 = arith.constant dense<0.000000e+00> : vector<16x128xf32>
    %40 = tpu.matmul %37, %39, %cst_38 {dimension_numbers = #tpu.dot_dimension_numbers<[1], [0], [0], [1], [0, 0, 1, 1], [], []>} : vector<16x256xbf16>, vector<256x128xbf16>, vector<16x128xf32> -> vector<16x128xf32>
    %41 = arith.addf %35, %40 : vector<16x128xf32>
    %c0_39 = arith.constant 0 : index
    %c0_40 = arith.constant 0 : index
    %42 = vector.load %arg9[%c0_39, %c0_40] : memref<1x128xf32, #tpu.memory_space<vmem>>, vector<1x128xf32>
    %43 = vector.broadcast %42 : vector<1x128xf32> to vector<16x128xf32>
    %44 = arith.mulf %41, %43 : vector<16x128xf32>
    %c0_41 = arith.constant 0 : index
    %c0_42 = arith.constant 0 : index
    %45 = vector.load %arg10[%c0_41, %c0_42] : memref<1x128xf32, #tpu.memory_space<vmem>>, vector<1x128xf32>
    %46 = vector.broadcast %45 : vector<1x128xf32> to vector<16x128xf32>
    %47 = arith.addf %44, %46 : vector<16x128xf32>
    %cst_43 = arith.constant 0.000000e+00 : f32
    %48 = vector.broadcast %cst_43 : f32 to vector<16x128xf32>
    %49 = arith.maximumf %47, %48 : vector<16x128xf32>
    %c1_44 = arith.constant 1 : index
    %c0_45 = arith.constant 0 : index
    %50 = vector.load %arg22[%c1_44, %c0_45] : memref<18x256xf32, #tpu.memory_space<vmem>>, vector<16x128xf32>
    tpu.vector_store %arg22[%c1_44, %c0_45], %49 {strides = array<i32>} : memref<18x256xf32, #tpu.memory_space<vmem>>, vector<16x128xf32>,
    %c0_46 = arith.constant 0 : index
    %c0_47 = arith.constant 0 : index
    %51 = vector.load %arg22[%c0_46, %c0_47] : memref<18x256xf32, #tpu.memory_space<vmem>>, vector<16x128xf32>
    %52 = arith.truncf %51 : vector<16x128xf32> to vector<16x128xbf16>
    %c0_48 = arith.constant 0 : index
    %c0_49 = arith.constant 0 : index
    %c0_50 = arith.constant 0 : index
    %53 = vector.load %arg11[%c0_48, %c0_49, %c0_50] : memref<3x128x128xbf16, #tpu.memory_space<vmem>>, vector<1x128x128xbf16>
    %54 = vector.shape_cast %53 : vector<1x128x128xbf16> to vector<128x128xbf16>
    %cst_51 = arith.constant dense<0.000000e+00> : vector<16x128xf32>
    %55 = tpu.matmul %52, %54, %cst_51 {dimension_numbers = #tpu.dot_dimension_numbers<[1], [0], [0], [1], [0, 0, 1, 1], [], []>} : vector<16x128xbf16>, vector<128x128xbf16>, vector<16x128xf32> -> vector<16x128xf32>
    %c1_52 = arith.constant 1 : index
    %c0_53 = arith.constant 0 : index
    %56 = vector.load %arg22[%c1_52, %c0_53] : memref<18x256xf32, #tpu.memory_space<vmem>>, vector<16x128xf32>
    %57 = arith.truncf %56 : vector<16x128xf32> to vector<16x128xbf16>
    %c1_54 = arith.constant 1 : index
    %c0_55 = arith.constant 0 : index
    %c0_56 = arith.constant 0 : index
    %58 = vector.load %arg11[%c1_54, %c0_55, %c0_56] : memref<3x128x128xbf16, #tpu.memory_space<vmem>>, vector<1x128x128xbf16>
    %59 = vector.shape_cast %58 : vector<1x128x128xbf16> to vector<128x128xbf16>
    %cst_57 = arith.constant dense<0.000000e+00> : vector<16x128xf32>
    %60 = tpu.matmul %57, %59, %cst_57 {dimension_numbers = #tpu.dot_dimension_numbers<[1], [0], [0], [1], [0, 0, 1, 1], [], []>} : vector<16x128xbf16>, vector<128x128xbf16>, vector<16x128xf32> -> vector<16x128xf32>
    %61 = arith.addf %55, %60 : vector<16x128xf32>
    %c2_58 = arith.constant 2 : index
    %c0_59 = arith.constant 0 : index
    %62 = vector.load %arg22[%c2_58, %c0_59] : memref<18x256xf32, #tpu.memory_space<vmem>>, vector<16x128xf32>
    %63 = arith.truncf %62 : vector<16x128xf32> to vector<16x128xbf16>
    %c2_60 = arith.constant 2 : index
    %c0_61 = arith.constant 0 : index
    %c0_62 = arith.constant 0 : index
    %64 = vector.load %arg11[%c2_60, %c0_61, %c0_62] : memref<3x128x128xbf16, #tpu.memory_space<vmem>>, vector<1x128x128xbf16>
    %65 = vector.shape_cast %64 : vector<1x128x128xbf16> to vector<128x128xbf16>
    %cst_63 = arith.constant dense<0.000000e+00> : vector<16x128xf32>
    %66 = tpu.matmul %63, %65, %cst_63 {dimension_numbers = #tpu.dot_dimension_numbers<[1], [0], [0], [1], [0, 0, 1, 1], [], []>} : vector<16x128xbf16>, vector<128x128xbf16>, vector<16x128xf32> -> vector<16x128xf32>
    %67 = arith.addf %61, %66 : vector<16x128xf32>
    %c0_64 = arith.constant 0 : index
    %c0_65 = arith.constant 0 : index
    %68 = vector.load %arg12[%c0_64, %c0_65] : memref<1x256xf32, #tpu.memory_space<vmem>>, vector<1x256xf32>
    %69 = vector.broadcast %68 : vector<1x256xf32> to vector<16x256xf32>
    %70 = arith.mulf %15, %69 : vector<16x256xf32>
    %c0_66 = arith.constant 0 : index
    %c0_67 = arith.constant 0 : index
    %71 = vector.load %arg13[%c0_66, %c0_67] : memref<1x256xf32, #tpu.memory_space<vmem>>, vector<1x256xf32>
    %72 = vector.broadcast %71 : vector<1x256xf32> to vector<16x256xf32>
    %73 = arith.addf %70, %72 : vector<16x256xf32>
    %cst_68 = arith.constant 0.000000e+00 : f32
    %74 = vector.broadcast %cst_68 : f32 to vector<16x256xf32>
    %75 = arith.maximumf %73, %74 : vector<16x256xf32>
    %76 = arith.truncf %75 : vector<16x256xf32> to vector<16x256xbf16>
    %c0_69 = arith.constant 0 : index
    %c0_70 = arith.constant 0 : index
    %77 = vector.load %arg14[%c0_69, %c0_70] : memref<256x128xbf16, #tpu.memory_space<vmem>>, vector<256x128xbf16>
    %cst_71 = arith.constant dense<0.000000e+00> : vector<16x128xf32>
    %78 = tpu.matmul %76, %77, %cst_71 {dimension_numbers = #tpu.dot_dimension_numbers<[1], [0], [0], [1], [0, 0, 1, 1], [], []>} : vector<16x256xbf16>, vector<256x128xbf16>, vector<16x128xf32> -> vector<16x128xf32>
    %79 = arith.addf %67, %78 : vector<16x128xf32>
    %c0_72 = arith.constant 0 : index
    %c0_73 = arith.constant 0 : index
    %80 = vector.load %arg15[%c0_72, %c0_73] : memref<1x128xf32, #tpu.memory_space<vmem>>, vector<1x128xf32>
    %81 = vector.broadcast %80 : vector<1x128xf32> to vector<16x128xf32>
    %82 = arith.mulf %79, %81 : vector<16x128xf32>
    %c0_74 = arith.constant 0 : index
    %c0_75 = arith.constant 0 : index
    %83 = vector.load %arg16[%c0_74, %c0_75] : memref<1x128xf32, #tpu.memory_space<vmem>>, vector<1x128xf32>
    %84 = vector.broadcast %83 : vector<1x128xf32> to vector<16x128xf32>
    %85 = arith.addf %82, %84 : vector<16x128xf32>
    %cst_76 = arith.constant 0.000000e+00 : f32
    %86 = vector.broadcast %cst_76 : f32 to vector<16x128xf32>
    %87 = arith.maximumf %85, %86 : vector<16x128xf32>
    %c1_77 = arith.constant 1 : index
    %c0_78 = arith.constant 0 : index
    %88 = vector.load %arg22[%c1_77, %c0_78] : memref<18x256xf32, #tpu.memory_space<vmem>>, vector<16x128xf32>
    tpu.vector_store %arg22[%c1_77, %c0_78], %87 {strides = array<i32>} : memref<18x256xf32, #tpu.memory_space<vmem>>, vector<16x128xf32>,
    %c0_79 = arith.constant 0 : index
    %c0_80 = arith.constant 0 : index
    %89 = vector.load %arg22[%c0_79, %c0_80] : memref<18x256xf32, #tpu.memory_space<vmem>>, vector<16x128xf32>
    %90 = arith.truncf %89 : vector<16x128xf32> to vector<16x128xbf16>
    %c0_81 = arith.constant 0 : index
    %c0_82 = arith.constant 0 : index
    %c0_83 = arith.constant 0 : index
    %91 = vector.load %arg17[%c0_81, %c0_82, %c0_83] : memref<3x128x128xbf16, #tpu.memory_space<vmem>>, vector<1x128x128xbf16>
    %92 = vector.shape_cast %91 : vector<1x128x128xbf16> to vector<128x128xbf16>
    %cst_84 = arith.constant dense<0.000000e+00> : vector<16x128xf32>
    %93 = tpu.matmul %90, %92, %cst_84 {dimension_numbers = #tpu.dot_dimension_numbers<[1], [0], [0], [1], [0, 0, 1, 1], [], []>} : vector<16x128xbf16>, vector<128x128xbf16>, vector<16x128xf32> -> vector<16x128xf32>
    %c1_85 = arith.constant 1 : index
    %c0_86 = arith.constant 0 : index
    %94 = vector.load %arg22[%c1_85, %c0_86] : memref<18x256xf32, #tpu.memory_space<vmem>>, vector<16x128xf32>
    %95 = arith.truncf %94 : vector<16x128xf32> to vector<16x128xbf16>
    %c1_87 = arith.constant 1 : index
    %c0_88 = arith.constant 0 : index
    %c0_89 = arith.constant 0 : index
    %96 = vector.load %arg17[%c1_87, %c0_88, %c0_89] : memref<3x128x128xbf16, #tpu.memory_space<vmem>>, vector<1x128x128xbf16>
    %97 = vector.shape_cast %96 : vector<1x128x128xbf16> to vector<128x128xbf16>
    %cst_90 = arith.constant dense<0.000000e+00> : vector<16x128xf32>
    %98 = tpu.matmul %95, %97, %cst_90 {dimension_numbers = #tpu.dot_dimension_numbers<[1], [0], [0], [1], [0, 0, 1, 1], [], []>} : vector<16x128xbf16>, vector<128x128xbf16>, vector<16x128xf32> -> vector<16x128xf32>
    %99 = arith.addf %93, %98 : vector<16x128xf32>
    %c2_91 = arith.constant 2 : index
    %c0_92 = arith.constant 0 : index
    %100 = vector.load %arg22[%c2_91, %c0_92] : memref<18x256xf32, #tpu.memory_space<vmem>>, vector<16x128xf32>
    %101 = arith.truncf %100 : vector<16x128xf32> to vector<16x128xbf16>
    %c2_93 = arith.constant 2 : index
    %c0_94 = arith.constant 0 : index
    %c0_95 = arith.constant 0 : index
    %102 = vector.load %arg17[%c2_93, %c0_94, %c0_95] : memref<3x128x128xbf16, #tpu.memory_space<vmem>>, vector<1x128x128xbf16>
    %103 = vector.shape_cast %102 : vector<1x128x128xbf16> to vector<128x128xbf16>
    %cst_96 = arith.constant dense<0.000000e+00> : vector<16x128xf32>
    %104 = tpu.matmul %101, %103, %cst_96 {dimension_numbers = #tpu.dot_dimension_numbers<[1], [0], [0], [1], [0, 0, 1, 1], [], []>} : vector<16x128xbf16>, vector<128x128xbf16>, vector<16x128xf32> -> vector<16x128xf32>
    %105 = arith.addf %99, %104 : vector<16x128xf32>
    %c0_97 = arith.constant 0 : index
    %c0_98 = arith.constant 0 : index
    %106 = vector.load %arg18[%c0_97, %c0_98] : memref<1x128xf32, #tpu.memory_space<vmem>>, vector<1x128xf32>
    %107 = vector.broadcast %106 : vector<1x128xf32> to vector<16x128xf32>
    %108 = arith.mulf %105, %107 : vector<16x128xf32>
    %c0_99 = arith.constant 0 : index
    %c0_100 = arith.constant 0 : index
    %109 = vector.load %arg19[%c0_99, %c0_100] : memref<1x128xf32, #tpu.memory_space<vmem>>, vector<1x128xf32>
    %110 = vector.broadcast %109 : vector<1x128xf32> to vector<16x128xf32>
    %111 = arith.addf %108, %110 : vector<16x128xf32>
    %cst_101 = arith.constant 0.000000e+00 : f32
    %112 = vector.broadcast %cst_101 : f32 to vector<16x128xf32>
    %113 = arith.maximumf %111, %112 : vector<16x128xf32>
    %c1_102 = arith.constant 1 : index
    %c0_103 = arith.constant 0 : index
    %114 = vector.load %arg22[%c1_102, %c0_103] : memref<18x256xf32, #tpu.memory_space<vmem>>, vector<16x128xf32>
    tpu.vector_store %arg22[%c1_102, %c0_103], %113 {strides = array<i32>} : memref<18x256xf32, #tpu.memory_space<vmem>>, vector<16x128xf32>,
    %c0_104 = arith.constant 0 : index
    %c0_105 = arith.constant 0 : index
    %115 = vector.load %arg22[%c0_104, %c0_105] : memref<18x256xf32, #tpu.memory_space<vmem>>, vector<16x128xf32>
    %116 = arith.truncf %115 : vector<16x128xf32> to vector<16x128xbf16>
    %c0_106 = arith.constant 0 : index
    %c0_107 = arith.constant 0 : index
    %c0_108 = arith.constant 0 : index
    %117 = vector.load %arg20[%c0_106, %c0_107, %c0_108] : memref<3x128x128xbf16, #tpu.memory_space<vmem>>, vector<1x128x128xbf16>
    %118 = vector.shape_cast %117 : vector<1x128x128xbf16> to vector<128x128xbf16>
    %cst_109 = arith.constant dense<0.000000e+00> : vector<16x128xf32>
    %119 = tpu.matmul %116, %118, %cst_109 {dimension_numbers = #tpu.dot_dimension_numbers<[1], [0], [0], [1], [0, 0, 1, 1], [], []>} : vector<16x128xbf16>, vector<128x128xbf16>, vector<16x128xf32> -> vector<16x128xf32>
    %c1_110 = arith.constant 1 : index
    %c0_111 = arith.constant 0 : index
    %120 = vector.load %arg22[%c1_110, %c0_111] : memref<18x256xf32, #tpu.memory_space<vmem>>, vector<16x128xf32>
    %121 = arith.truncf %120 : vector<16x128xf32> to vector<16x128xbf16>
    %c1_112 = arith.constant 1 : index
    %c0_113 = arith.constant 0 : index
    %c0_114 = arith.constant 0 : index
    %122 = vector.load %arg20[%c1_112, %c0_113, %c0_114] : memref<3x128x128xbf16, #tpu.memory_space<vmem>>, vector<1x128x128xbf16>
    %123 = vector.shape_cast %122 : vector<1x128x128xbf16> to vector<128x128xbf16>
    %cst_115 = arith.constant dense<0.000000e+00> : vector<16x128xf32>
    %124 = tpu.matmul %121, %123, %cst_115 {dimension_numbers = #tpu.dot_dimension_numbers<[1], [0], [0], [1], [0, 0, 1, 1], [], []>} : vector<16x128xbf16>, vector<128x128xbf16>, vector<16x128xf32> -> vector<16x128xf32>
    %125 = arith.addf %119, %124 : vector<16x128xf32>
    %c2_116 = arith.constant 2 : index
    %c0_117 = arith.constant 0 : index
    %126 = vector.load %arg22[%c2_116, %c0_117] : memref<18x256xf32, #tpu.memory_space<vmem>>, vector<16x128xf32>
    %127 = arith.truncf %126 : vector<16x128xf32> to vector<16x128xbf16>
    %c2_118 = arith.constant 2 : index
    %c0_119 = arith.constant 0 : index
    %c0_120 = arith.constant 0 : index
    %128 = vector.load %arg20[%c2_118, %c0_119, %c0_120] : memref<3x128x128xbf16, #tpu.memory_space<vmem>>, vector<1x128x128xbf16>
    %129 = vector.shape_cast %128 : vector<1x128x128xbf16> to vector<128x128xbf16>
    %cst_121 = arith.constant dense<0.000000e+00> : vector<16x128xf32>
    %130 = tpu.matmul %127, %129, %cst_121 {dimension_numbers = #tpu.dot_dimension_numbers<[1], [0], [0], [1], [0, 0, 1, 1], [], []>} : vector<16x128xbf16>, vector<128x128xbf16>, vector<16x128xf32> -> vector<16x128xf32>
    %131 = arith.addf %125, %130 : vector<16x128xf32>
    %132 = arith.addf %131, %79 : vector<16x128xf32>
    %c0_122 = arith.constant 0 : index
    %c0_123 = arith.constant 0 : index
    %c0_124 = arith.constant 0 : index
    %133 = vector.load %arg21[%c0_122, %c0_123, %c0_124] : memref<1x16x128xf32, #tpu.memory_space<vmem>>, vector<1x16x128xf32>
    %134 = vector.shape_cast %133 : vector<1x16x128xf32> to vector<16x128xf32>
    %135 = vector.shape_cast %132 : vector<16x128xf32> to vector<1x16x128xf32>
    tpu.vector_store %arg21[%c0_122, %c0_123, %c0_124], %135 {strides = array<i32>} : memref<1x16x128xf32, #tpu.memory_space<vmem>>, vector<1x16x128xf32>,
    return
  }
  func.func @transform_0(%arg0: i32) -> (i32, i32, i32) {
    %c0_i32 = arith.constant 0 : i32
    %c0_i32_0 = arith.constant 0 : i32
    %c0_i32_1 = arith.constant 0 : i32
    return %arg0, %c0_i32, %c0_i32_0 : i32, i32, i32
  }
  func.func @transform_1(%arg0: i32) -> (i32, i32, i32) {
    %c0_i32 = arith.constant 0 : i32
    %c0_i32_0 = arith.constant 0 : i32
    %c0_i32_1 = arith.constant 0 : i32
    return %arg0, %c0_i32, %c0_i32_0 : i32, i32, i32
  }
  func.func @transform_2(%arg0: i32) -> (i32, i32) {
    %c0_i32 = arith.constant 0 : i32
    %c0_i32_0 = arith.constant 0 : i32
    %c0_i32_1 = arith.constant 0 : i32
    return %c0_i32, %c0_i32_0 : i32, i32
  }
  func.func @transform_3(%arg0: i32) -> (i32, i32) {
    %c0_i32 = arith.constant 0 : i32
    %c0_i32_0 = arith.constant 0 : i32
    %c0_i32_1 = arith.constant 0 : i32
    return %c0_i32, %c0_i32_0 : i32, i32
  }
  func.func @transform_4(%arg0: i32) -> (i32, i32) {
    %c0_i32 = arith.constant 0 : i32
    %c0_i32_0 = arith.constant 0 : i32
    %c0_i32_1 = arith.constant 0 : i32
    return %c0_i32, %c0_i32_0 : i32, i32
  }
  func.func @transform_5(%arg0: i32) -> (i32, i32) {
    %c0_i32 = arith.constant 0 : i32
    %c0_i32_0 = arith.constant 0 : i32
    %c0_i32_1 = arith.constant 0 : i32
    return %c0_i32, %c0_i32_0 : i32, i32
  }
  func.func @transform_6(%arg0: i32) -> (i32, i32) {
    %c0_i32 = arith.constant 0 : i32
    %c0_i32_0 = arith.constant 0 : i32
    %c0_i32_1 = arith.constant 0 : i32
    return %c0_i32, %c0_i32_0 : i32, i32
  }
  func.func @transform_7(%arg0: i32) -> (i32, i32, i32) {
    %c0_i32 = arith.constant 0 : i32
    %c0_i32_0 = arith.constant 0 : i32
    %c0_i32_1 = arith.constant 0 : i32
    %c0_i32_2 = arith.constant 0 : i32
    return %c0_i32, %c0_i32_0, %c0_i32_1 : i32, i32, i32
  }
  func.func @transform_8(%arg0: i32) -> (i32, i32) {
    %c0_i32 = arith.constant 0 : i32
    %c0_i32_0 = arith.constant 0 : i32
    %c0_i32_1 = arith.constant 0 : i32
    return %c0_i32, %c0_i32_0 : i32, i32
  }
  func.func @transform_9(%arg0: i32) -> (i32, i32) {
    %c0_i32 = arith.constant 0 : i32
    %c0_i32_0 = arith.constant 0 : i32
    %c0_i32_1 = arith.constant 0 : i32
    return %c0_i32, %c0_i32_0 : i32, i32
  }
  func.func @transform_10(%arg0: i32) -> (i32, i32, i32) {
    %c0_i32 = arith.constant 0 : i32
    %c0_i32_0 = arith.constant 0 : i32
    %c0_i32_1 = arith.constant 0 : i32
    %c0_i32_2 = arith.constant 0 : i32
    return %c0_i32, %c0_i32_0, %c0_i32_1 : i32, i32, i32
  }
  func.func @transform_11(%arg0: i32) -> (i32, i32) {
    %c0_i32 = arith.constant 0 : i32
    %c0_i32_0 = arith.constant 0 : i32
    %c0_i32_1 = arith.constant 0 : i32
    return %c0_i32, %c0_i32_0 : i32, i32
  }
  func.func @transform_12(%arg0: i32) -> (i32, i32) {
    %c0_i32 = arith.constant 0 : i32
    %c0_i32_0 = arith.constant 0 : i32
    %c0_i32_1 = arith.constant 0 : i32
    return %c0_i32, %c0_i32_0 : i32, i32
  }
  func.func @transform_13(%arg0: i32) -> (i32, i32) {
    %c0_i32 = arith.constant 0 : i32
    %c0_i32_0 = arith.constant 0 : i32
    %c0_i32_1 = arith.constant 0 : i32
    return %c0_i32, %c0_i32_0 : i32, i32
  }
  func.func @transform_14(%arg0: i32) -> (i32, i32) {
    %c0_i32 = arith.constant 0 : i32
    %c0_i32_0 = arith.constant 0 : i32
    %c0_i32_1 = arith.constant 0 : i32
    return %c0_i32, %c0_i32_0 : i32, i32
  }
  func.func @transform_15(%arg0: i32) -> (i32, i32) {
    %c0_i32 = arith.constant 0 : i32
    %c0_i32_0 = arith.constant 0 : i32
    %c0_i32_1 = arith.constant 0 : i32
    return %c0_i32, %c0_i32_0 : i32, i32
  }
  func.func @transform_16(%arg0: i32) -> (i32, i32, i32) {
    %c0_i32 = arith.constant 0 : i32
    %c0_i32_0 = arith.constant 0 : i32
    %c0_i32_1 = arith.constant 0 : i32
    %c0_i32_2 = arith.constant 0 : i32
    return %c0_i32, %c0_i32_0, %c0_i32_1 : i32, i32, i32
  }
  func.func @transform_17(%arg0: i32) -> (i32, i32) {
    %c0_i32 = arith.constant 0 : i32
    %c0_i32_0 = arith.constant 0 : i32
    %c0_i32_1 = arith.constant 0 : i32
    return %c0_i32, %c0_i32_0 : i32, i32
  }
  func.func @transform_18(%arg0: i32) -> (i32, i32) {
    %c0_i32 = arith.constant 0 : i32
    %c0_i32_0 = arith.constant 0 : i32
    %c0_i32_1 = arith.constant 0 : i32
    return %c0_i32, %c0_i32_0 : i32, i32
  }
  func.func @transform_19(%arg0: i32) -> (i32, i32, i32) {
    %c0_i32 = arith.constant 0 : i32
    %c0_i32_0 = arith.constant 0 : i32
    %c0_i32_1 = arith.constant 0 : i32
    %c0_i32_2 = arith.constant 0 : i32
    return %c0_i32, %c0_i32_0, %c0_i32_1 : i32, i32, i32
  }
  func.func @transform_20(%arg0: i32) -> (i32, i32, i32) {
    %c0_i32 = arith.constant 0 : i32
    %c0_i32_0 = arith.constant 0 : i32
    %c0_i32_1 = arith.constant 0 : i32
    return %arg0, %c0_i32, %c0_i32_0 : i32, i32, i32
  }
}

</mosaic_0001>

<llo_original>
// kernel: mul.169
$region0: #{mul.169}
  %s0 = inlined_call_operand.vmem [shape: f32[1,16,4,16,4], index: 0, kind: input, shape index: {}]
  %s1 = inlined_call_operand.vmem [shape: f32[64,64], index: 1, kind: output, shape index: {}]
  %s2 = smov 3
  %v3 = vld [vmem:[%s0] ss:$16 sm:%s2]
  %s4 = smov 12
  %v5 = vld [vmem:[%s0] ss:$16 sm:%s4]
  %vm6 = vcmask 1043458
  %v7 = vsel %vm6, %v5, %v3
  %s8 = smov 48
  %v9 = vld [vmem:[%s0] ss:$16 sm:%s8]
  %vm10 = vcmask 1045508
  %v11 = vsel %vm10, %v9, %v7
  %s12 = smov 192
  %v13 = vld [vmem:[%s0] ss:$16 sm:%s12]
  %vm14 = vcmask 1047558
  %v15 = vsel %vm14, %v13, %v11
  %vm16 = vcmask 31744
  %17 = vst.msk [vmem:[%s1] sm:$0xff] %vm16, %v15
  %s18 = scalar_lea.vmem %s0, 128
  %s19 = smov 3
  %v20 = vld [vmem:[%s18] ss:$16 sm:%s19]
  %s21 = scalar_lea.vmem %s0, 128
  %s22 = smov 12
  %v23 = vld [vmem:[%s21] ss:$16 sm:%s22]
  %vm24 = vcmask 1043458
  %v25 = vsel %vm24, %v23, %v20
  %s26 = scalar_lea.vmem %s0, 128
  %s27 = smov 48
  %v28 = vld [vmem:[%s26] ss:$16 sm:%s27]
  %vm29 = vcmask 1045508
  %v30 = vsel %vm29, %v28, %v25
  %s31 = scalar_lea.vmem %s0, 128
  %s32 = smov 192
  %v33 = vld [vmem:[%s31] ss:$16 sm:%s32]
  %vm34 = vcmask 1047558
  %v35 = vsel %vm34, %v33, %v30
  %vm36 = vcmask 31744
  %s37 = scalar_lea.vmem %s1, 8
  %38 = vst.msk [vmem:[%s37] sm:$0xff] %vm36, %v35
  %s39 = scalar_lea.vmem %s0, 256
  %s40 = smov 3
  %v41 = vld [vmem:[%s39] ss:$16 sm:%s40]
  %s42 = scalar_lea.vmem %s0, 256
  %s43 = smov 12
  %v44 = vld [vmem:[%s42] ss:$16 sm:%s43]
  %vm45 = vcmask 1043458
  %v46 = vsel %vm45, %v44, %v41
  %s47 = scalar_lea.vmem %s0, 256
  %s48 = smov 48
  %v49 = vld [vmem:[%s47] ss:$16 sm:%s48]
  %vm50 = vcmask 1045508
  %v51 = vsel %vm50, %v49, %v46
  %s52 = scalar_lea.vmem %s0, 256
  %s53 = smov 192
  %v54 = vld [vmem:[%s52] ss:$16 sm:%s53]
  %vm55 = vcmask 1047558
  %v56 = vsel %vm55, %v54, %v51
  %vm57 = vcmask 31744
  %s58 = scalar_lea.vmem %s1, 16
  %59 = vst.msk [vmem:[%s58] sm:$0xff] %vm57, %v56
  %s60 = scalar_lea.vmem %s0, 384
  %s61 = smov 3
  %v62 = vld [vmem:[%s60] ss:$16 sm:%s61]
  %s63 = scalar_lea.vmem %s0, 384
  %s64 = smov 12
  %v65 = vld [vmem:[%s63] ss:$16 sm:%s64]
  %vm66 = vcmask 1043458
  %v67 = vsel %vm66, %v65, %v62
  %s68 = scalar_lea.vmem %s0, 384
  %s69 = smov 48
  %v70 = vld [vmem:[%s68] ss:$16 sm:%s69]
  %vm71 = vcmask 1045508
  %v72 = vsel %vm71, %v70, %v67
  %s73 = scalar_lea.vmem %s0, 384
  %s74 = smov 192
  %v75 = vld [vmem:[%s73] ss:$16 sm:%s74]
  %vm76 = vcmask 1047558
  %v77 = vsel %vm76, %v75, %v72
  %vm78 = vcmask 31744
  %s79 = scalar_lea.vmem %s1, 24
  %80 = vst.msk [vmem:[%s79] sm:$0xff] %vm78, %v77
  %s81 = scalar_lea.vmem %s0, 512
  %s82 = smov 3
  %v83 = vld [vmem:[%s81] ss:$16 sm:%s82]
  %s84 = scalar_lea.vmem %s0, 512
  %s85 = smov 12
  %v86 = vld [vmem:[%s84] ss:$16 sm:%s85]
  %vm87 = vcmask 1043458
  %v88 = vsel %vm87, %v86, %v83
  %s89 = scalar_lea.vmem %s0, 512
  %s90 = smov 48
  %v91 = vld [vmem:[%s89] ss:$16 sm:%s90]
  %vm92 = vcmask 1045508
  %v93 = vsel %vm92, %v91, %v88
  %s94 = scalar_lea.vmem %s0, 512
  %s95 = smov 192
  %v96 = vld [vmem:[%s94] ss:$16 sm:%s95]
  %vm97 = vcmask 1047558
  %v98 = vsel %vm97, %v96, %v93
  %vm99 = vcmask 31744
  %s100 = scalar_lea.vmem %s1, 32
  %101 = vst.msk [vmem:[%s100] sm:$0xff] %vm99, %v98
  %s102 = scalar_lea.vmem %s0, 640
  %s103 = smov 3
  %v104 = vld [vmem:[%s102] ss:$16 sm:%s103]
  %s105 = scalar_lea.vmem %s0, 640
  %s106 = smov 12
  %v107 = vld [vmem:[%s105] ss:$16 sm:%s106]
  %vm108 = vcmask 1043458
  %v109 = vsel %vm108, %v107, %v104
  %s110 = scalar_lea.vmem %s0, 640
  %s111 = smov 48
  %v112 = vld [vmem:[%s110] ss:$16 sm:%s111]
  %vm113 = vcmask 1045508
  %v114 = vsel %vm113, %v112, %v109
  %s115 = scalar_lea.vmem %s0, 640
  %s116 = smov 192
  %v117 = vld [vmem:[%s115] ss:$16 sm:%s116]
  %vm118 = vcmask 1047558
  %v119 = vsel %vm118, %v117, %v114
  %vm120 = vcmask 31744
  %s121 = scalar_lea.vmem %s1, 40
  %122 = vst.msk [vmem:[%s121] sm:$0xff] %vm120, %v119
  %s123 = scalar_lea.vmem %s0, 768
  %s124 = smov 3
  %v125 = vld [vmem:[%s123] ss:$16 sm:%s124]
  %s126 = scalar_lea.vmem %s0, 768
  %s127 = smov 12
  %v128 = vld [vmem:[%s126] ss:$16 sm:%s127]
  %vm129 = vcmask 1043458
  %v130 = vsel %vm129, %v128, %v125
  %s131 = scalar_lea.vmem %s0, 768
  %s132 = smov 48
  %v133 = vld [vmem:[%s131] ss:$16 sm:%s132]
  %vm134 = vcmask 1045508
  %v135 = vsel %vm134, %v133, %v130
  %s136 = scalar_lea.vmem %s0, 768
  %s137 = smov 192
  %v138 = vld [vmem:[%s136] ss:$16 sm:%s137]
  %vm139 = vcmask 1047558
  %v140 = vsel %vm139, %v138, %v135
  %vm141 = vcmask 31744
  %s142 = scalar_lea.vmem %s1, 48
  %143 = vst.msk [vmem:[%s142] sm:$0xff] %vm141, %v140
  %s144 = scalar_lea.vmem %s0, 896
  %s145 = smov 3
  %v146 = vld [vmem:[%s144] ss:$16 sm:%s145]
  %s147 = scalar_lea.vmem %s0, 896
  %s148 = smov 12
  %v149 = vld [vmem:[%s147] ss:$16 sm:%s148]
  %vm150 = vcmask 1043458
  %v151 = vsel %vm150, %v149, %v146
  %s152 = scalar_lea.vmem %s0, 896
  %s153 = smov 48
  %v154 = vld [vmem:[%s152] ss:$16 sm:%s153]
  %vm155 = vcmask 1045508
  %v156 = vsel %vm155, %v154, %v151
  %s157 = scalar_lea.vmem %s0, 896
  %s158 = smov 192
  %v159 = vld [vmem:[%s157] ss:$16 sm:%s158]
  %vm160 = vcmask 1047558
  %v161 = vsel %vm160, %v159, %v156
  %vm162 = vcmask 31744
  %s163 = scalar_lea.vmem %s1, 56
  %164 = vst.msk [vmem:[%s163] sm:$0xff] %vm162, %v161
  %s165 = scalar_lea.vmem %s0, 15
  %s166 = smov 3
  %v167 = vld [vmem:[%s165] ss:$16 sm:%s166]
  %s168 = scalar_lea.vmem %s0, 15
  %s169 = smov 12
  %v170 = vld [vmem:[%s168] ss:$16 sm:%s169]
  %vm171 = vcmask 1043458
  %v172 = vsel %vm171, %v170, %v167
  %s173 = scalar_lea.vmem %s0, 15
  %s174 = smov 48
  %v175 = vld [vmem:[%s173] ss:$16 sm:%s174]
  %vm176 = vcmask 1045508
  %v177 = vsel %vm176, %v175, %v172
  %s178 = scalar_lea.vmem %s0, 15
  %s179 = smov 192
  %v180 = vld [vmem:[%s178] ss:$16 sm:%s179]
  %vm181 = vcmask 1047558
  %v182 = vsel %vm181, %v180, %v177
  %183 = vrot.lane.b32.xlu0 %v182, 60
  %v184 = vpop.permute.xlu0 %183
  %vm185 = vcmask 523744
  %186 = vst.msk [vmem:[%s1] sm:$0xff] %vm185, %v184
  %s187 = scalar_lea.vmem %s0, 527
  %s188 = smov 3
  %v189 = vld [vmem:[%s187] ss:$16 sm:%s188]
  %s190 = scalar_lea.vmem %s0, 527
  %s191 = smov 12
  %v192 = vld [vmem:[%s190] ss:$16 sm:%s191]
  %vm193 = vcmask 1043458
  %v194 = vsel %vm193, %v192, %v189
  %s195 = scalar_lea.vmem %s0, 527
  %s196 = smov 48
  %v197 = vld [vmem:[%s195] ss:$16 sm:%s196]
  %vm198 = vcmask 1045508
  %v199 = vsel %vm198, %v197, %v194
  %s200 = scalar_lea.vmem %s0, 527
  %s201 = smov 192
  %v202 = vld [vmem:[%s200] ss:$16 sm:%s201]
  %vm203 = vcmask 1047558
  %v204 = vsel %vm203, %v202, %v199
  %205 = vrot.lane.b32.xlu0 %v204, 60
  %v206 = vpop.permute.xlu0 %205
  %vm207 = vcmask 523744
  %s208 = scalar_lea.vmem %s1, 32
  %209 = vst.msk [vmem:[%s208] sm:$0xff] %vm207, %v206
  %s210 = scalar_lea.vmem %s0, 143
  %s211 = smov 3
  %v212 = vld [vmem:[%s210] ss:$16 sm:%s211]
  %s213 = scalar_lea.vmem %s0, 143
  %s214 = smov 12
  %v215 = vld [vmem:[%s213] ss:$16 sm:%s214]
  %vm216 = vcmask 1043458
  %v217 = vsel %vm216, %v215, %v212
  %s218 = scalar_lea.vmem %s0, 143
  %s219 = smov 48
  %v220 = vld [vmem:[%s218] ss:$16 sm:%s219]
  %vm221 = vcmask 1045508
  %v222 = vsel %vm221, %v220, %v217
  %s223 = scalar_lea.vmem %s0, 143
  %s224 = smov 192
  %v225 = vld [vmem:[%s223] ss:$16 sm:%s224]
  %vm226 = vcmask 1047558
  %v227 = vsel %vm226, %v225, %v222
  %228 = vrot.lane.b32.xlu0 %v227, 60
  %v229 = vpop.permute.xlu0 %228
  %vm230 = vcmask 523744
  %s231 = scalar_lea.vmem %s1, 8
  %232 = vst.msk [vmem:[%s231] sm:$0xff] %vm230, %v229
  %s233 = scalar_lea.vmem %s0, 655
  %s234 = smov 3
  %v235 = vld [vmem:[%s233] ss:$16 sm:%s234]
  %s236 = scalar_lea.vmem %s0, 655
  %s237 = smov 12
  %v238 = vld [vmem:[%s236] ss:$16 sm:%s237]
  %vm239 = vcmask 1043458
  %v240 = vsel %vm239, %v238, %v235
  %s241 = scalar_lea.vmem %s0, 655
  %s242 = smov 48
  %v243 = vld [vmem:[%s241] ss:$16 sm:%s242]
  %vm244 = vcmask 1045508
  %v245 = vsel %vm244, %v243, %v240
  %s246 = scalar_lea.vmem %s0, 655
  %s247 = smov 192
  %v248 = vld [vmem:[%s246] ss:$16 sm:%s247]
  %vm249 = vcmask 1047558
  %v250 = vsel %vm249, %v248, %v245
  %251 = vrot.lane.b32.xlu0 %v250, 60
  %v252 = vpop.permute.xlu0 %251
  %vm253 = vcmask 523744
  %s254 = scalar_lea.vmem %s1, 40
  %255 = vst.msk [vmem:[%s254] sm:$0xff] %vm253, %v252
  %s256 = scalar_lea.vmem %s0, 271
  %s257 = smov 3
  %v258 = vld [vmem:[%s256] ss:$16 sm:%s257]
  %s259 = scalar_lea.vmem %s0, 271
  %s260 = smov 12
  %v261 = vld [vmem:[%s259] ss:$16 sm:%s260]
  %vm262 = vcmask 1043458
  %v263 = vsel %vm262, %v261, %v258
  %s264 = scalar_lea.vmem %s0, 271
  %s265 = smov 48
  %v266 = vld [vmem:[%s264] ss:$16 sm:%s265]
  %vm267 = vcmask 1045508
  %v268 = vsel %vm267, %v266, %v263
  %s269 = scalar_lea.vmem %s0, 271
  %s270 = smov 192
  %v271 = vld [vmem:[%s269] ss:$16 sm:%s270]
  %vm272 = vcmask 1047558
  %v273 = vsel %vm272, %v271, %v268
  %274 = vrot.lane.b32.xlu0 %v273, 60
  %v275 = vpop.permute.xlu0 %274
  %vm276 = vcmask 523744
  %s277 = scalar_lea.vmem %s1, 16
  %278 = vst.msk [vmem:[%s277] sm:$0xff] %vm276, %v275
  %s279 = scalar_lea.vmem %s0, 783
  %s280 = smov 3
  %v281 = vld [vmem:[%s279] ss:$16 sm:%s280]
  %s282 = scalar_lea.vmem %s0, 783
  %s283 = smov 12
  %v284 = vld [vmem:[%s282] ss:$16 sm:%s283]
  %vm285 = vcmask 1043458
  %v286 = vsel %vm285, %v284, %v281
  %s287 = scalar_lea.vmem %s0, 783
  %s288 = smov 48
  %v289 = vld [vmem:[%s287] ss:$16 sm:%s288]
  %vm290 = vcmask 1045508
  %v291 = vsel %vm290, %v289, %v286
  %s292 = scalar_lea.vmem %s0, 783
  %s293 = smov 192
  %v294 = vld [vmem:[%s292] ss:$16 sm:%s293]
  %vm295 = vcmask 1047558
  %v296 = vsel %vm295, %v294, %v291
  %297 = vrot.lane.b32.xlu0 %v296, 60
  %v298 = vpop.permute.xlu0 %297
  %vm299 = vcmask 523744
  %s300 = scalar_lea.vmem %s1, 48
  %301 = vst.msk [vmem:[%s300] sm:$0xff] %vm299, %v298
  %s302 = scalar_lea.vmem %s0, 399
  %s303 = smov 3
  %v304 = vld [vmem:[%s302] ss:$16 sm:%s303]
  %s305 = scalar_lea.vmem %s0, 399
  %s306 = smov 12
  %v307 = vld [vmem:[%s305] ss:$16 sm:%s306]
  %vm308 = vcmask 1043458
  %v309 = vsel %vm308, %v307, %v304
  %s310 = scalar_lea.vmem %s0, 399
  %s311 = smov 48
  %v312 = vld [vmem:[%s310] ss:$16 sm:%s311]
  %vm313 = vcmask 1045508
  %v314 = vsel %vm313, %v312, %v309
  %s315 = scalar_lea.vmem %s0, 399
  %s316 = smov 192
  %v317 = vld [vmem:[%s315] ss:$16 sm:%s316]
  %vm318 = vcmask 1047558
  %v319 = vsel %vm318, %v317, %v314
  %320 = vrot.lane.b32.xlu0 %v319, 60
  %v321 = vpop.permute.xlu0 %320
  %vm322 = vcmask 523744
  %s323 = scalar_lea.vmem %s1, 24
  %324 = vst.msk [vmem:[%s323] sm:$0xff] %vm322, %v321
  %s325 = scalar_lea.vmem %s0, 911
  %s326 = smov 3
  %v327 = vld [vmem:[%s325] ss:$16 sm:%s326]
  %s328 = scalar_lea.vmem %s0, 911
  %s329 = smov 12
  %v330 = vld [vmem:[%s328] ss:$16 sm:%s329]
  %vm331 = vcmask 1043458
  %v332 = vsel %vm331, %v330, %v327
  %s333 = scalar_lea.vmem %s0, 911
  %s334 = smov 48
  %v335 = vld [vmem:[%s333] ss:$16 sm:%s334]
  %vm336 = vcmask 1045508
  %v337 = vsel %vm336, %v335, %v332
  %s338 = scalar_lea.vmem %s0, 911
  %s339 = smov 192
  %v340 = vld [vmem:[%s338] ss:$16 sm:%s339]
  %vm341 = vcmask 1047558
  %v342 = vsel %vm341, %v340, %v337
  %343 = vrot.lane.b32.xlu0 %v342, 60
  %v344 = vpop.permute.xlu0 %343
  %vm345 = vcmask 523744
  %s346 = scalar_lea.vmem %s1, 56
  %347 = vst.msk [vmem:[%s346] sm:$0xff] %vm345, %v344
  %s348 = scalar_lea.vmem %s0, 14
  %s349 = smov 3
  %v350 = vld [vmem:[%s348] ss:$16 sm:%s349]
  %s351 = scalar_lea.vmem %s0, 14
  %s352 = smov 12
  %v353 = vld [vmem:[%s351] ss:$16 sm:%s352]
  %vm354 = vcmask 1043458
  %v355 = vsel %vm354, %v353, %v350
  %s356 = scalar_lea.vmem %s0, 14
  %s357 = smov 48
  %v358 = vld [vmem:[%s356] ss:$16 sm:%s357]
  %vm359 = vcmask 1045508
  %v360 = vsel %vm359, %v358, %v355
  %s361 = scalar_lea.vmem %s0, 14
  %s362 = smov 192
  %v363 = vld [vmem:[%s361] ss:$16 sm:%s362]
  %vm364 = vcmask 1047558
  %v365 = vsel %vm364, %v363, %v360
  %366 = vrot.lane.b32.xlu0 %v365, 56
  %v367 = vpop.permute.xlu0 %366
  %vm368 = vcmask 490944
  %369 = vst.msk [vmem:[%s1] sm:$0xff] %vm368, %v367
  %s370 = scalar_lea.vmem %s0, 526
  %s371 = smov 3
  %v372 = vld [vmem:[%s370] ss:$16 sm:%s371]
  %s373 = scalar_lea.vmem %s0, 526
  %s374 = smov 12
  %v375 = vld [vmem:[%s373] ss:$16 sm:%s374]
  %vm376 = vcmask 1043458
  %v377 = vsel %vm376, %v375, %v372
  %s378 = scalar_lea.vmem %s0, 526
  %s379 = smov 48
  %v380 = vld [vmem:[%s378] ss:$16 sm:%s379]
  %vm381 = vcmask 1045508
  %v382 = vsel %vm381, %v380, %v377
  %s383 = scalar_lea.vmem %s0, 526
  %s384 = smov 192
  %v385 = vld [vmem:[%s383] ss:$16 sm:%s384]
  %vm386 = vcmask 1047558
  %v387 = vsel %vm386, %v385, %v382
  %388 = vrot.lane.b32.xlu0 %v387, 56
  %v389 = vpop.permute.xlu0 %388
  %vm390 = vcmask 490944
  %s391 = scalar_lea.vmem %s1, 32
  %392 = vst.msk [vmem:[%s391] sm:$0xff] %vm390, %v389
  %s393 = scalar_lea.vmem %s0, 142
  %s394 = smov 3
  %v395 = vld [vmem:[%s393] ss:$16 sm:%s394]
  %s396 = scalar_lea.vmem %s0, 142
  %s397 = smov 12
  %v398 = vld [vmem:[%s396] ss:$16 sm:%s397]
  %vm399 = vcmask 1043458
  %v400 = vsel %vm399, %v398, %v395
  %s401 = scalar_lea.vmem %s0, 142
  %s402 = smov 48
  %v403 = vld [vmem:[%s401] ss:$16 sm:%s402]
  %vm404 = vcmask 1045508
  %v405 = vsel %vm404, %v403, %v400
  %s406 = scalar_lea.vmem %s0, 142
  %s407 = smov 192
  %v408 = vld [vmem:[%s406] ss:$16 sm:%s407]
  %vm409 = vcmask 1047558
  %v410 = vsel %vm409, %v408, %v405
  %411 = vrot.lane.b32.xlu0 %v410, 56
  %v412 = vpop.permute.xlu0 %411
  %vm413 = vcmask 490944
  %s414 = scalar_lea.vmem %s1, 8
  %415 = vst.msk [vmem:[%s414] sm:$0xff] %vm413, %v412
  %s416 = scalar_lea.vmem %s0, 654
  %s417 = smov 3
  %v418 = vld [vmem:[%s416] ss:$16 sm:%s417]
  %s419 = scalar_lea.vmem %s0, 654
  %s420 = smov 12
  %v421 = vld [vmem:[%s419] ss:$16 sm:%s420]
  %vm422 = vcmask 1043458
  %v423 = vsel %vm422, %v421, %v418
  %s424 = scalar_lea.vmem %s0, 654
  %s425 = smov 48
  %v426 = vld [vmem:[%s424] ss:$16 sm:%s425]
  %vm427 = vcmask 1045508
  %v428 = vsel %vm427, %v426, %v423
  %s429 = scalar_lea.vmem %s0, 654
  %s430 = smov 192
  %v431 = vld [vmem:[%s429] ss:$16 sm:%s430]
  %vm432 = vcmask 1047558
  %v433 = vsel %vm432, %v431, %v428
  %434 = vrot.lane.b32.xlu0 %v433, 56
  %v435 = vpop.permute.xlu0 %434
  %vm436 = vcmask 490944
  %s437 = scalar_lea.vmem %s1, 40
  %438 = vst.msk [vmem:[%s437] sm:$0xff] %vm436, %v435
  %s439 = scalar_lea.vmem %s0, 270
  %s440 = smov 3
  %v441 = vld [vmem:[%s439] ss:$16 sm:%s440]
  %s442 = scalar_lea.vmem %s0, 270
  %s443 = smov 12
  %v444 = vld [vmem:[%s442] ss:$16 sm:%s443]
  %vm445 = vcmask 1043458
  %v446 = vsel %vm445, %v444, %v441
  %s447 = scalar_lea.vmem %s0, 270
  %s448 = smov 48
  %v449 = vld [vmem:[%s447] ss:$16 sm:%s448]
  %vm450 = vcmask 1045508
  %v451 = vsel %vm450, %v449, %v446
  %s452 = scalar_lea.vmem %s0, 270
  %s453 = smov 192
  %v454 = vld [vmem:[%s452] ss:$16 sm:%s453]
  %vm455 = vcmask 1047558
  %v456 = vsel %vm455, %v454, %v451
  %457 = vrot.lane.b32.xlu0 %v456, 56
  %v458 = vpop.permute.xlu0 %457
  %vm459 = vcmask 490944
  %s460 = scalar_lea.vmem %s1, 16
  %461 = vst.msk [vmem:[%s460] sm:$0xff] %vm459, %v458
  %s462 = scalar_lea.vmem %s0, 782
  %s463 = smov 3
  %v464 = vld [vmem:[%s462] ss:$16 sm:%s463]
  %s465 = scalar_lea.vmem %s0, 782
  %s466 = smov 12
  %v467 = vld [vmem:[%s465] ss:$16 sm:%s466]
  %vm468 = vcmask 1043458
  %v469 = vsel %vm468, %v467, %v464
  %s470 = scalar_lea.vmem %s0, 782
  %s471 = smov 48
  %v472 = vld [vmem:[%s470] ss:$16 sm:%s471]
  %vm473 = vcmask 1045508
  %v474 = vsel %vm473, %v472, %v469
  %s475 = scalar_lea.vmem %s0, 782
  %s476 = smov 192
  %v477 = vld [vmem:[%s475] ss:$16 sm:%s476]
  %vm478 = vcmask 1047558
  %v479 = vsel %vm478, %v477, %v474
  %480 = vrot.lane.b32.xlu0 %v479, 56
  %v481 = vpop.permute.xlu0 %480
  %vm482 = vcmask 490944
  %s483 = scalar_lea.vmem %s1, 48
  %484 = vst.msk [vmem:[%s483] sm:$0xff] %vm482, %v481
  %s485 = scalar_lea.vmem %s0, 398
  %s486 = smov 3
  %v487 = vld [vmem:[%s485] ss:$16 sm:%s486]
  %s488 = scalar_lea.vmem %s0, 398
  %s489 = smov 12
  %v490 = vld [vmem:[%s488] ss:$16 sm:%s489]
  %vm491 = vcmask 1043458
  %v492 = vsel %vm491, %v490, %v487
  %s493 = scalar_lea.vmem %s0, 398
  %s494 = smov 48
  %v495 = vld [vmem:[%s493] ss:$16 sm:%s494]
  %vm496 = vcmask 1045508
  %v497 = vsel %vm496, %v495, %v492
  %s498 = scalar_lea.vmem %s0, 398
  %s499 = smov 192
  %v500 = vld [vmem:[%s498] ss:$16 sm:%s499]
  %vm501 = vcmask 1047558
  %v502 = vsel %vm501, %v500, %v497
  %503 = vrot.lane.b32.xlu0 %v502, 56
  %v504 = vpop.permute.xlu0 %503
  %vm505 = vcmask 490944
  %s506 = scalar_lea.vmem %s1, 24
  %507 = vst.msk [vmem:[%s506] sm:$0xff] %vm505, %v504
  %s508 = scalar_lea.vmem %s0, 910
  %s509 = smov 3
  %v510 = vld [vmem:[%s508] ss:$16 sm:%s509]
  %s511 = scalar_lea.vmem %s0, 910
  %s512 = smov 12
  %v513 = vld [vmem:[%s511] ss:$16 sm:%s512]
  %vm514 = vcmask 1043458
  %v515 = vsel %vm514, %v513, %v510
  %s516 = scalar_lea.vmem %s0, 910
  %s517 = smov 48
  %v518 = vld [vmem:[%s516] ss:$16 sm:%s517]
  %vm519 = vcmask 1045508
  %v520 = vsel %vm519, %v518, %v515
  %s521 = scalar_lea.vmem %s0, 910
  %s522 = smov 192
  %v523 = vld [vmem:[%s521] ss:$16 sm:%s522]
  %vm524 = vcmask 1047558
  %v525 = vsel %vm524, %v523, %v520
  %526 = vrot.lane.b32.xlu0 %v525, 56
  %v527 = vpop.permute.xlu0 %526
  %vm528 = vcmask 490944
  %s529 = scalar_lea.vmem %s1, 56
  %530 = vst.msk [vmem:[%s529] sm:$0xff] %vm528, %v527
  %s531 = scalar_lea.vmem %s0, 13
  %s532 = smov 3
  %v533 = vld [vmem:[%s531] ss:$16 sm:%s532]
  %s534 = scalar_lea.vmem %s0, 13
  %s535 = smov 12
  %v536 = vld [vmem:[%s534] ss:$16 sm:%s535]
  %vm537 = vcmask 1043458
  %v538 = vsel %vm537, %v536, %v533
  %s539 = scalar_lea.vmem %s0, 13
  %s540 = smov 48
  %v541 = vld [vmem:[%s539] ss:$16 sm:%s540]
  %vm542 = vcmask 1045508
  %v543 = vsel %vm542, %v541, %v538
  %s544 = scalar_lea.vmem %s0, 13
  %s545 = smov 192
  %v546 = vld [vmem:[%s544] ss:$16 sm:%s545]
  %vm547 = vcmask 1047558
  %v548 = vsel %vm547, %v546, %v543
  %549 = vrot.lane.b32.xlu0 %v548, 52
  %v550 = vpop.permute.xlu0 %549
  %vm551 = vcmask 458144
  %552 = vst.msk [vmem:[%s1] sm:$0xff] %vm551, %v550
  %s553 = scalar_lea.vmem %s0, 525
  %s554 = smov 3
  %v555 = vld [vmem:[%s553] ss:$16 sm:%s554]
  %s556 = scalar_lea.vmem %s0, 525
  %s557 = smov 12
  %v558 = vld [vmem:[%s556] ss:$16 sm:%s557]
  %vm559 = vcmask 1043458
  %v560 = vsel %vm559, %v558, %v555
  %s561 = scalar_lea.vmem %s0, 525
  %s562 = smov 48
  %v563 = vld [vmem:[%s561] ss:$16 sm:%s562]
  %vm564 = vcmask 1045508
  %v565 = vsel %vm564, %v563, %v560
  %s566 = scalar_lea.vmem %s0, 525
  %s567 = smov 192
  %v568 = vld [vmem:[%s566] ss:$16 sm:%s567]
  %vm569 = vcmask 1047558
  %v570 = vsel %vm569, %v568, %v565
  %571 = vrot.lane.b32.xlu0 %v570, 52
  %v572 = vpop.permute.xlu0 %571
  %vm573 = vcmask 458144
  %s574 = scalar_lea.vmem %s1, 32
  %575 = vst.msk [vmem:[%s574] sm:$0xff] %vm573, %v572
  %s576 = scalar_lea.vmem %s0, 141
  %s577 = smov 3
  %v578 = vld [vmem:[%s576] ss:$16 sm:%s577]
  %s579 = scalar_lea.vmem %s0, 141
  %s580 = smov 12
  %v581 = vld [vmem:[%s579] ss:$16 sm:%s580]
  %vm582 = vcmask 1043458
  %v583 = vsel %vm582, %v581, %v578
  %s584 = scalar_lea.vmem %s0, 141
  %s585 = smov 48
  %v586 = vld [vmem:[%s584] ss:$16 sm:%s585]
  %vm587 = vcmask 1045508
  %v588 = vsel %vm587, %v586, %v583
  %s589 = scalar_lea.vmem %s0, 141
  %s590 = smov 192
  %v591 = vld [vmem:[%s589] ss:$16 sm:%s590]
  %vm592 = vcmask 1047558
  %v593 = vsel %vm592, %v591, %v588
  %594 = vrot.lane.b32.xlu0 %v593, 52
  %v595 = vpop.permute.xlu0 %594
  %vm596 = vcmask 458144
  %s597 = scalar_lea.vmem %s1, 8
  %598 = vst.msk [vmem:[%s597] sm:$0xff] %vm596, %v595
  %s599 = scalar_lea.vmem %s0, 653
  %s600 = smov 3
  %v601 = vld [vmem:[%s599] ss:$16 sm:%s600]
  %s602 = scalar_lea.vmem %s0, 653
  %s603 = smov 12
  %v604 = vld [vmem:[%s602] ss:$16 sm:%s603]
  %vm605 = vcmask 1043458
  %v606 = vsel %vm605, %v604, %v601
  %s607 = scalar_lea.vmem %s0, 653
  %s608 = smov 48
  %v609 = vld [vmem:[%s607] ss:$16 sm:%s608]
  %vm610 = vcmask 1045508
  %v611 = vsel %vm610, %v609, %v606
  %s612 = scalar_lea.vmem %s0, 653
  %s613 = smov 192
  %v614 = vld [vmem:[%s612] ss:$16 sm:%s613]
  %vm615 = vcmask 1047558
  %v616 = vsel %vm615, %v614, %v611
  %617 = vrot.lane.b32.xlu0 %v616, 52
  %v618 = vpop.permute.xlu0 %617
  %vm619 = vcmask 458144
  %s620 = scalar_lea.vmem %s1, 40
  %621 = vst.msk [vmem:[%s620] sm:$0xff] %vm619, %v618
  %s622 = scalar_lea.vmem %s0, 269
  %s623 = smov 3
  %v624 = vld [vmem:[%s622] ss:$16 sm:%s623]
  %s625 = scalar_lea.vmem %s0, 269
  %s626 = smov 12
  %v627 = vld [vmem:[%s625] ss:$16 sm:%s626]
  %vm628 = vcmask 1043458
  %v629 = vsel %vm628, %v627, %v624
  %s630 = scalar_lea.vmem %s0, 269
  %s631 = smov 48
  %v632 = vld [vmem:[%s630] ss:$16 sm:%s631]
  %vm633 = vcmask 1045508
  %v634 = vsel %vm633, %v632, %v629
  %s635 = scalar_lea.vmem %s0, 269
  %s636 = smov 192
  %v637 = vld [vmem:[%s635] ss:$16 sm:%s636]
  %vm638 = vcmask 1047558
  %v639 = vsel %vm638, %v637, %v634
  %640 = vrot.lane.b32.xlu0 %v639, 52
  %v641 = vpop.permute.xlu0 %640
  %vm642 = vcmask 458144
  %s643 = scalar_lea.vmem %s1, 16
  %644 = vst.msk [vmem:[%s643] sm:$0xff] %vm642, %v641
  %s645 = scalar_lea.vmem %s0, 781
  %s646 = smov 3
  %v647 = vld [vmem:[%s645] ss:$16 sm:%s646]
  %s648 = scalar_lea.vmem %s0, 781
  %s649 = smov 12
  %v650 = vld [vmem:[%s648] ss:$16 sm:%s649]
  %vm651 = vcmask 1043458
  %v652 = vsel %vm651, %v650, %v647
  %s653 = scalar_lea.vmem %s0, 781
  %s654 = smov 48
  %v655 = vld [vmem:[%s653] ss:$16 sm:%s654]
  %vm656 = vcmask 1045508
  %v657 = vsel %vm656, %v655, %v652
  %s658 = scalar_lea.vmem %s0, 781
  %s659 = smov 192
  %v660 = vld [vmem:[%s658] ss:$16 sm:%s659]
  %vm661 = vcmask 1047558
  %v662 = vsel %vm661, %v660, %v657
  %663 = vrot.lane.b32.xlu0 %v662, 52
  %v664 = vpop.permute.xlu0 %663
  %vm665 = vcmask 458144
  %s666 = scalar_lea.vmem %s1, 48
  %667 = vst.msk [vmem:[%s666] sm:$0xff] %vm665, %v664
  %s668 = scalar_lea.vmem %s0, 397
  %s669 = smov 3
  %v670 = vld [vmem:[%s668] ss:$16 sm:%s669]
  %s671 = scalar_lea.vmem %s0, 397
  %s672 = smov 12
  %v673 = vld [vmem:[%s671] ss:$16 sm:%s672]
  %vm674 = vcmask 1043458
  %v675 = vsel %vm674, %v673, %v670
  %s676 = scalar_lea.vmem %s0, 397
  %s677 = smov 48
  %v678 = vld [vmem:[%s676] ss:$16 sm:%s677]
  %vm679 = vcmask 1045508
  %v680 = vsel %vm679, %v678, %v675
  %s681 = scalar_lea.vmem %s0, 397
  %s682 = smov 192
  %v683 = vld [vmem:[%s681] ss:$16 sm:%s682]
  %vm684 = vcmask 1047558
  %v685 = vsel %vm684, %v683, %v680
  %686 = vrot.lane.b32.xlu0 %v685, 52
  %v687 = vpop.permute.xlu0 %686
  %vm688 = vcmask 458144
  %s689 = scalar_lea.vmem %s1, 24
  %690 = vst.msk [vmem:[%s689] sm:$0xff] %vm688, %v687
  %s691 = scalar_lea.vmem %s0, 909
  %s692 = smov 3
  %v693 = vld [vmem:[%s691] ss:$16 sm:%s692]
  %s694 = scalar_lea.vmem %s0, 909
  %s695 = smov 12
  %v696 = vld [vmem:[%s694] ss:$16 sm:%s695]
  %vm697 = vcmask 1043458
  %v698 = vsel %vm697, %v696, %v693
  %s699 = scalar_lea.vmem %s0, 909
  %s700 = smov 48
  %v701 = vld [vmem:[%s699] ss:$16 sm:%s700]
  %vm702 = vcmask 1045508
  %v703 = vsel %vm702, %v701, %v698
  %s704 = scalar_lea.vmem %s0, 909
  %s705 = smov 192
  %v706 = vld [vmem:[%s704] ss:$16 sm:%s705]
  %vm707 = vcmask 1047558
  %v708 = vsel %vm707, %v706, %v703
  %709 = vrot.lane.b32.xlu0 %v708, 52
  %v710 = vpop.permute.xlu0 %709
  %vm711 = vcmask 458144
  %s712 = scalar_lea.vmem %s1, 56
  %713 = vst.msk [vmem:[%s712] sm:$0xff] %vm711, %v710
  %s714 = scalar_lea.vmem %s0, 12
  %s715 = smov 3
  %v716 = vld [vmem:[%s714] ss:$16 sm:%s715]
  %s717 = scalar_lea.vmem %s0, 12
  %s718 = smov 12
  %v719 = vld [vmem:[%s717] ss:$16 sm:%s718]
  %vm720 = vcmask 1043458
  %v721 = vsel %vm720, %v719, %v716
  %s722 = scalar_lea.vmem %s0, 12
  %s723 = smov 48
  %v724 = vld [vmem:[%s722] ss:$16 sm:%s723]
  %vm725 = vcmask 1045508
  %v726 = vsel %vm725, %v724, %v721
  %s727 = scalar_lea.vmem %s0, 12
  %s728 = smov 192
  %v729 = vld [vmem:[%s727] ss:$16 sm:%s728]
  %vm730 = vcmask 1047558
  %v731 = vsel %vm730, %v729, %v726
  %732 = vrot.lane.b32.xlu0 %v731, 48
  %v733 = vpop.permute.xlu0 %732
  %vm734 = vcmask 425344
  %735 = vst.msk [vmem:[%s1] sm:$0xff] %vm734, %v733
  %s736 = scalar_lea.vmem %s0, 524
  %s737 = smov 3
  %v738 = vld [vmem:[%s736] ss:$16 sm:%s737]
  %s739 = scalar_lea.vmem %s0, 524
  %s740 = smov 12
  %v741 = vld [vmem:[%s739] ss:$16 sm:%s740]
  %vm742 = vcmask 1043458
  %v743 = vsel %vm742, %v741, %v738
  %s744 = scalar_lea.vmem %s0, 524
  %s745 = smov 48
  %v746 = vld [vmem:[%s744] ss:$16 sm:%s745]
  %vm747 = vcmask 1045508
  %v748 = vsel %vm747, %v746, %v743
  %s749 = scalar_lea.vmem %s0, 524
  %s750 = smov 192
  %v751 = vld [vmem:[%s749] ss:$16 sm:%s750]
  %vm752 = vcmask 1047558
  %v753 = vsel %vm752, %v751, %v748
  %754 = vrot.lane.b32.xlu0 %v753, 48
  %v755 = vpop.permute.xlu0 %754
  %vm756 = vcmask 425344
  %s757 = scalar_lea.vmem %s1, 32
  %758 = vst.msk [vmem:[%s757] sm:$0xff] %vm756, %v755
  %s759 = scalar_lea.vmem %s0, 140
  %s760 = smov 3
  %v761 = vld [vmem:[%s759] ss:$16 sm:%s760]
  %s762 = scalar_lea.vmem %s0, 140
  %s763 = smov 12
  %v764 = vld [vmem:[%s762] ss:$16 sm:%s763]
  %vm765 = vcmask 1043458
  %v766 = vsel %vm765, %v764, %v761
  %s767 = scalar_lea.vmem %s0, 140
  %s768 = smov 48
  %v769 = vld [vmem:[%s767] ss:$16 sm:%s768]
  %vm770 = vcmask 1045508
  %v771 = vsel %vm770, %v769, %v766
  %s772 = scalar_lea.vmem %s0, 140
  %s773 = smov 192
  %v774 = vld [vmem:[%s772] ss:$16 sm:%s773]
  %vm775 = vcmask 1047558
  %v776 = vsel %vm775, %v774, %v771
  %777 = vrot.lane.b32.xlu0 %v776, 48
  %v778 = vpop.permute.xlu0 %777
  %vm779 = vcmask 425344
  %s780 = scalar_lea.vmem %s1, 8
  %781 = vst.msk [vmem:[%s780] sm:$0xff] %vm779, %v778
  %s782 = scalar_lea.vmem %s0, 652
  %s783 = smov 3
  %v784 = vld [vmem:[%s782] ss:$16 sm:%s783]
  %s785 = scalar_lea.vmem %s0, 652
  %s786 = smov 12
  %v787 = vld [vmem:[%s785] ss:$16 sm:%s786]
  %vm788 = vcmask 1043458
  %v789 = vsel %vm788, %v787, %v784
  %s790 = scalar_lea.vmem %s0, 652
  %s791 = smov 48
  %v792 = vld [vmem:[%s790] ss:$16 sm:%s791]
  %vm793 = vcmask 1045508
  %v794 = vsel %vm793, %v792, %v789
  %s795 = scalar_lea.vmem %s0, 652
  %s796 = smov 192
  %v797 = vld [vmem:[%s795] ss:$16 sm:%s796]
  %vm798 = vcmask 1047558
  %v799 = vsel %vm798, %v797, %v794
  %800 = vrot.lane.b32.xlu0 %v799, 48
  %v801 = vpop.permute.xlu0 %800
  %vm802 = vcmask 425344
  %s803 = scalar_lea.vmem %s1, 40
  %804 = vst.msk [vmem:[%s803] sm:$0xff] %vm802, %v801
  %s805 = scalar_lea.vmem %s0, 268
  %s806 = smov 3
  %v807 = vld [vmem:[%s805] ss:$16 sm:%s806]
  %s808 = scalar_lea.vmem %s0, 268
  %s809 = smov 12
  %v810 = vld [vmem:[%s808] ss:$16 sm:%s809]
  %vm811 = vcmask 1043458
  %v812 = vsel %vm811, %v810, %v807
  %s813 = scalar_lea.vmem %s0, 268
  %s814 = smov 48
  %v815 = vld [vmem:[%s813] ss:$16 sm:%s814]
  %vm816 = vcmask 1045508
  %v817 = vsel %vm816, %v815, %v812
  %s818 = scalar_lea.vmem %s0, 268
  %s819 = smov 192
  %v820 = vld [vmem:[%s818] ss:$16 sm:%s819]
  %vm821 = vcmask 1047558
  %v822 = vsel %vm821, %v820, %v817
  %823 = vrot.lane.b32.xlu0 %v822, 48
  %v824 = vpop.permute.xlu0 %823
  %vm825 = vcmask 425344
  %s826 = scalar_lea.vmem %s1, 16
  %827 = vst.msk [vmem:[%s826] sm:$0xff] %vm825, %v824
  %s828 = scalar_lea.vmem %s0, 780
  %s829 = smov 3
  %v830 = vld [vmem:[%s828] ss:$16 sm:%s829]
  %s831 = scalar_lea.vmem %s0, 780
  %s832 = smov 12
  %v833 = vld [vmem:[%s831] ss:$16 sm:%s832]
  %vm834 = vcmask 1043458
  %v835 = vsel %vm834, %v833, %v830
  %s836 = scalar_lea.vmem %s0, 780
  %s837 = smov 48
  %v838 = vld [vmem:[%s836] ss:$16 sm:%s837]
  %vm839 = vcmask 1045508
  %v840 = vsel %vm839, %v838, %v835
  %s841 = scalar_lea.vmem %s0, 780
  %s842 = smov 192
  %v843 = vld [vmem:[%s841] ss:$16 sm:%s842]
  %vm844 = vcmask 1047558
  %v845 = vsel %vm844, %v843, %v840
  %846 = vrot.lane.b32.xlu0 %v845, 48
  %v847 = vpop.permute.xlu0 %846
  %vm848 = vcmask 425344
  %s849 = scalar_lea.vmem %s1, 48
  %850 = vst.msk [vmem:[%s849] sm:$0xff] %vm848, %v847
  %s851 = scalar_lea.vmem %s0, 396
  %s852 = smov 3
  %v853 = vld [vmem:[%s851] ss:$16 sm:%s852]
  %s854 = scalar_lea.vmem %s0, 396
  %s855 = smov 12
  %v856 = vld [vmem:[%s854] ss:$16 sm:%s855]
  %vm857 = vcmask 1043458
  %v858 = vsel %vm857, %v856, %v853
  %s859 = scalar_lea.vmem %s0, 396
  %s860 = smov 48
  %v861 = vld [vmem:[%s859] ss:$16 sm:%s860]
  %vm862 = vcmask 1045508
  %v863 = vsel %vm862, %v861, %v858
  %s864 = scalar_lea.vmem %s0, 396
  %s865 = smov 192
  %v866 = vld [vmem:[%s864] ss:$16 sm:%s865]
  %vm867 = vcmask 1047558
  %v868 = vsel %vm867, %v866, %v863
  %869 = vrot.lane.b32.xlu0 %v868, 48
  %v870 = vpop.permute.xlu0 %869
  %vm871 = vcmask 425344
  %s872 = scalar_lea.vmem %s1, 24
  %873 = vst.msk [vmem:[%s872] sm:$0xff] %vm871, %v870
  %s874 = scalar_lea.vmem %s0, 908
  %s875 = smov 3
  %v876 = vld [vmem:[%s874] ss:$16 sm:%s875]
  %s877 = scalar_lea.vmem %s0, 908
  %s878 = smov 12
  %v879 = vld [vmem:[%s877] ss:$16 sm:%s878]
  %vm880 = vcmask 1043458
  %v881 = vsel %vm880, %v879, %v876
  %s882 = scalar_lea.vmem %s0, 908
  %s883 = smov 48
  %v884 = vld [vmem:[%s882] ss:$16 sm:%s883]
  %vm885 = vcmask 1045508
  %v886 = vsel %vm885, %v884, %v881
  %s887 = scalar_lea.vmem %s0, 908
  %s888 = smov 192
  %v889 = vld [vmem:[%s887] ss:$16 sm:%s888]
  %vm890 = vcmask 1047558
  %v891 = vsel %vm890, %v889, %v886
  %892 = vrot.lane.b32.xlu0 %v891, 48
  %v893 = vpop.permute.xlu0 %892
  %vm894 = vcmask 425344
  %s895 = scalar_lea.vmem %s1, 56
  %896 = vst.msk [vmem:[%s895] sm:$0xff] %vm894, %v893
  %s897 = scalar_lea.vmem %s0, 11
  %s898 = smov 3
  %v899 = vld [vmem:[%s897] ss:$16 sm:%s898]
  %s900 = scalar_lea.vmem %s0, 11
  %s901 = smov 12
  %v902 = vld [vmem:[%s900] ss:$16 sm:%s901]
  %vm903 = vcmask 1043458
  %v904 = vsel %vm903, %v902, %v899
  %s905 = scalar_lea.vmem %s0, 11
  %s906 = smov 48
  %v907 = vld [vmem:[%s905] ss:$16 sm:%s906]
  %vm908 = vcmask 1045508
  %v909 = vsel %vm908, %v907, %v904
  %s910 = scalar_lea.vmem %s0, 11
  %s911 = smov 192
  %v912 = vld [vmem:[%s910] ss:$16 sm:%s911]
  %vm913 = vcmask 1047558
  %v914 = vsel %vm913, %v912, %v909
  %915 = vrot.lane.b32.xlu0 %v914, 44
  %v916 = vpop.permute.xlu0 %915
  %vm917 = vcmask 392544
  %918 = vst.msk [vmem:[%s1] sm:$0xff] %vm917, %v916
  %s919 = scalar_lea.vmem %s0, 523
  %s920 = smov 3
  %v921 = vld [vmem:[%s919] ss:$16 sm:%s920]
  %s922 = scalar_lea.vmem %s0, 523
  %s923 = smov 12
  %v924 = vld [vmem:[%s922] ss:$16 sm:%s923]
  %vm925 = vcmask 1043458
  %v926 = vsel %vm925, %v924, %v921
  %s927 = scalar_lea.vmem %s0, 523
  %s928 = smov 48
  %v929 = vld [vmem:[%s927] ss:$16 sm:%s928]
  %vm930 = vcmask 1045508
  %v931 = vsel %vm930, %v929, %v926
  %s932 = scalar_lea.vmem %s0, 523
  %s933 = smov 192
  %v934 = vld [vmem:[%s932] ss:$16 sm:%s933]
  %vm935 = vcmask 1047558
  %v936 = vsel %vm935, %v934, %v931
  %937 = vrot.lane.b32.xlu0 %v936, 44
  %v938 = vpop.permute.xlu0 %937
  %vm939 = vcmask 392544
  %s940 = scalar_lea.vmem %s1, 32
  %941 = vst.msk [vmem:[%s940] sm:$0xff] %vm939, %v938
  %s942 = scalar_lea.vmem %s0, 139
  %s943 = smov 3
  %v944 = vld [vmem:[%s942] ss:$16 sm:%s943]
  %s945 = scalar_lea.vmem %s0, 139
  %s946 = smov 12
  %v947 = vld [vmem:[%s945] ss:$16 sm:%s946]
  %vm948 = vcmask 1043458
  %v949 = vsel %vm948, %v947, %v944
  %s950 = scalar_lea.vmem %s0, 139
  %s951 = smov 48
  %v952 = vld [vmem:[%s950] ss:$16 sm:%s951]
  %vm953 = vcmask 1045508
  %v954 = vsel %vm953, %v952, %v949
  %s955 = scalar_lea.vmem %s0, 139
  %s956 = smov 192
  %v957 = vld [vmem:[%s955] ss:$16 sm:%s956]
  %vm958 = vcmask 1047558
  %v959 = vsel %vm958, %v957, %v954
  %960 = vrot.lane.b32.xlu0 %v959, 44
  %v961 = vpop.permute.xlu0 %960
  %vm962 = vcmask 392544
  %s963 = scalar_lea.vmem %s1, 8
  %964 = vst.msk [vmem:[%s963] sm:$0xff] %vm962, %v961
  %s965 = scalar_lea.vmem %s0, 651
  %s966 = smov 3
  %v967 = vld [vmem:[%s965] ss:$16 sm:%s966]
  %s968 = scalar_lea.vmem %s0, 651
  %s969 = smov 12
  %v970 = vld [vmem:[%s968] ss:$16 sm:%s969]
  %vm971 = vcmask 1043458
  %v972 = vsel %vm971, %v970, %v967
  %s973 = scalar_lea.vmem %s0, 651
  %s974 = smov 48
  %v975 = vld [vmem:[%s973] ss:$16 sm:%s974]
  %vm976 = vcmask 1045508
  %v977 = vsel %vm976, %v975, %v972
  %s978 = scalar_lea.vmem %s0, 651
  %s979 = smov 192
  %v980 = vld [vmem:[%s978] ss:$16 sm:%s979]
  %vm981 = vcmask 1047558
  %v982 = vsel %vm981, %v980, %v977
  %983 = vrot.lane.b32.xlu0 %v982, 44
  %v984 = vpop.permute.xlu0 %983
  %vm985 = vcmask 392544
  %s986 = scalar_lea.vmem %s1, 40
  %987 = vst.msk [vmem:[%s986] sm:$0xff] %vm985, %v984
  %s988 = scalar_lea.vmem %s0, 267
  %s989 = smov 3
  %v990 = vld [vmem:[%s988] ss:$16 sm:%s989]
  %s991 = scalar_lea.vmem %s0, 267
  %s992 = smov 12
  %v993 = vld [vmem:[%s991] ss:$16 sm:%s992]
  %vm994 = vcmask 1043458
  %v995 = vsel %vm994, %v993, %v990
  %s996 = scalar_lea.vmem %s0, 267
  %s997 = smov 48
  %v998 = vld [vmem:[%s996] ss:$16 sm:%s997]
  %vm999 = vcmask 1045508
  %v1000 = vsel %vm999, %v998, %v995
  %s1001 = scalar_lea.vmem %s0, 267
  %s1002 = smov 192
  %v1003 = vld [vmem:[%s1001] ss:$16 sm:%s1002]
  %vm1004 = vcmask 1047558
  %v1005 = vsel %vm1004, %v1003, %v1000
  %1006 = vrot.lane.b32.xlu0 %v1005, 44
  %v1007 = vpop.permute.xlu0 %1006
  %vm1008 = vcmask 392544
  %s1009 = scalar_lea.vmem %s1, 16
  %1010 = vst.msk [vmem:[%s1009] sm:$0xff] %vm1008, %v1007
  %s1011 = scalar_lea.vmem %s0, 779
  %s1012 = smov 3
  %v1013 = vld [vmem:[%s1011] ss:$16 sm:%s1012]
  %s1014 = scalar_lea.vmem %s0, 779
  %s1015 = smov 12
  %v1016 = vld [vmem:[%s1014] ss:$16 sm:%s1015]
  %vm1017 = vcmask 1043458
  %v1018 = vsel %vm1017, %v1016, %v1013
  %s1019 = scalar_lea.vmem %s0, 779
  %s1020 = smov 48
  %v1021 = vld [vmem:[%s1019] ss:$16 sm:%s1020]
  %vm1022 = vcmask 1045508
  %v1023 = vsel %vm1022, %v1021, %v1018
  %s1024 = scalar_lea.vmem %s0, 779
  %s1025 = smov 192
  %v1026 = vld [vmem:[%s1024] ss:$16 sm:%s1025]
  %vm1027 = vcmask 1047558
  %v1028 = vsel %vm1027, %v1026, %v1023
  %1029 = vrot.lane.b32.xlu0 %v1028, 44
  %v1030 = vpop.permute.xlu0 %1029
  %vm1031 = vcmask 392544
  %s1032 = scalar_lea.vmem %s1, 48
  %1033 = vst.msk [vmem:[%s1032] sm:$0xff] %vm1031, %v1030
  %s1034 = scalar_lea.vmem %s0, 395
  %s1035 = smov 3
  %v1036 = vld [vmem:[%s1034] ss:$16 sm:%s1035]
  %s1037 = scalar_lea.vmem %s0, 395
  %s1038 = smov 12
  %v1039 = vld [vmem:[%s1037] ss:$16 sm:%s1038]
  %vm1040 = vcmask 1043458
  %v1041 = vsel %vm1040, %v1039, %v1036
  %s1042 = scalar_lea.vmem %s0, 395
  %s1043 = smov 48
  %v1044 = vld [vmem:[%s1042] ss:$16 sm:%s1043]
  %vm1045 = vcmask 1045508
  %v1046 = vsel %vm1045, %v1044, %v1041
  %s1047 = scalar_lea.vmem %s0, 395
  %s1048 = smov 192
  %v1049 = vld [vmem:[%s1047] ss:$16 sm:%s1048]
  %vm1050 = vcmask 1047558
  %v1051 = vsel %vm1050, %v1049, %v1046
  %1052 = vrot.lane.b32.xlu0 %v1051, 44
  %v1053 = vpop.permute.xlu0 %1052
  %vm1054 = vcmask 392544
  %s1055 = scalar_lea.vmem %s1, 24
  %1056 = vst.msk [vmem:[%s1055] sm:$0xff] %vm1054, %v1053
  %s1057 = scalar_lea.vmem %s0, 907
  %s1058 = smov 3
  %v1059 = vld [vmem:[%s1057] ss:$16 sm:%s1058]
  %s1060 = scalar_lea.vmem %s0, 907
  %s1061 = smov 12
  %v1062 = vld [vmem:[%s1060] ss:$16 sm:%s1061]
  %vm1063 = vcmask 1043458
  %v1064 = vsel %vm1063, %v1062, %v1059
  %s1065 = scalar_lea.vmem %s0, 907
  %s1066 = smov 48
  %v1067 = vld [vmem:[%s1065] ss:$16 sm:%s1066]
  %vm1068 = vcmask 1045508
  %v1069 = vsel %vm1068, %v1067, %v1064
  %s1070 = scalar_lea.vmem %s0, 907
  %s1071 = smov 192
  %v1072 = vld [vmem:[%s1070] ss:$16 sm:%s1071]
  %vm1073 = vcmask 1047558
  %v1074 = vsel %vm1073, %v1072, %v1069
  %1075 = vrot.lane.b32.xlu0 %v1074, 44
  %v1076 = vpop.permute.xlu0 %1075
  %vm1077 = vcmask 392544
  %s1078 = scalar_lea.vmem %s1, 56
  %1079 = vst.msk [vmem:[%s1078] sm:$0xff] %vm1077, %v1076
  %s1080 = scalar_lea.vmem %s0, 10
  %s1081 = smov 3
  %v1082 = vld [vmem:[%s1080] ss:$16 sm:%s1081]
  %s1083 = scalar_lea.vmem %s0, 10
  %s1084 = smov 12
  %v1085 = vld [vmem:[%s1083] ss:$16 sm:%s1084]
  %vm1086 = vcmask 1043458
  %v1087 = vsel %vm1086, %v1085, %v1082
  %s1088 = scalar_lea.vmem %s0, 10
  %s1089 = smov 48
  %v1090 = vld [vmem:[%s1088] ss:$16 sm:%s1089]
  %vm1091 = vcmask 1045508
  %v1092 = vsel %vm1091, %v1090, %v1087
  %s1093 = scalar_lea.vmem %s0, 10
  %s1094 = smov 192
  %v1095 = vld [vmem:[%s1093] ss:$16 sm:%s1094]
  %vm1096 = vcmask 1047558
  %v1097 = vsel %vm1096, %v1095, %v1092
  %1098 = vrot.lane.b32.xlu0 %v1097, 40
  %v1099 = vpop.permute.xlu0 %1098
  %vm1100 = vcmask 359744
  %1101 = vst.msk [vmem:[%s1] sm:$0xff] %vm1100, %v1099
  %s1102 = scalar_lea.vmem %s0, 522
  %s1103 = smov 3
  %v1104 = vld [vmem:[%s1102] ss:$16 sm:%s1103]
  %s1105 = scalar_lea.vmem %s0, 522
  %s1106 = smov 12
  %v1107 = vld [vmem:[%s1105] ss:$16 sm:%s1106]
  %vm1108 = vcmask 1043458
  %v1109 = vsel %vm1108, %v1107, %v1104
  %s1110 = scalar_lea.vmem %s0, 522
  %s1111 = smov 48
  %v1112 = vld [vmem:[%s1110] ss:$16 sm:%s1111]
  %vm1113 = vcmask 1045508
  %v1114 = vsel %vm1113, %v1112, %v1109
  %s1115 = scalar_lea.vmem %s0, 522
  %s1116 = smov 192
  %v1117 = vld [vmem:[%s1115] ss:$16 sm:%s1116]
  %vm1118 = vcmask 1047558
  %v1119 = vsel %vm1118, %v1117, %v1114
  %1120 = vrot.lane.b32.xlu0 %v1119, 40
  %v1121 = vpop.permute.xlu0 %1120
  %vm1122 = vcmask 359744
  %s1123 = scalar_lea.vmem %s1, 32
  %1124 = vst.msk [vmem:[%s1123] sm:$0xff] %vm1122, %v1121
  %s1125 = scalar_lea.vmem %s0, 138
  %s1126 = smov 3
  %v1127 = vld [vmem:[%s1125] ss:$16 sm:%s1126]
  %s1128 = scalar_lea.vmem %s0, 138
  %s1129 = smov 12
  %v1130 = vld [vmem:[%s1128] ss:$16 sm:%s1129]
  %vm1131 = vcmask 1043458
  %v1132 = vsel %vm1131, %v1130, %v1127
  %s1133 = scalar_lea.vmem %s0, 138
  %s1134 = smov 48
  %v1135 = vld [vmem:[%s1133] ss:$16 sm:%s1134]
  %vm1136 = vcmask 1045508
  %v1137 = vsel %vm1136, %v1135, %v1132
  %s1138 = scalar_lea.vmem %s0, 138
  %s1139 = smov 192
  %v1140 = vld [vmem:[%s1138] ss:$16 sm:%s1139]
  %vm1141 = vcmask 1047558
  %v1142 = vsel %vm1141, %v1140, %v1137
  %1143 = vrot.lane.b32.xlu0 %v1142, 40
  %v1144 = vpop.permute.xlu0 %1143
  %vm1145 = vcmask 359744
  %s1146 = scalar_lea.vmem %s1, 8
  %1147 = vst.msk [vmem:[%s1146] sm:$0xff] %vm1145, %v1144
  %s1148 = scalar_lea.vmem %s0, 650
  %s1149 = smov 3
  %v1150 = vld [vmem:[%s1148] ss:$16 sm:%s1149]
  %s1151 = scalar_lea.vmem %s0, 650
  %s1152 = smov 12
  %v1153 = vld [vmem:[%s1151] ss:$16 sm:%s1152]
  %vm1154 = vcmask 1043458
  %v1155 = vsel %vm1154, %v1153, %v1150
  %s1156 = scalar_lea.vmem %s0, 650
  %s1157 = smov 48
  %v1158 = vld [vmem:[%s1156] ss:$16 sm:%s1157]
  %vm1159 = vcmask 1045508
  %v1160 = vsel %vm1159, %v1158, %v1155
  %s1161 = scalar_lea.vmem %s0, 650
  %s1162 = smov 192
  %v1163 = vld [vmem:[%s1161] ss:$16 sm:%s1162]
  %vm1164 = vcmask 1047558
  %v1165 = vsel %vm1164, %v1163, %v1160
  %1166 = vrot.lane.b32.xlu0 %v1165, 40
  %v1167 = vpop.permute.xlu0 %1166
  %vm1168 = vcmask 359744
  %s1169 = scalar_lea.vmem %s1, 40
  %1170 = vst.msk [vmem:[%s1169] sm:$0xff] %vm1168, %v1167
  %s1171 = scalar_lea.vmem %s0, 266
  %s1172 = smov 3
  %v1173 = vld [vmem:[%s1171] ss:$16 sm:%s1172]
  %s1174 = scalar_lea.vmem %s0, 266
  %s1175 = smov 12
  %v1176 = vld [vmem:[%s1174] ss:$16 sm:%s1175]
  %vm1177 = vcmask 1043458
  %v1178 = vsel %vm1177, %v1176, %v1173
  %s1179 = scalar_lea.vmem %s0, 266
  %s1180 = smov 48
  %v1181 = vld [vmem:[%s1179] ss:$16 sm:%s1180]
  %vm1182 = vcmask 1045508
  %v1183 = vsel %vm1182, %v1181, %v1178
  %s1184 = scalar_lea.vmem %s0, 266
  %s1185 = smov 192
  %v1186 = vld [vmem:[%s1184] ss:$16 sm:%s1185]
  %vm1187 = vcmask 1047558
  %v1188 = vsel %vm1187, %v1186, %v1183
  %1189 = vrot.lane.b32.xlu0 %v1188, 40
  %v1190 = vpop.permute.xlu0 %1189
  %vm1191 = vcmask 359744
  %s1192 = scalar_lea.vmem %s1, 16
  %1193 = vst.msk [vmem:[%s1192] sm:$0xff] %vm1191, %v1190
  %s1194 = scalar_lea.vmem %s0, 778
  %s1195 = smov 3
  %v1196 = vld [vmem:[%s1194] ss:$16 sm:%s1195]
  %s1197 = scalar_lea.vmem %s0, 778
  %s1198 = smov 12
  %v1199 = vld [vmem:[%s1197] ss:$16 sm:%s1198]
  %vm1200 = vcmask 1043458
  %v1201 = vsel %vm1200, %v1199, %v1196
  %s1202 = scalar_lea.vmem %s0, 778
  %s1203 = smov 48
  %v1204 = vld [vmem:[%s1202] ss:$16 sm:%s1203]
  %vm1205 = vcmask 1045508
  %v1206 = vsel %vm1205, %v1204, %v1201
  %s1207 = scalar_lea.vmem %s0, 778
  %s1208 = smov 192
  %v1209 = vld [vmem:[%s1207] ss:$16 sm:%s1208]
  %vm1210 = vcmask 1047558
  %v1211 = vsel %vm1210, %v1209, %v1206
  %1212 = vrot.lane.b32.xlu0 %v1211, 40
  %v1213 = vpop.permute.xlu0 %1212
  %vm1214 = vcmask 359744
  %s1215 = scalar_lea.vmem %s1, 48
  %1216 = vst.msk [vmem:[%s1215] sm:$0xff] %vm1214, %v1213
  %s1217 = scalar_lea.vmem %s0, 394
  %s1218 = smov 3
  %v1219 = vld [vmem:[%s1217] ss:$16 sm:%s1218]
  %s1220 = scalar_lea.vmem %s0, 394
  %s1221 = smov 12
  %v1222 = vld [vmem:[%s1220] ss:$16 sm:%s1221]
  %vm1223 = vcmask 1043458
  %v1224 = vsel %vm1223, %v1222, %v1219
  %s1225 = scalar_lea.vmem %s0, 394
  %s1226 = smov 48
  %v1227 = vld [vmem:[%s1225] ss:$16 sm:%s1226]
  %vm1228 = vcmask 1045508
  %v1229 = vsel %vm1228, %v1227, %v1224
  %s1230 = scalar_lea.vmem %s0, 394
  %s1231 = smov 192
  %v1232 = vld [vmem:[%s1230] ss:$16 sm:%s1231]
  %vm1233 = vcmask 1047558
  %v1234 = vsel %vm1233, %v1232, %v1229
  %1235 = vrot.lane.b32.xlu0 %v1234, 40
  %v1236 = vpop.permute.xlu0 %1235
  %vm1237 = vcmask 359744
  %s1238 = scalar_lea.vmem %s1, 24
  %1239 = vst.msk [vmem:[%s1238] sm:$0xff] %vm1237, %v1236
  %s1240 = scalar_lea.vmem %s0, 906
  %s1241 = smov 3
  %v1242 = vld [vmem:[%s1240] ss:$16 sm:%s1241]
  %s1243 = scalar_lea.vmem %s0, 906
  %s1244 = smov 12
  %v1245 = vld [vmem:[%s1243] ss:$16 sm:%s1244]
  %vm1246 = vcmask 1043458
  %v1247 = vsel %vm1246, %v1245, %v1242
  %s1248 = scalar_lea.vmem %s0, 906
  %s1249 = smov 48
  %v1250 = vld [vmem:[%s1248] ss:$16 sm:%s1249]
  %vm1251 = vcmask 1045508
  %v1252 = vsel %vm1251, %v1250, %v1247
  %s1253 = scalar_lea.vmem %s0, 906
  %s1254 = smov 192
  %v1255 = vld [vmem:[%s1253] ss:$16 sm:%s1254]
  %vm1256 = vcmask 1047558
  %v1257 = vsel %vm1256, %v1255, %v1252
  %1258 = vrot.lane.b32.xlu0 %v1257, 40
  %v1259 = vpop.permute.xlu0 %1258
  %vm1260 = vcmask 359744
  %s1261 = scalar_lea.vmem %s1, 56
  %1262 = vst.msk [vmem:[%s1261] sm:$0xff] %vm1260, %v1259
  %s1263 = scalar_lea.vmem %s0, 9
  %s1264 = smov 3
  %v1265 = vld [vmem:[%s1263] ss:$16 sm:%s1264]
  %s1266 = scalar_lea.vmem %s0, 9
  %s1267 = smov 12
  %v1268 = vld [vmem:[%s1266] ss:$16 sm:%s1267]
  %vm1269 = vcmask 1043458
  %v1270 = vsel %vm1269, %v1268, %v1265
  %s1271 = scalar_lea.vmem %s0, 9
  %s1272 = smov 48
  %v1273 = vld [vmem:[%s1271] ss:$16 sm:%s1272]
  %vm1274 = vcmask 1045508
  %v1275 = vsel %vm1274, %v1273, %v1270
  %s1276 = scalar_lea.vmem %s0, 9
  %s1277 = smov 192
  %v1278 = vld [vmem:[%s1276] ss:$16 sm:%s1277]
  %vm1279 = vcmask 1047558
  %v1280 = vsel %vm1279, %v1278, %v1275
  %1281 = vrot.lane.b32.xlu0 %v1280, 36
  %v1282 = vpop.permute.xlu0 %1281
  %vm1283 = vcmask 326944
  %1284 = vst.msk [vmem:[%s1] sm:$0xff] %vm1283, %v1282
  %s1285 = scalar_lea.vmem %s0, 521
  %s1286 = smov 3
  %v1287 = vld [vmem:[%s1285] ss:$16 sm:%s1286]
  %s1288 = scalar_lea.vmem %s0, 521
  %s1289 = smov 12
  %v1290 = vld [vmem:[%s1288] ss:$16 sm:%s1289]
  %vm1291 = vcmask 1043458
  %v1292 = vsel %vm1291, %v1290, %v1287
  %s1293 = scalar_lea.vmem %s0, 521
  %s1294 = smov 48
  %v1295 = vld [vmem:[%s1293] ss:$16 sm:%s1294]
  %vm1296 = vcmask 1045508
  %v1297 = vsel %vm1296, %v1295, %v1292
  %s1298 = scalar_lea.vmem %s0, 521
  %s1299 = smov 192
  %v1300 = vld [vmem:[%s1298] ss:$16 sm:%s1299]
  %vm1301 = vcmask 1047558
  %v1302 = vsel %vm1301, %v1300, %v1297
  %1303 = vrot.lane.b32.xlu0 %v1302, 36
  %v1304 = vpop.permute.xlu0 %1303
  %vm1305 = vcmask 326944
  %s1306 = scalar_lea.vmem %s1, 32
  %1307 = vst.msk [vmem:[%s1306] sm:$0xff] %vm1305, %v1304
  %s1308 = scalar_lea.vmem %s0, 137
  %s1309 = smov 3
  %v1310 = vld [vmem:[%s1308] ss:$16 sm:%s1309]
  %s1311 = scalar_lea.vmem %s0, 137
  %s1312 = smov 12
  %v1313 = vld [vmem:[%s1311] ss:$16 sm:%s1312]
  %vm1314 = vcmask 1043458
  %v1315 = vsel %vm1314, %v1313, %v1310
  %s1316 = scalar_lea.vmem %s0, 137
  %s1317 = smov 48
  %v1318 = vld [vmem:[%s1316] ss:$16 sm:%s1317]
  %vm1319 = vcmask 1045508
  %v1320 = vsel %vm1319, %v1318, %v1315
  %s1321 = scalar_lea.vmem %s0, 137
  %s1322 = smov 192
  %v1323 = vld [vmem:[%s1321] ss:$16 sm:%s1322]
  %vm1324 = vcmask 1047558
  %v1325 = vsel %vm1324, %v1323, %v1320
  %1326 = vrot.lane.b32.xlu0 %v1325, 36
  %v1327 = vpop.permute.xlu0 %1326
  %vm1328 = vcmask 326944
  %s1329 = scalar_lea.vmem %s1, 8
  %1330 = vst.msk [vmem:[%s1329] sm:$0xff] %vm1328, %v1327
  %s1331 = scalar_lea.vmem %s0, 649
  %s1332 = smov 3
  %v1333 = vld [vmem:[%s1331] ss:$16 sm:%s1332]
  %s1334 = scalar_lea.vmem %s0, 649
  %s1335 = smov 12
  %v1336 = vld [vmem:[%s1334] ss:$16 sm:%s1335]
  %vm1337 = vcmask 1043458
  %v1338 = vsel %vm1337, %v1336, %v1333
  %s1339 = scalar_lea.vmem %s0, 649
  %s1340 = smov 48
  %v1341 = vld [vmem:[%s1339] ss:$16 sm:%s1340]
  %vm1342 = vcmask 1045508
  %v1343 = vsel %vm1342, %v1341, %v1338
  %s1344 = scalar_lea.vmem %s0, 649
  %s1345 = smov 192
  %v1346 = vld [vmem:[%s1344] ss:$16 sm:%s1345]
  %vm1347 = vcmask 1047558
  %v1348 = vsel %vm1347, %v1346, %v1343
  %1349 = vrot.lane.b32.xlu0 %v1348, 36
  %v1350 = vpop.permute.xlu0 %1349
  %vm1351 = vcmask 326944
  %s1352 = scalar_lea.vmem %s1, 40
  %1353 = vst.msk [vmem:[%s1352] sm:$0xff] %vm1351, %v1350
  %s1354 = scalar_lea.vmem %s0, 265
  %s1355 = smov 3
  %v1356 = vld [vmem:[%s1354] ss:$16 sm:%s1355]
  %s1357 = scalar_lea.vmem %s0, 265
  %s1358 = smov 12
  %v1359 = vld [vmem:[%s1357] ss:$16 sm:%s1358]
  %vm1360 = vcmask 1043458
  %v1361 = vsel %vm1360, %v1359, %v1356
  %s1362 = scalar_lea.vmem %s0, 265
  %s1363 = smov 48
  %v1364 = vld [vmem:[%s1362] ss:$16 sm:%s1363]
  %vm1365 = vcmask 1045508
  %v1366 = vsel %vm1365, %v1364, %v1361
  %s1367 = scalar_lea.vmem %s0, 265
  %s1368 = smov 192
  %v1369 = vld [vmem:[%s1367] ss:$16 sm:%s1368]
  %vm1370 = vcmask 1047558
  %v1371 = vsel %vm1370, %v1369, %v1366
  %1372 = vrot.lane.b32.xlu0 %v1371, 36
  %v1373 = vpop.permute.xlu0 %1372
  %vm1374 = vcmask 326944
  %s1375 = scalar_lea.vmem %s1, 16
  %1376 = vst.msk [vmem:[%s1375] sm:$0xff] %vm1374, %v1373
  %s1377 = scalar_lea.vmem %s0, 777
  %s1378 = smov 3
  %v1379 = vld [vmem:[%s1377] ss:$16 sm:%s1378]
  %s1380 = scalar_lea.vmem %s0, 777
  %s1381 = smov 12
  %v1382 = vld [vmem:[%s1380] ss:$16 sm:%s1381]
  %vm1383 = vcmask 1043458
  %v1384 = vsel %vm1383, %v1382, %v1379
  %s1385 = scalar_lea.vmem %s0, 777
  %s1386 = smov 48
  %v1387 = vld [vmem:[%s1385] ss:$16 sm:%s1386]
  %vm1388 = vcmask 1045508
  %v1389 = vsel %vm1388, %v1387, %v1384
  %s1390 = scalar_lea.vmem %s0, 777
  %s1391 = smov 192
  %v1392 = vld [vmem:[%s1390] ss:$16 sm:%s1391]
  %vm1393 = vcmask 1047558
  %v1394 = vsel %vm1393, %v1392, %v1389
  %1395 = vrot.lane.b32.xlu0 %v1394, 36
  %v1396 = vpop.permute.xlu0 %1395
  %vm1397 = vcmask 326944
  %s1398 = scalar_lea.vmem %s1, 48
  %1399 = vst.msk [vmem:[%s1398] sm:$0xff] %vm1397, %v1396
  %s1400 = scalar_lea.vmem %s0, 393
  %s1401 = smov 3
  %v1402 = vld [vmem:[%s1400] ss:$16 sm:%s1401]
  %s1403 = scalar_lea.vmem %s0, 393
  %s1404 = smov 12
  %v1405 = vld [vmem:[%s1403] ss:$16 sm:%s1404]
  %vm1406 = vcmask 1043458
  %v1407 = vsel %vm1406, %v1405, %v1402
  %s1408 = scalar_lea.vmem %s0, 393
  %s1409 = smov 48
  %v1410 = vld [vmem:[%s1408] ss:$16 sm:%s1409]
  %vm1411 = vcmask 1045508
  %v1412 = vsel %vm1411, %v1410, %v1407
  %s1413 = scalar_lea.vmem %s0, 393
  %s1414 = smov 192
  %v1415 = vld [vmem:[%s1413] ss:$16 sm:%s1414]
  %vm1416 = vcmask 1047558
  %v1417 = vsel %vm1416, %v1415, %v1412
  %1418 = vrot.lane.b32.xlu0 %v1417, 36
  %v1419 = vpop.permute.xlu0 %1418
  %vm1420 = vcmask 326944
  %s1421 = scalar_lea.vmem %s1, 24
  %1422 = vst.msk [vmem:[%s1421] sm:$0xff] %vm1420, %v1419
  %s1423 = scalar_lea.vmem %s0, 905
  %s1424 = smov 3
  %v1425 = vld [vmem:[%s1423] ss:$16 sm:%s1424]
  %s1426 = scalar_lea.vmem %s0, 905
  %s1427 = smov 12
  %v1428 = vld [vmem:[%s1426] ss:$16 sm:%s1427]
  %vm1429 = vcmask 1043458
  %v1430 = vsel %vm1429, %v1428, %v1425
  %s1431 = scalar_lea.vmem %s0, 905
  %s1432 = smov 48
  %v1433 = vld [vmem:[%s1431] ss:$16 sm:%s1432]
  %vm1434 = vcmask 1045508
  %v1435 = vsel %vm1434, %v1433, %v1430
  %s1436 = scalar_lea.vmem %s0, 905
  %s1437 = smov 192
  %v1438 = vld [vmem:[%s1436] ss:$16 sm:%s1437]
  %vm1439 = vcmask 1047558
  %v1440 = vsel %vm1439, %v1438, %v1435
  %1441 = vrot.lane.b32.xlu0 %v1440, 36
  %v1442 = vpop.permute.xlu0 %1441
  %vm1443 = vcmask 326944
  %s1444 = scalar_lea.vmem %s1, 56
  %1445 = vst.msk [vmem:[%s1444] sm:$0xff] %vm1443, %v1442
  %s1446 = scalar_lea.vmem %s0, 8
  %s1447 = smov 3
  %v1448 = vld [vmem:[%s1446] ss:$16 sm:%s1447]
  %s1449 = scalar_lea.vmem %s0, 8
  %s1450 = smov 12
  %v1451 = vld [vmem:[%s1449] ss:$16 sm:%s1450]
  %vm1452 = vcmask 1043458
  %v1453 = vsel %vm1452, %v1451, %v1448
  %s1454 = scalar_lea.vmem %s0, 8
  %s1455 = smov 48
  %v1456 = vld [vmem:[%s1454] ss:$16 sm:%s1455]
  %vm1457 = vcmask 1045508
  %v1458 = vsel %vm1457, %v1456, %v1453
  %s1459 = scalar_lea.vmem %s0, 8
  %s1460 = smov 192
  %v1461 = vld [vmem:[%s1459] ss:$16 sm:%s1460]
  %vm1462 = vcmask 1047558
  %v1463 = vsel %vm1462, %v1461, %v1458
  %1464 = vrot.lane.b32.xlu0 %v1463, 32
  %v1465 = vpop.permute.xlu0 %1464
  %vm1466 = vcmask 294144
  %1467 = vst.msk [vmem:[%s1] sm:$0xff] %vm1466, %v1465
  %s1468 = scalar_lea.vmem %s0, 520
  %s1469 = smov 3
  %v1470 = vld [vmem:[%s1468] ss:$16 sm:%s1469]
  %s1471 = scalar_lea.vmem %s0, 520
  %s1472 = smov 12
  %v1473 = vld [vmem:[%s1471] ss:$16 sm:%s1472]
  %vm1474 = vcmask 1043458
  %v1475 = vsel %vm1474, %v1473, %v1470
  %s1476 = scalar_lea.vmem %s0, 520
  %s1477 = smov 48
  %v1478 = vld [vmem:[%s1476] ss:$16 sm:%s1477]
  %vm1479 = vcmask 1045508
  %v1480 = vsel %vm1479, %v1478, %v1475
  %s1481 = scalar_lea.vmem %s0, 520
  %s1482 = smov 192
  %v1483 = vld [vmem:[%s1481] ss:$16 sm:%s1482]
  %vm1484 = vcmask 1047558
  %v1485 = vsel %vm1484, %v1483, %v1480
  %1486 = vrot.lane.b32.xlu0 %v1485, 32
  %v1487 = vpop.permute.xlu0 %1486
  %vm1488 = vcmask 294144
  %s1489 = scalar_lea.vmem %s1, 32
  %1490 = vst.msk [vmem:[%s1489] sm:$0xff] %vm1488, %v1487
  %s1491 = scalar_lea.vmem %s0, 136
  %s1492 = smov 3
  %v1493 = vld [vmem:[%s1491] ss:$16 sm:%s1492]
  %s1494 = scalar_lea.vmem %s0, 136
  %s1495 = smov 12
  %v1496 = vld [vmem:[%s1494] ss:$16 sm:%s1495]
  %vm1497 = vcmask 1043458
  %v1498 = vsel %vm1497, %v1496, %v1493
  %s1499 = scalar_lea.vmem %s0, 136
  %s1500 = smov 48
  %v1501 = vld [vmem:[%s1499] ss:$16 sm:%s1500]
  %vm1502 = vcmask 1045508
  %v1503 = vsel %vm1502, %v1501, %v1498
  %s1504 = scalar_lea.vmem %s0, 136
  %s1505 = smov 192
  %v1506 = vld [vmem:[%s1504] ss:$16 sm:%s1505]
  %vm1507 = vcmask 1047558
  %v1508 = vsel %vm1507, %v1506, %v1503
  %1509 = vrot.lane.b32.xlu0 %v1508, 32
  %v1510 = vpop.permute.xlu0 %1509
  %vm1511 = vcmask 294144
  %s1512 = scalar_lea.vmem %s1, 8
  %1513 = vst.msk [vmem:[%s1512] sm:$0xff] %vm1511, %v1510
  %s1514 = scalar_lea.vmem %s0, 648
  %s1515 = smov 3
  %v1516 = vld [vmem:[%s1514] ss:$16 sm:%s1515]
  %s1517 = scalar_lea.vmem %s0, 648
  %s1518 = smov 12
  %v1519 = vld [vmem:[%s1517] ss:$16 sm:%s1518]
  %vm1520 = vcmask 1043458
  %v1521 = vsel %vm1520, %v1519, %v1516
  %s1522 = scalar_lea.vmem %s0, 648
  %s1523 = smov 48
  %v1524 = vld [vmem:[%s1522] ss:$16 sm:%s1523]
  %vm1525 = vcmask 1045508
  %v1526 = vsel %vm1525, %v1524, %v1521
  %s1527 = scalar_lea.vmem %s0, 648
  %s1528 = smov 192
  %v1529 = vld [vmem:[%s1527] ss:$16 sm:%s1528]
  %vm1530 = vcmask 1047558
  %v1531 = vsel %vm1530, %v1529, %v1526
  %1532 = vrot.lane.b32.xlu0 %v1531, 32
  %v1533 = vpop.permute.xlu0 %1532
  %vm1534 = vcmask 294144
  %s1535 = scalar_lea.vmem %s1, 40
  %1536 = vst.msk [vmem:[%s1535] sm:$0xff] %vm1534, %v1533
  %s1537 = scalar_lea.vmem %s0, 264
  %s1538 = smov 3
  %v1539 = vld [vmem:[%s1537] ss:$16 sm:%s1538]
  %s1540 = scalar_lea.vmem %s0, 264
  %s1541 = smov 12
  %v1542 = vld [vmem:[%s1540] ss:$16 sm:%s1541]
  %vm1543 = vcmask 1043458
  %v1544 = vsel %vm1543, %v1542, %v1539
  %s1545 = scalar_lea.vmem %s0, 264
  %s1546 = smov 48
  %v1547 = vld [vmem:[%s1545] ss:$16 sm:%s1546]
  %vm1548 = vcmask 1045508
  %v1549 = vsel %vm1548, %v1547, %v1544
  %s1550 = scalar_lea.vmem %s0, 264
  %s1551 = smov 192
  %v1552 = vld [vmem:[%s1550] ss:$16 sm:%s1551]
  %vm1553 = vcmask 1047558
  %v1554 = vsel %vm1553, %v1552, %v1549
  %1555 = vrot.lane.b32.xlu0 %v1554, 32
  %v1556 = vpop.permute.xlu0 %1555
  %vm1557 = vcmask 294144
  %s1558 = scalar_lea.vmem %s1, 16
  %1559 = vst.msk [vmem:[%s1558] sm:$0xff] %vm1557, %v1556
  %s1560 = scalar_lea.vmem %s0, 776
  %s1561 = smov 3
  %v1562 = vld [vmem:[%s1560] ss:$16 sm:%s1561]
  %s1563 = scalar_lea.vmem %s0, 776
  %s1564 = smov 12
  %v1565 = vld [vmem:[%s1563] ss:$16 sm:%s1564]
  %vm1566 = vcmask 1043458
  %v1567 = vsel %vm1566, %v1565, %v1562
  %s1568 = scalar_lea.vmem %s0, 776
  %s1569 = smov 48
  %v1570 = vld [vmem:[%s1568] ss:$16 sm:%s1569]
  %vm1571 = vcmask 1045508
  %v1572 = vsel %vm1571, %v1570, %v1567
  %s1573 = scalar_lea.vmem %s0, 776
  %s1574 = smov 192
  %v1575 = vld [vmem:[%s1573] ss:$16 sm:%s1574]
  %vm1576 = vcmask 1047558
  %v1577 = vsel %vm1576, %v1575, %v1572
  %1578 = vrot.lane.b32.xlu0 %v1577, 32
  %v1579 = vpop.permute.xlu0 %1578
  %vm1580 = vcmask 294144
  %s1581 = scalar_lea.vmem %s1, 48
  %1582 = vst.msk [vmem:[%s1581] sm:$0xff] %vm1580, %v1579
  %s1583 = scalar_lea.vmem %s0, 392
  %s1584 = smov 3
  %v1585 = vld [vmem:[%s1583] ss:$16 sm:%s1584]
  %s1586 = scalar_lea.vmem %s0, 392
  %s1587 = smov 12
  %v1588 = vld [vmem:[%s1586] ss:$16 sm:%s1587]
  %vm1589 = vcmask 1043458
  %v1590 = vsel %vm1589, %v1588, %v1585
  %s1591 = scalar_lea.vmem %s0, 392
  %s1592 = smov 48
  %v1593 = vld [vmem:[%s1591] ss:$16 sm:%s1592]
  %vm1594 = vcmask 1045508
  %v1595 = vsel %vm1594, %v1593, %v1590
  %s1596 = scalar_lea.vmem %s0, 392
  %s1597 = smov 192
  %v1598 = vld [vmem:[%s1596] ss:$16 sm:%s1597]
  %vm1599 = vcmask 1047558
  %v1600 = vsel %vm1599, %v1598, %v1595
  %1601 = vrot.lane.b32.xlu0 %v1600, 32
  %v1602 = vpop.permute.xlu0 %1601
  %vm1603 = vcmask 294144
  %s1604 = scalar_lea.vmem %s1, 24
  %1605 = vst.msk [vmem:[%s1604] sm:$0xff] %vm1603, %v1602
  %s1606 = scalar_lea.vmem %s0, 904
  %s1607 = smov 3
  %v1608 = vld [vmem:[%s1606] ss:$16 sm:%s1607]
  %s1609 = scalar_lea.vmem %s0, 904
  %s1610 = smov 12
  %v1611 = vld [vmem:[%s1609] ss:$16 sm:%s1610]
  %vm1612 = vcmask 1043458
  %v1613 = vsel %vm1612, %v1611, %v1608
  %s1614 = scalar_lea.vmem %s0, 904
  %s1615 = smov 48
  %v1616 = vld [vmem:[%s1614] ss:$16 sm:%s1615]
  %vm1617 = vcmask 1045508
  %v1618 = vsel %vm1617, %v1616, %v1613
  %s1619 = scalar_lea.vmem %s0, 904
  %s1620 = smov 192
  %v1621 = vld [vmem:[%s1619] ss:$16 sm:%s1620]
  %vm1622 = vcmask 1047558
  %v1623 = vsel %vm1622, %v1621, %v1618
  %1624 = vrot.lane.b32.xlu0 %v1623, 32
  %v1625 = vpop.permute.xlu0 %1624
  %vm1626 = vcmask 294144
  %s1627 = scalar_lea.vmem %s1, 56
  %1628 = vst.msk [vmem:[%s1627] sm:$0xff] %vm1626, %v1625
  %s1629 = scalar_lea.vmem %s0, 7
  %s1630 = smov 3
  %v1631 = vld [vmem:[%s1629] ss:$16 sm:%s1630]
  %s1632 = scalar_lea.vmem %s0, 7
  %s1633 = smov 12
  %v1634 = vld [vmem:[%s1632] ss:$16 sm:%s1633]
  %vm1635 = vcmask 1043458
  %v1636 = vsel %vm1635, %v1634, %v1631
  %s1637 = scalar_lea.vmem %s0, 7
  %s1638 = smov 48
  %v1639 = vld [vmem:[%s1637] ss:$16 sm:%s1638]
  %vm1640 = vcmask 1045508
  %v1641 = vsel %vm1640, %v1639, %v1636
  %s1642 = scalar_lea.vmem %s0, 7
  %s1643 = smov 192
  %v1644 = vld [vmem:[%s1642] ss:$16 sm:%s1643]
  %vm1645 = vcmask 1047558
  %v1646 = vsel %vm1645, %v1644, %v1641
  %1647 = vrot.lane.b32.xlu0 %v1646, 28
  %v1648 = vpop.permute.xlu0 %1647
  %vm1649 = vcmask 261344
  %1650 = vst.msk [vmem:[%s1] sm:$0xff] %vm1649, %v1648
  %s1651 = scalar_lea.vmem %s0, 519
  %s1652 = smov 3
  %v1653 = vld [vmem:[%s1651] ss:$16 sm:%s1652]
  %s1654 = scalar_lea.vmem %s0, 519
  %s1655 = smov 12
  %v1656 = vld [vmem:[%s1654] ss:$16 sm:%s1655]
  %vm1657 = vcmask 1043458
  %v1658 = vsel %vm1657, %v1656, %v1653
  %s1659 = scalar_lea.vmem %s0, 519
  %s1660 = smov 48
  %v1661 = vld [vmem:[%s1659] ss:$16 sm:%s1660]
  %vm1662 = vcmask 1045508
  %v1663 = vsel %vm1662, %v1661, %v1658
  %s1664 = scalar_lea.vmem %s0, 519
  %s1665 = smov 192
  %v1666 = vld [vmem:[%s1664] ss:$16 sm:%s1665]
  %vm1667 = vcmask 1047558
  %v1668 = vsel %vm1667, %v1666, %v1663
  %1669 = vrot.lane.b32.xlu0 %v1668, 28
  %v1670 = vpop.permute.xlu0 %1669
  %vm1671 = vcmask 261344
  %s1672 = scalar_lea.vmem %s1, 32
  %1673 = vst.msk [vmem:[%s1672] sm:$0xff] %vm1671, %v1670
  %s1674 = scalar_lea.vmem %s0, 135
  %s1675 = smov 3
  %v1676 = vld [vmem:[%s1674] ss:$16 sm:%s1675]
  %s1677 = scalar_lea.vmem %s0, 135
  %s1678 = smov 12
  %v1679 = vld [vmem:[%s1677] ss:$16 sm:%s1678]
  %vm1680 = vcmask 1043458
  %v1681 = vsel %vm1680, %v1679, %v1676
  %s1682 = scalar_lea.vmem %s0, 135
  %s1683 = smov 48
  %v1684 = vld [vmem:[%s1682] ss:$16 sm:%s1683]
  %vm1685 = vcmask 1045508
  %v1686 = vsel %vm1685, %v1684, %v1681
  %s1687 = scalar_lea.vmem %s0, 135
  %s1688 = smov 192
  %v1689 = vld [vmem:[%s1687] ss:$16 sm:%s1688]
  %vm1690 = vcmask 1047558
  %v1691 = vsel %vm1690, %v1689, %v1686
  %1692 = vrot.lane.b32.xlu0 %v1691, 28
  %v1693 = vpop.permute.xlu0 %1692
  %vm1694 = vcmask 261344
  %s1695 = scalar_lea.vmem %s1, 8
  %1696 = vst.msk [vmem:[%s1695] sm:$0xff] %vm1694, %v1693
  %s1697 = scalar_lea.vmem %s0, 647
  %s1698 = smov 3
  %v1699 = vld [vmem:[%s1697] ss:$16 sm:%s1698]
  %s1700 = scalar_lea.vmem %s0, 647
  %s1701 = smov 12
  %v1702 = vld [vmem:[%s1700] ss:$16 sm:%s1701]
  %vm1703 = vcmask 1043458
  %v1704 = vsel %vm1703, %v1702, %v1699
  %s1705 = scalar_lea.vmem %s0, 647
  %s1706 = smov 48
  %v1707 = vld [vmem:[%s1705] ss:$16 sm:%s1706]
  %vm1708 = vcmask 1045508
  %v1709 = vsel %vm1708, %v1707, %v1704
  %s1710 = scalar_lea.vmem %s0, 647
  %s1711 = smov 192
  %v1712 = vld [vmem:[%s1710] ss:$16 sm:%s1711]
  %vm1713 = vcmask 1047558
  %v1714 = vsel %vm1713, %v1712, %v1709
  %1715 = vrot.lane.b32.xlu0 %v1714, 28
  %v1716 = vpop.permute.xlu0 %1715
  %vm1717 = vcmask 261344
  %s1718 = scalar_lea.vmem %s1, 40
  %1719 = vst.msk [vmem:[%s1718] sm:$0xff] %vm1717, %v1716
  %s1720 = scalar_lea.vmem %s0, 263
  %s1721 = smov 3
  %v1722 = vld [vmem:[%s1720] ss:$16 sm:%s1721]
  %s1723 = scalar_lea.vmem %s0, 263
  %s1724 = smov 12
  %v1725 = vld [vmem:[%s1723] ss:$16 sm:%s1724]
  %vm1726 = vcmask 1043458
  %v1727 = vsel %vm1726, %v1725, %v1722
  %s1728 = scalar_lea.vmem %s0, 263
  %s1729 = smov 48
  %v1730 = vld [vmem:[%s1728] ss:$16 sm:%s1729]
  %vm1731 = vcmask 1045508
  %v1732 = vsel %vm1731, %v1730, %v1727
  %s1733 = scalar_lea.vmem %s0, 263
  %s1734 = smov 192
  %v1735 = vld [vmem:[%s1733] ss:$16 sm:%s1734]
  %vm1736 = vcmask 1047558
  %v1737 = vsel %vm1736, %v1735, %v1732
  %1738 = vrot.lane.b32.xlu0 %v1737, 28
  %v1739 = vpop.permute.xlu0 %1738
  %vm1740 = vcmask 261344
  %s1741 = scalar_lea.vmem %s1, 16
  %1742 = vst.msk [vmem:[%s1741] sm:$0xff] %vm1740, %v1739
  %s1743 = scalar_lea.vmem %s0, 775
  %s1744 = smov 3
  %v1745 = vld [vmem:[%s1743] ss:$16 sm:%s1744]
  %s1746 = scalar_lea.vmem %s0, 775
  %s1747 = smov 12
  %v1748 = vld [vmem:[%s1746] ss:$16 sm:%s1747]
  %vm1749 = vcmask 1043458
  %v1750 = vsel %vm1749, %v1748, %v1745
  %s1751 = scalar_lea.vmem %s0, 775
  %s1752 = smov 48
  %v1753 = vld [vmem:[%s1751] ss:$16 sm:%s1752]
  %vm1754 = vcmask 1045508
  %v1755 = vsel %vm1754, %v1753, %v1750
  %s1756 = scalar_lea.vmem %s0, 775
  %s1757 = smov 192
  %v1758 = vld [vmem:[%s1756] ss:$16 sm:%s1757]
  %vm1759 = vcmask 1047558
  %v1760 = vsel %vm1759, %v1758, %v1755
  %1761 = vrot.lane.b32.xlu0 %v1760, 28
  %v1762 = vpop.permute.xlu0 %1761
  %vm1763 = vcmask 261344
  %s1764 = scalar_lea.vmem %s1, 48
  %1765 = vst.msk [vmem:[%s1764] sm:$0xff] %vm1763, %v1762
  %s1766 = scalar_lea.vmem %s0, 391
  %s1767 = smov 3
  %v1768 = vld [vmem:[%s1766] ss:$16 sm:%s1767]
  %s1769 = scalar_lea.vmem %s0, 391
  %s1770 = smov 12
  %v1771 = vld [vmem:[%s1769] ss:$16 sm:%s1770]
  %vm1772 = vcmask 1043458
  %v1773 = vsel %vm1772, %v1771, %v1768
  %s1774 = scalar_lea.vmem %s0, 391
  %s1775 = smov 48
  %v1776 = vld [vmem:[%s1774] ss:$16 sm:%s1775]
  %vm1777 = vcmask 1045508
  %v1778 = vsel %vm1777, %v1776, %v1773
  %s1779 = scalar_lea.vmem %s0, 391
  %s1780 = smov 192
  %v1781 = vld [vmem:[%s1779] ss:$16 sm:%s1780]
  %vm1782 = vcmask 1047558
  %v1783 = vsel %vm1782, %v1781, %v1778
  %1784 = vrot.lane.b32.xlu0 %v1783, 28
  %v1785 = vpop.permute.xlu0 %1784
  %vm1786 = vcmask 261344
  %s1787 = scalar_lea.vmem %s1, 24
  %1788 = vst.msk [vmem:[%s1787] sm:$0xff] %vm1786, %v1785
  %s1789 = scalar_lea.vmem %s0, 903
  %s1790 = smov 3
  %v1791 = vld [vmem:[%s1789] ss:$16 sm:%s1790]
  %s1792 = scalar_lea.vmem %s0, 903
  %s1793 = smov 12
  %v1794 = vld [vmem:[%s1792] ss:$16 sm:%s1793]
  %vm1795 = vcmask 1043458
  %v1796 = vsel %vm1795, %v1794, %v1791
  %s1797 = scalar_lea.vmem %s0, 903
  %s1798 = smov 48
  %v1799 = vld [vmem:[%s1797] ss:$16 sm:%s1798]
  %vm1800 = vcmask 1045508
  %v1801 = vsel %vm1800, %v1799, %v1796
  %s1802 = scalar_lea.vmem %s0, 903
  %s1803 = smov 192
  %v1804 = vld [vmem:[%s1802] ss:$16 sm:%s1803]
  %vm1805 = vcmask 1047558
  %v1806 = vsel %vm1805, %v1804, %v1801
  %1807 = vrot.lane.b32.xlu0 %v1806, 28
  %v1808 = vpop.permute.xlu0 %1807
  %vm1809 = vcmask 261344
  %s1810 = scalar_lea.vmem %s1, 56
  %1811 = vst.msk [vmem:[%s1810] sm:$0xff] %vm1809, %v1808
  %s1812 = scalar_lea.vmem %s0, 6
  %s1813 = smov 3
  %v1814 = vld [vmem:[%s1812] ss:$16 sm:%s1813]
  %s1815 = scalar_lea.vmem %s0, 6
  %s1816 = smov 12
  %v1817 = vld [vmem:[%s1815] ss:$16 sm:%s1816]
  %vm1818 = vcmask 1043458
  %v1819 = vsel %vm1818, %v1817, %v1814
  %s1820 = scalar_lea.vmem %s0, 6
  %s1821 = smov 48
  %v1822 = vld [vmem:[%s1820] ss:$16 sm:%s1821]
  %vm1823 = vcmask 1045508
  %v1824 = vsel %vm1823, %v1822, %v1819
  %s1825 = scalar_lea.vmem %s0, 6
  %s1826 = smov 192
  %v1827 = vld [vmem:[%s1825] ss:$16 sm:%s1826]
  %vm1828 = vcmask 1047558
  %v1829 = vsel %vm1828, %v1827, %v1824
  %1830 = vrot.lane.b32.xlu0 %v1829, 24
  %v1831 = vpop.permute.xlu0 %1830
  %vm1832 = vcmask 228544
  %1833 = vst.msk [vmem:[%s1] sm:$0xff] %vm1832, %v1831
  %s1834 = scalar_lea.vmem %s0, 518
  %s1835 = smov 3
  %v1836 = vld [vmem:[%s1834] ss:$16 sm:%s1835]
  %s1837 = scalar_lea.vmem %s0, 518
  %s1838 = smov 12
  %v1839 = vld [vmem:[%s1837] ss:$16 sm:%s1838]
  %vm1840 = vcmask 1043458
  %v1841 = vsel %vm1840, %v1839, %v1836
  %s1842 = scalar_lea.vmem %s0, 518
  %s1843 = smov 48
  %v1844 = vld [vmem:[%s1842] ss:$16 sm:%s1843]
  %vm1845 = vcmask 1045508
  %v1846 = vsel %vm1845, %v1844, %v1841
  %s1847 = scalar_lea.vmem %s0, 518
  %s1848 = smov 192
  %v1849 = vld [vmem:[%s1847] ss:$16 sm:%s1848]
  %vm1850 = vcmask 1047558
  %v1851 = vsel %vm1850, %v1849, %v1846
  %1852 = vrot.lane.b32.xlu0 %v1851, 24
  %v1853 = vpop.permute.xlu0 %1852
  %vm1854 = vcmask 228544
  %s1855 = scalar_lea.vmem %s1, 32
  %1856 = vst.msk [vmem:[%s1855] sm:$0xff] %vm1854, %v1853
  %s1857 = scalar_lea.vmem %s0, 134
  %s1858 = smov 3
  %v1859 = vld [vmem:[%s1857] ss:$16 sm:%s1858]
  %s1860 = scalar_lea.vmem %s0, 134
  %s1861 = smov 12
  %v1862 = vld [vmem:[%s1860] ss:$16 sm:%s1861]
  %vm1863 = vcmask 1043458
  %v1864 = vsel %vm1863, %v1862, %v1859
  %s1865 = scalar_lea.vmem %s0, 134
  %s1866 = smov 48
  %v1867 = vld [vmem:[%s1865] ss:$16 sm:%s1866]
  %vm1868 = vcmask 1045508
  %v1869 = vsel %vm1868, %v1867, %v1864
  %s1870 = scalar_lea.vmem %s0, 134
  %s1871 = smov 192
  %v1872 = vld [vmem:[%s1870] ss:$16 sm:%s1871]
  %vm1873 = vcmask 1047558
  %v1874 = vsel %vm1873, %v1872, %v1869
  %1875 = vrot.lane.b32.xlu0 %v1874, 24
  %v1876 = vpop.permute.xlu0 %1875
  %vm1877 = vcmask 228544
  %s1878 = scalar_lea.vmem %s1, 8
  %1879 = vst.msk [vmem:[%s1878] sm:$0xff] %vm1877, %v1876
  %s1880 = scalar_lea.vmem %s0, 646
  %s1881 = smov 3
  %v1882 = vld [vmem:[%s1880] ss:$16 sm:%s1881]
  %s1883 = scalar_lea.vmem %s0, 646
  %s1884 = smov 12
  %v1885 = vld [vmem:[%s1883] ss:$16 sm:%s1884]
  %vm1886 = vcmask 1043458
  %v1887 = vsel %vm1886, %v1885, %v1882
  %s1888 = scalar_lea.vmem %s0, 646
  %s1889 = smov 48
  %v1890 = vld [vmem:[%s1888] ss:$16 sm:%s1889]
  %vm1891 = vcmask 1045508
  %v1892 = vsel %vm1891, %v1890, %v1887
  %s1893 = scalar_lea.vmem %s0, 646
  %s1894 = smov 192
  %v1895 = vld [vmem:[%s1893] ss:$16 sm:%s1894]
  %vm1896 = vcmask 1047558
  %v1897 = vsel %vm1896, %v1895, %v1892
  %1898 = vrot.lane.b32.xlu0 %v1897, 24
  %v1899 = vpop.permute.xlu0 %1898
  %vm1900 = vcmask 228544
  %s1901 = scalar_lea.vmem %s1, 40
  %1902 = vst.msk [vmem:[%s1901] sm:$0xff] %vm1900, %v1899
  %s1903 = scalar_lea.vmem %s0, 262
  %s1904 = smov 3
  %v1905 = vld [vmem:[%s1903] ss:$16 sm:%s1904]
  %s1906 = scalar_lea.vmem %s0, 262
  %s1907 = smov 12
  %v1908 = vld [vmem:[%s1906] ss:$16 sm:%s1907]
  %vm1909 = vcmask 1043458
  %v1910 = vsel %vm1909, %v1908, %v1905
  %s1911 = scalar_lea.vmem %s0, 262
  %s1912 = smov 48
  %v1913 = vld [vmem:[%s1911] ss:$16 sm:%s1912]
  %vm1914 = vcmask 1045508
  %v1915 = vsel %vm1914, %v1913, %v1910
  %s1916 = scalar_lea.vmem %s0, 262
  %s1917 = smov 192
  %v1918 = vld [vmem:[%s1916] ss:$16 sm:%s1917]
  %vm1919 = vcmask 1047558
  %v1920 = vsel %vm1919, %v1918, %v1915
  %1921 = vrot.lane.b32.xlu0 %v1920, 24
  %v1922 = vpop.permute.xlu0 %1921
  %vm1923 = vcmask 228544
  %s1924 = scalar_lea.vmem %s1, 16
  %1925 = vst.msk [vmem:[%s1924] sm:$0xff] %vm1923, %v1922
  %s1926 = scalar_lea.vmem %s0, 774
  %s1927 = smov 3
  %v1928 = vld [vmem:[%s1926] ss:$16 sm:%s1927]
  %s1929 = scalar_lea.vmem %s0, 774
  %s1930 = smov 12
  %v1931 = vld [vmem:[%s1929] ss:$16 sm:%s1930]
  %vm1932 = vcmask 1043458
  %v1933 = vsel %vm1932, %v1931, %v1928
  %s1934 = scalar_lea.vmem %s0, 774
  %s1935 = smov 48
  %v1936 = vld [vmem:[%s1934] ss:$16 sm:%s1935]
  %vm1937 = vcmask 1045508
  %v1938 = vsel %vm1937, %v1936, %v1933
  %s1939 = scalar_lea.vmem %s0, 774
  %s1940 = smov 192
  %v1941 = vld [vmem:[%s1939] ss:$16 sm:%s1940]
  %vm1942 = vcmask 1047558
  %v1943 = vsel %vm1942, %v1941, %v1938
  %1944 = vrot.lane.b32.xlu0 %v1943, 24
  %v1945 = vpop.permute.xlu0 %1944
  %vm1946 = vcmask 228544
  %s1947 = scalar_lea.vmem %s1, 48
  %1948 = vst.msk [vmem:[%s1947] sm:$0xff] %vm1946, %v1945
  %s1949 = scalar_lea.vmem %s0, 390
  %s1950 = smov 3
  %v1951 = vld [vmem:[%s1949] ss:$16 sm:%s1950]
  %s1952 = scalar_lea.vmem %s0, 390
  %s1953 = smov 12
  %v1954 = vld [vmem:[%s1952] ss:$16 sm:%s1953]
  %vm1955 = vcmask 1043458
  %v1956 = vsel %vm1955, %v1954, %v1951
  %s1957 = scalar_lea.vmem %s0, 390
  %s1958 = smov 48
  %v1959 = vld [vmem:[%s1957] ss:$16 sm:%s1958]
  %vm1960 = vcmask 1045508
  %v1961 = vsel %vm1960, %v1959, %v1956
  %s1962 = scalar_lea.vmem %s0, 390
  %s1963 = smov 192
  %v1964 = vld [vmem:[%s1962] ss:$16 sm:%s1963]
  %vm1965 = vcmask 1047558
  %v1966 = vsel %vm1965, %v1964, %v1961
  %1967 = vrot.lane.b32.xlu0 %v1966, 24
  %v1968 = vpop.permute.xlu0 %1967
  %vm1969 = vcmask 228544
  %s1970 = scalar_lea.vmem %s1, 24
  %1971 = vst.msk [vmem:[%s1970] sm:$0xff] %vm1969, %v1968
  %s1972 = scalar_lea.vmem %s0, 902
  %s1973 = smov 3
  %v1974 = vld [vmem:[%s1972] ss:$16 sm:%s1973]
  %s1975 = scalar_lea.vmem %s0, 902
  %s1976 = smov 12
  %v1977 = vld [vmem:[%s1975] ss:$16 sm:%s1976]
  %vm1978 = vcmask 1043458
  %v1979 = vsel %vm1978, %v1977, %v1974
  %s1980 = scalar_lea.vmem %s0, 902
  %s1981 = smov 48
  %v1982 = vld [vmem:[%s1980] ss:$16 sm:%s1981]
  %vm1983 = vcmask 1045508
  %v1984 = vsel %vm1983, %v1982, %v1979
  %s1985 = scalar_lea.vmem %s0, 902
  %s1986 = smov 192
  %v1987 = vld [vmem:[%s1985] ss:$16 sm:%s1986]
  %vm1988 = vcmask 1047558
  %v1989 = vsel %vm1988, %v1987, %v1984
  %1990 = vrot.lane.b32.xlu0 %v1989, 24
  %v1991 = vpop.permute.xlu0 %1990
  %vm1992 = vcmask 228544
  %s1993 = scalar_lea.vmem %s1, 56
  %1994 = vst.msk [vmem:[%s1993] sm:$0xff] %vm1992, %v1991
  %s1995 = scalar_lea.vmem %s0, 5
  %s1996 = smov 3
  %v1997 = vld [vmem:[%s1995] ss:$16 sm:%s1996]
  %s1998 = scalar_lea.vmem %s0, 5
  %s1999 = smov 12
  %v2000 = vld [vmem:[%s1998] ss:$16 sm:%s1999]
  %vm2001 = vcmask 1043458
  %v2002 = vsel %vm2001, %v2000, %v1997
  %s2003 = scalar_lea.vmem %s0, 5
  %s2004 = smov 48
  %v2005 = vld [vmem:[%s2003] ss:$16 sm:%s2004]
  %vm2006 = vcmask 1045508
  %v2007 = vsel %vm2006, %v2005, %v2002
  %s2008 = scalar_lea.vmem %s0, 5
  %s2009 = smov 192
  %v2010 = vld [vmem:[%s2008] ss:$16 sm:%s2009]
  %vm2011 = vcmask 1047558
  %v2012 = vsel %vm2011, %v2010, %v2007
  %2013 = vrot.lane.b32.xlu0 %v2012, 20
  %v2014 = vpop.permute.xlu0 %2013
  %vm2015 = vcmask 195744
  %2016 = vst.msk [vmem:[%s1] sm:$0xff] %vm2015, %v2014
  %s2017 = scalar_lea.vmem %s0, 517
  %s2018 = smov 3
  %v2019 = vld [vmem:[%s2017] ss:$16 sm:%s2018]
  %s2020 = scalar_lea.vmem %s0, 517
  %s2021 = smov 12
  %v2022 = vld [vmem:[%s2020] ss:$16 sm:%s2021]
  %vm2023 = vcmask 1043458
  %v2024 = vsel %vm2023, %v2022, %v2019
  %s2025 = scalar_lea.vmem %s0, 517
  %s2026 = smov 48
  %v2027 = vld [vmem:[%s2025] ss:$16 sm:%s2026]
  %vm2028 = vcmask 1045508
  %v2029 = vsel %vm2028, %v2027, %v2024
  %s2030 = scalar_lea.vmem %s0, 517
  %s2031 = smov 192
  %v2032 = vld [vmem:[%s2030] ss:$16 sm:%s2031]
  %vm2033 = vcmask 1047558
  %v2034 = vsel %vm2033, %v2032, %v2029
  %2035 = vrot.lane.b32.xlu0 %v2034, 20
  %v2036 = vpop.permute.xlu0 %2035
  %vm2037 = vcmask 195744
  %s2038 = scalar_lea.vmem %s1, 32
  %2039 = vst.msk [vmem:[%s2038] sm:$0xff] %vm2037, %v2036
  %s2040 = scalar_lea.vmem %s0, 133
  %s2041 = smov 3
  %v2042 = vld [vmem:[%s2040] ss:$16 sm:%s2041]
  %s2043 = scalar_lea.vmem %s0, 133
  %s2044 = smov 12
  %v2045 = vld [vmem:[%s2043] ss:$16 sm:%s2044]
  %vm2046 = vcmask 1043458
  %v2047 = vsel %vm2046, %v2045, %v2042
  %s2048 = scalar_lea.vmem %s0, 133
  %s2049 = smov 48
  %v2050 = vld [vmem:[%s2048] ss:$16 sm:%s2049]
  %vm2051 = vcmask 1045508
  %v2052 = vsel %vm2051, %v2050, %v2047
  %s2053 = scalar_lea.vmem %s0, 133
  %s2054 = smov 192
  %v2055 = vld [vmem:[%s2053] ss:$16 sm:%s2054]
  %vm2056 = vcmask 1047558
  %v2057 = vsel %vm2056, %v2055, %v2052
  %2058 = vrot.lane.b32.xlu0 %v2057, 20
  %v2059 = vpop.permute.xlu0 %2058
  %vm2060 = vcmask 195744
  %s2061 = scalar_lea.vmem %s1, 8
  %2062 = vst.msk [vmem:[%s2061] sm:$0xff] %vm2060, %v2059
  %s2063 = scalar_lea.vmem %s0, 645
  %s2064 = smov 3
  %v2065 = vld [vmem:[%s2063] ss:$16 sm:%s2064]
  %s2066 = scalar_lea.vmem %s0, 645
  %s2067 = smov 12
  %v2068 = vld [vmem:[%s2066] ss:$16 sm:%s2067]
  %vm2069 = vcmask 1043458
  %v2070 = vsel %vm2069, %v2068, %v2065
  %s2071 = scalar_lea.vmem %s0, 645
  %s2072 = smov 48
  %v2073 = vld [vmem:[%s2071] ss:$16 sm:%s2072]
  %vm2074 = vcmask 1045508
  %v2075 = vsel %vm2074, %v2073, %v2070
  %s2076 = scalar_lea.vmem %s0, 645
  %s2077 = smov 192
  %v2078 = vld [vmem:[%s2076] ss:$16 sm:%s2077]
  %vm2079 = vcmask 1047558
  %v2080 = vsel %vm2079, %v2078, %v2075
  %2081 = vrot.lane.b32.xlu0 %v2080, 20
  %v2082 = vpop.permute.xlu0 %2081
  %vm2083 = vcmask 195744
  %s2084 = scalar_lea.vmem %s1, 40
  %2085 = vst.msk [vmem:[%s2084] sm:$0xff] %vm2083, %v2082
  %s2086 = scalar_lea.vmem %s0, 261
  %s2087 = smov 3
  %v2088 = vld [vmem:[%s2086] ss:$16 sm:%s2087]
  %s2089 = scalar_lea.vmem %s0, 261
  %s2090 = smov 12
  %v2091 = vld [vmem:[%s2089] ss:$16 sm:%s2090]
  %vm2092 = vcmask 1043458
  %v2093 = vsel %vm2092, %v2091, %v2088
  %s2094 = scalar_lea.vmem %s0, 261
  %s2095 = smov 48
  %v2096 = vld [vmem:[%s2094] ss:$16 sm:%s2095]
  %vm2097 = vcmask 1045508
  %v2098 = vsel %vm2097, %v2096, %v2093
  %s2099 = scalar_lea.vmem %s0, 261
  %s2100 = smov 192
  %v2101 = vld [vmem:[%s2099] ss:$16 sm:%s2100]
  %vm2102 = vcmask 1047558
  %v2103 = vsel %vm2102, %v2101, %v2098
  %2104 = vrot.lane.b32.xlu0 %v2103, 20
  %v2105 = vpop.permute.xlu0 %2104
  %vm2106 = vcmask 195744
  %s2107 = scalar_lea.vmem %s1, 16
  %2108 = vst.msk [vmem:[%s2107] sm:$0xff] %vm2106, %v2105
  %s2109 = scalar_lea.vmem %s0, 773
  %s2110 = smov 3
  %v2111 = vld [vmem:[%s2109] ss:$16 sm:%s2110]
  %s2112 = scalar_lea.vmem %s0, 773
  %s2113 = smov 12
  %v2114 = vld [vmem:[%s2112] ss:$16 sm:%s2113]
  %vm2115 = vcmask 1043458
  %v2116 = vsel %vm2115, %v2114, %v2111
  %s2117 = scalar_lea.vmem %s0, 773
  %s2118 = smov 48
  %v2119 = vld [vmem:[%s2117] ss:$16 sm:%s2118]
  %vm2120 = vcmask 1045508
  %v2121 = vsel %vm2120, %v2119, %v2116
  %s2122 = scalar_lea.vmem %s0, 773
  %s2123 = smov 192
  %v2124 = vld [vmem:[%s2122] ss:$16 sm:%s2123]
  %vm2125 = vcmask 1047558
  %v2126 = vsel %vm2125, %v2124, %v2121
  %2127 = vrot.lane.b32.xlu0 %v2126, 20
  %v2128 = vpop.permute.xlu0 %2127
  %vm2129 = vcmask 195744
  %s2130 = scalar_lea.vmem %s1, 48
  %2131 = vst.msk [vmem:[%s2130] sm:$0xff] %vm2129, %v2128
  %s2132 = scalar_lea.vmem %s0, 389
  %s2133 = smov 3
  %v2134 = vld [vmem:[%s2132] ss:$16 sm:%s2133]
  %s2135 = scalar_lea.vmem %s0, 389
  %s2136 = smov 12
  %v2137 = vld [vmem:[%s2135] ss:$16 sm:%s2136]
  %vm2138 = vcmask 1043458
  %v2139 = vsel %vm2138, %v2137, %v2134
  %s2140 = scalar_lea.vmem %s0, 389
  %s2141 = smov 48
  %v2142 = vld [vmem:[%s2140] ss:$16 sm:%s2141]
  %vm2143 = vcmask 1045508
  %v2144 = vsel %vm2143, %v2142, %v2139
  %s2145 = scalar_lea.vmem %s0, 389
  %s2146 = smov 192
  %v2147 = vld [vmem:[%s2145] ss:$16 sm:%s2146]
  %vm2148 = vcmask 1047558
  %v2149 = vsel %vm2148, %v2147, %v2144
  %2150 = vrot.lane.b32.xlu0 %v2149, 20
  %v2151 = vpop.permute.xlu0 %2150
  %vm2152 = vcmask 195744
  %s2153 = scalar_lea.vmem %s1, 24
  %2154 = vst.msk [vmem:[%s2153] sm:$0xff] %vm2152, %v2151
  %s2155 = scalar_lea.vmem %s0, 901
  %s2156 = smov 3
  %v2157 = vld [vmem:[%s2155] ss:$16 sm:%s2156]
  %s2158 = scalar_lea.vmem %s0, 901
  %s2159 = smov 12
  %v2160 = vld [vmem:[%s2158] ss:$16 sm:%s2159]
  %vm2161 = vcmask 1043458
  %v2162 = vsel %vm2161, %v2160, %v2157
  %s2163 = scalar_lea.vmem %s0, 901
  %s2164 = smov 48
  %v2165 = vld [vmem:[%s2163] ss:$16 sm:%s2164]
  %vm2166 = vcmask 1045508
  %v2167 = vsel %vm2166, %v2165, %v2162
  %s2168 = scalar_lea.vmem %s0, 901
  %s2169 = smov 192
  %v2170 = vld [vmem:[%s2168] ss:$16 sm:%s2169]
  %vm2171 = vcmask 1047558
  %v2172 = vsel %vm2171, %v2170, %v2167
  %2173 = vrot.lane.b32.xlu0 %v2172, 20
  %v2174 = vpop.permute.xlu0 %2173
  %vm2175 = vcmask 195744
  %s2176 = scalar_lea.vmem %s1, 56
  %2177 = vst.msk [vmem:[%s2176] sm:$0xff] %vm2175, %v2174
  %s2178 = scalar_lea.vmem %s0, 4
  %s2179 = smov 3
  %v2180 = vld [vmem:[%s2178] ss:$16 sm:%s2179]
  %s2181 = scalar_lea.vmem %s0, 4
  %s2182 = smov 12
  %v2183 = vld [vmem:[%s2181] ss:$16 sm:%s2182]
  %vm2184 = vcmask 1043458
  %v2185 = vsel %vm2184, %v2183, %v2180
  %s2186 = scalar_lea.vmem %s0, 4
  %s2187 = smov 48
  %v2188 = vld [vmem:[%s2186] ss:$16 sm:%s2187]
  %vm2189 = vcmask 1045508
  %v2190 = vsel %vm2189, %v2188, %v2185
  %s2191 = scalar_lea.vmem %s0, 4
  %s2192 = smov 192
  %v2193 = vld [vmem:[%s2191] ss:$16 sm:%s2192]
  %vm2194 = vcmask 1047558
  %v2195 = vsel %vm2194, %v2193, %v2190
  %2196 = vrot.lane.b32.xlu0 %v2195, 16
  %v2197 = vpop.permute.xlu0 %2196
  %vm2198 = vcmask 162944
  %2199 = vst.msk [vmem:[%s1] sm:$0xff] %vm2198, %v2197
  %s2200 = scalar_lea.vmem %s0, 516
  %s2201 = smov 3
  %v2202 = vld [vmem:[%s2200] ss:$16 sm:%s2201]
  %s2203 = scalar_lea.vmem %s0, 516
  %s2204 = smov 12
  %v2205 = vld [vmem:[%s2203] ss:$16 sm:%s2204]
  %vm2206 = vcmask 1043458
  %v2207 = vsel %vm2206, %v2205, %v2202
  %s2208 = scalar_lea.vmem %s0, 516
  %s2209 = smov 48
  %v2210 = vld [vmem:[%s2208] ss:$16 sm:%s2209]
  %vm2211 = vcmask 1045508
  %v2212 = vsel %vm2211, %v2210, %v2207
  %s2213 = scalar_lea.vmem %s0, 516
  %s2214 = smov 192
  %v2215 = vld [vmem:[%s2213] ss:$16 sm:%s2214]
  %vm2216 = vcmask 1047558
  %v2217 = vsel %vm2216, %v2215, %v2212
  %2218 = vrot.lane.b32.xlu0 %v2217, 16
  %v2219 = vpop.permute.xlu0 %2218
  %vm2220 = vcmask 162944
  %s2221 = scalar_lea.vmem %s1, 32
  %2222 = vst.msk [vmem:[%s2221] sm:$0xff] %vm2220, %v2219
  %s2223 = scalar_lea.vmem %s0, 132
  %s2224 = smov 3
  %v2225 = vld [vmem:[%s2223] ss:$16 sm:%s2224]
  %s2226 = scalar_lea.vmem %s0, 132
  %s2227 = smov 12
  %v2228 = vld [vmem:[%s2226] ss:$16 sm:%s2227]
  %vm2229 = vcmask 1043458
  %v2230 = vsel %vm2229, %v2228, %v2225
  %s2231 = scalar_lea.vmem %s0, 132
  %s2232 = smov 48
  %v2233 = vld [vmem:[%s2231] ss:$16 sm:%s2232]
  %vm2234 = vcmask 1045508
  %v2235 = vsel %vm2234, %v2233, %v2230
  %s2236 = scalar_lea.vmem %s0, 132
  %s2237 = smov 192
  %v2238 = vld [vmem:[%s2236] ss:$16 sm:%s2237]
  %vm2239 = vcmask 1047558
  %v2240 = vsel %vm2239, %v2238, %v2235
  %2241 = vrot.lane.b32.xlu0 %v2240, 16
  %v2242 = vpop.permute.xlu0 %2241
  %vm2243 = vcmask 162944
  %s2244 = scalar_lea.vmem %s1, 8
  %2245 = vst.msk [vmem:[%s2244] sm:$0xff] %vm2243, %v2242
  %s2246 = scalar_lea.vmem %s0, 644
  %s2247 = smov 3
  %v2248 = vld [vmem:[%s2246] ss:$16 sm:%s2247]
  %s2249 = scalar_lea.vmem %s0, 644
  %s2250 = smov 12
  %v2251 = vld [vmem:[%s2249] ss:$16 sm:%s2250]
  %vm2252 = vcmask 1043458
  %v2253 = vsel %vm2252, %v2251, %v2248
  %s2254 = scalar_lea.vmem %s0, 644
  %s2255 = smov 48
  %v2256 = vld [vmem:[%s2254] ss:$16 sm:%s2255]
  %vm2257 = vcmask 1045508
  %v2258 = vsel %vm2257, %v2256, %v2253
  %s2259 = scalar_lea.vmem %s0, 644
  %s2260 = smov 192
  %v2261 = vld [vmem:[%s2259] ss:$16 sm:%s2260]
  %vm2262 = vcmask 1047558
  %v2263 = vsel %vm2262, %v2261, %v2258
  %2264 = vrot.lane.b32.xlu0 %v2263, 16
  %v2265 = vpop.permute.xlu0 %2264
  %vm2266 = vcmask 162944
  %s2267 = scalar_lea.vmem %s1, 40
  %2268 = vst.msk [vmem:[%s2267] sm:$0xff] %vm2266, %v2265
  %s2269 = scalar_lea.vmem %s0, 260
  %s2270 = smov 3
  %v2271 = vld [vmem:[%s2269] ss:$16 sm:%s2270]
  %s2272 = scalar_lea.vmem %s0, 260
  %s2273 = smov 12
  %v2274 = vld [vmem:[%s2272] ss:$16 sm:%s2273]
  %vm2275 = vcmask 1043458
  %v2276 = vsel %vm2275, %v2274, %v2271
  %s2277 = scalar_lea.vmem %s0, 260
  %s2278 = smov 48
  %v2279 = vld [vmem:[%s2277] ss:$16 sm:%s2278]
  %vm2280 = vcmask 1045508
  %v2281 = vsel %vm2280, %v2279, %v2276
  %s2282 = scalar_lea.vmem %s0, 260
  %s2283 = smov 192
  %v2284 = vld [vmem:[%s2282] ss:$16 sm:%s2283]
  %vm2285 = vcmask 1047558
  %v2286 = vsel %vm2285, %v2284, %v2281
  %2287 = vrot.lane.b32.xlu0 %v2286, 16
  %v2288 = vpop.permute.xlu0 %2287
  %vm2289 = vcmask 162944
  %s2290 = scalar_lea.vmem %s1, 16
  %2291 = vst.msk [vmem:[%s2290] sm:$0xff] %vm2289, %v2288
  %s2292 = scalar_lea.vmem %s0, 772
  %s2293 = smov 3
  %v2294 = vld [vmem:[%s2292] ss:$16 sm:%s2293]
  %s2295 = scalar_lea.vmem %s0, 772
  %s2296 = smov 12
  %v2297 = vld [vmem:[%s2295] ss:$16 sm:%s2296]
  %vm2298 = vcmask 1043458
  %v2299 = vsel %vm2298, %v2297, %v2294
  %s2300 = scalar_lea.vmem %s0, 772
  %s2301 = smov 48
  %v2302 = vld [vmem:[%s2300] ss:$16 sm:%s2301]
  %vm2303 = vcmask 1045508
  %v2304 = vsel %vm2303, %v2302, %v2299
  %s2305 = scalar_lea.vmem %s0, 772
  %s2306 = smov 192
  %v2307 = vld [vmem:[%s2305] ss:$16 sm:%s2306]
  %vm2308 = vcmask 1047558
  %v2309 = vsel %vm2308, %v2307, %v2304
  %2310 = vrot.lane.b32.xlu0 %v2309, 16
  %v2311 = vpop.permute.xlu0 %2310
  %vm2312 = vcmask 162944
  %s2313 = scalar_lea.vmem %s1, 48
  %2314 = vst.msk [vmem:[%s2313] sm:$0xff] %vm2312, %v2311
  %s2315 = scalar_lea.vmem %s0, 388
  %s2316 = smov 3
  %v2317 = vld [vmem:[%s2315] ss:$16 sm:%s2316]
  %s2318 = scalar_lea.vmem %s0, 388
  %s2319 = smov 12
  %v2320 = vld [vmem:[%s2318] ss:$16 sm:%s2319]
  %vm2321 = vcmask 1043458
  %v2322 = vsel %vm2321, %v2320, %v2317
  %s2323 = scalar_lea.vmem %s0, 388
  %s2324 = smov 48
  %v2325 = vld [vmem:[%s2323] ss:$16 sm:%s2324]
  %vm2326 = vcmask 1045508
  %v2327 = vsel %vm2326, %v2325, %v2322
  %s2328 = scalar_lea.vmem %s0, 388
  %s2329 = smov 192
  %v2330 = vld [vmem:[%s2328] ss:$16 sm:%s2329]
  %vm2331 = vcmask 1047558
  %v2332 = vsel %vm2331, %v2330, %v2327
  %2333 = vrot.lane.b32.xlu0 %v2332, 16
  %v2334 = vpop.permute.xlu0 %2333
  %vm2335 = vcmask 162944
  %s2336 = scalar_lea.vmem %s1, 24
  %2337 = vst.msk [vmem:[%s2336] sm:$0xff] %vm2335, %v2334
  %s2338 = scalar_lea.vmem %s0, 900
  %s2339 = smov 3
  %v2340 = vld [vmem:[%s2338] ss:$16 sm:%s2339]
  %s2341 = scalar_lea.vmem %s0, 900
  %s2342 = smov 12
  %v2343 = vld [vmem:[%s2341] ss:$16 sm:%s2342]
  %vm2344 = vcmask 1043458
  %v2345 = vsel %vm2344, %v2343, %v2340
  %s2346 = scalar_lea.vmem %s0, 900
  %s2347 = smov 48
  %v2348 = vld [vmem:[%s2346] ss:$16 sm:%s2347]
  %vm2349 = vcmask 1045508
  %v2350 = vsel %vm2349, %v2348, %v2345
  %s2351 = scalar_lea.vmem %s0, 900
  %s2352 = smov 192
  %v2353 = vld [vmem:[%s2351] ss:$16 sm:%s2352]
  %vm2354 = vcmask 1047558
  %v2355 = vsel %vm2354, %v2353, %v2350
  %2356 = vrot.lane.b32.xlu0 %v2355, 16
  %v2357 = vpop.permute.xlu0 %2356
  %vm2358 = vcmask 162944
  %s2359 = scalar_lea.vmem %s1, 56
  %2360 = vst.msk [vmem:[%s2359] sm:$0xff] %vm2358, %v2357
  %s2361 = scalar_lea.vmem %s0, 3
  %s2362 = smov 3
  %v2363 = vld [vmem:[%s2361] ss:$16 sm:%s2362]
  %s2364 = scalar_lea.vmem %s0, 3
  %s2365 = smov 12
  %v2366 = vld [vmem:[%s2364] ss:$16 sm:%s2365]
  %vm2367 = vcmask 1043458
  %v2368 = vsel %vm2367, %v2366, %v2363
  %s2369 = scalar_lea.vmem %s0, 3
  %s2370 = smov 48
  %v2371 = vld [vmem:[%s2369] ss:$16 sm:%s2370]
  %vm2372 = vcmask 1045508
  %v2373 = vsel %vm2372, %v2371, %v2368
  %s2374 = scalar_lea.vmem %s0, 3
  %s2375 = smov 192
  %v2376 = vld [vmem:[%s2374] ss:$16 sm:%s2375]
  %vm2377 = vcmask 1047558
  %v2378 = vsel %vm2377, %v2376, %v2373
  %2379 = vrot.lane.b32.xlu0 %v2378, 12
  %v2380 = vpop.permute.xlu0 %2379
  %vm2381 = vcmask 130144
  %2382 = vst.msk [vmem:[%s1] sm:$0xff] %vm2381, %v2380
  %s2383 = scalar_lea.vmem %s0, 515
  %s2384 = smov 3
  %v2385 = vld [vmem:[%s2383] ss:$16 sm:%s2384]
  %s2386 = scalar_lea.vmem %s0, 515
  %s2387 = smov 12
  %v2388 = vld [vmem:[%s2386] ss:$16 sm:%s2387]
  %vm2389 = vcmask 1043458
  %v2390 = vsel %vm2389, %v2388, %v2385
  %s2391 = scalar_lea.vmem %s0, 515
  %s2392 = smov 48
  %v2393 = vld [vmem:[%s2391] ss:$16 sm:%s2392]
  %vm2394 = vcmask 1045508
  %v2395 = vsel %vm2394, %v2393, %v2390
  %s2396 = scalar_lea.vmem %s0, 515
  %s2397 = smov 192
  %v2398 = vld [vmem:[%s2396] ss:$16 sm:%s2397]
  %vm2399 = vcmask 1047558
  %v2400 = vsel %vm2399, %v2398, %v2395
  %2401 = vrot.lane.b32.xlu0 %v2400, 12
  %v2402 = vpop.permute.xlu0 %2401
  %vm2403 = vcmask 130144
  %s2404 = scalar_lea.vmem %s1, 32
  %2405 = vst.msk [vmem:[%s2404] sm:$0xff] %vm2403, %v2402
  %s2406 = scalar_lea.vmem %s0, 131
  %s2407 = smov 3
  %v2408 = vld [vmem:[%s2406] ss:$16 sm:%s2407]
  %s2409 = scalar_lea.vmem %s0, 131
  %s2410 = smov 12
  %v2411 = vld [vmem:[%s2409] ss:$16 sm:%s2410]
  %vm2412 = vcmask 1043458
  %v2413 = vsel %vm2412, %v2411, %v2408
  %s2414 = scalar_lea.vmem %s0, 131
  %s2415 = smov 48
  %v2416 = vld [vmem:[%s2414] ss:$16 sm:%s2415]
  %vm2417 = vcmask 1045508
  %v2418 = vsel %vm2417, %v2416, %v2413
  %s2419 = scalar_lea.vmem %s0, 131
  %s2420 = smov 192
  %v2421 = vld [vmem:[%s2419] ss:$16 sm:%s2420]
  %vm2422 = vcmask 1047558
  %v2423 = vsel %vm2422, %v2421, %v2418
  %2424 = vrot.lane.b32.xlu0 %v2423, 12
  %v2425 = vpop.permute.xlu0 %2424
  %vm2426 = vcmask 130144
  %s2427 = scalar_lea.vmem %s1, 8
  %2428 = vst.msk [vmem:[%s2427] sm:$0xff] %vm2426, %v2425
  %s2429 = scalar_lea.vmem %s0, 643
  %s2430 = smov 3
  %v2431 = vld [vmem:[%s2429] ss:$16 sm:%s2430]
  %s2432 = scalar_lea.vmem %s0, 643
  %s2433 = smov 12
  %v2434 = vld [vmem:[%s2432] ss:$16 sm:%s2433]
  %vm2435 = vcmask 1043458
  %v2436 = vsel %vm2435, %v2434, %v2431
  %s2437 = scalar_lea.vmem %s0, 643
  %s2438 = smov 48
  %v2439 = vld [vmem:[%s2437] ss:$16 sm:%s2438]
  %vm2440 = vcmask 1045508
  %v2441 = vsel %vm2440, %v2439, %v2436
  %s2442 = scalar_lea.vmem %s0, 643
  %s2443 = smov 192
  %v2444 = vld [vmem:[%s2442] ss:$16 sm:%s2443]
  %vm2445 = vcmask 1047558
  %v2446 = vsel %vm2445, %v2444, %v2441
  %2447 = vrot.lane.b32.xlu0 %v2446, 12
  %v2448 = vpop.permute.xlu0 %2447
  %vm2449 = vcmask 130144
  %s2450 = scalar_lea.vmem %s1, 40
  %2451 = vst.msk [vmem:[%s2450] sm:$0xff] %vm2449, %v2448
  %s2452 = scalar_lea.vmem %s0, 259
  %s2453 = smov 3
  %v2454 = vld [vmem:[%s2452] ss:$16 sm:%s2453]
  %s2455 = scalar_lea.vmem %s0, 259
  %s2456 = smov 12
  %v2457 = vld [vmem:[%s2455] ss:$16 sm:%s2456]
  %vm2458 = vcmask 1043458
  %v2459 = vsel %vm2458, %v2457, %v2454
  %s2460 = scalar_lea.vmem %s0, 259
  %s2461 = smov 48
  %v2462 = vld [vmem:[%s2460] ss:$16 sm:%s2461]
  %vm2463 = vcmask 1045508
  %v2464 = vsel %vm2463, %v2462, %v2459
  %s2465 = scalar_lea.vmem %s0, 259
  %s2466 = smov 192
  %v2467 = vld [vmem:[%s2465] ss:$16 sm:%s2466]
  %vm2468 = vcmask 1047558
  %v2469 = vsel %vm2468, %v2467, %v2464
  %2470 = vrot.lane.b32.xlu0 %v2469, 12
  %v2471 = vpop.permute.xlu0 %2470
  %vm2472 = vcmask 130144
  %s2473 = scalar_lea.vmem %s1, 16
  %2474 = vst.msk [vmem:[%s2473] sm:$0xff] %vm2472, %v2471
  %s2475 = scalar_lea.vmem %s0, 771
  %s2476 = smov 3
  %v2477 = vld [vmem:[%s2475] ss:$16 sm:%s2476]
  %s2478 = scalar_lea.vmem %s0, 771
  %s2479 = smov 12
  %v2480 = vld [vmem:[%s2478] ss:$16 sm:%s2479]
  %vm2481 = vcmask 1043458
  %v2482 = vsel %vm2481, %v2480, %v2477
  %s2483 = scalar_lea.vmem %s0, 771
  %s2484 = smov 48
  %v2485 = vld [vmem:[%s2483] ss:$16 sm:%s2484]
  %vm2486 = vcmask 1045508
  %v2487 = vsel %vm2486, %v2485, %v2482
  %s2488 = scalar_lea.vmem %s0, 771
  %s2489 = smov 192
  %v2490 = vld [vmem:[%s2488] ss:$16 sm:%s2489]
  %vm2491 = vcmask 1047558
  %v2492 = vsel %vm2491, %v2490, %v2487
  %2493 = vrot.lane.b32.xlu0 %v2492, 12
  %v2494 = vpop.permute.xlu0 %2493
  %vm2495 = vcmask 130144
  %s2496 = scalar_lea.vmem %s1, 48
  %2497 = vst.msk [vmem:[%s2496] sm:$0xff] %vm2495, %v2494
  %s2498 = scalar_lea.vmem %s0, 387
  %s2499 = smov 3
  %v2500 = vld [vmem:[%s2498] ss:$16 sm:%s2499]
  %s2501 = scalar_lea.vmem %s0, 387
  %s2502 = smov 12
  %v2503 = vld [vmem:[%s2501] ss:$16 sm:%s2502]
  %vm2504 = vcmask 1043458
  %v2505 = vsel %vm2504, %v2503, %v2500
  %s2506 = scalar_lea.vmem %s0, 387
  %s2507 = smov 48
  %v2508 = vld [vmem:[%s2506] ss:$16 sm:%s2507]
  %vm2509 = vcmask 1045508
  %v2510 = vsel %vm2509, %v2508, %v2505
  %s2511 = scalar_lea.vmem %s0, 387
  %s2512 = smov 192
  %v2513 = vld [vmem:[%s2511] ss:$16 sm:%s2512]
  %vm2514 = vcmask 1047558
  %v2515 = vsel %vm2514, %v2513, %v2510
  %2516 = vrot.lane.b32.xlu0 %v2515, 12
  %v2517 = vpop.permute.xlu0 %2516
  %vm2518 = vcmask 130144
  %s2519 = scalar_lea.vmem %s1, 24
  %2520 = vst.msk [vmem:[%s2519] sm:$0xff] %vm2518, %v2517
  %s2521 = scalar_lea.vmem %s0, 899
  %s2522 = smov 3
  %v2523 = vld [vmem:[%s2521] ss:$16 sm:%s2522]
  %s2524 = scalar_lea.vmem %s0, 899
  %s2525 = smov 12
  %v2526 = vld [vmem:[%s2524] ss:$16 sm:%s2525]
  %vm2527 = vcmask 1043458
  %v2528 = vsel %vm2527, %v2526, %v2523
  %s2529 = scalar_lea.vmem %s0, 899
  %s2530 = smov 48
  %v2531 = vld [vmem:[%s2529] ss:$16 sm:%s2530]
  %vm2532 = vcmask 1045508
  %v2533 = vsel %vm2532, %v2531, %v2528
  %s2534 = scalar_lea.vmem %s0, 899
  %s2535 = smov 192
  %v2536 = vld [vmem:[%s2534] ss:$16 sm:%s2535]
  %vm2537 = vcmask 1047558
  %v2538 = vsel %vm2537, %v2536, %v2533
  %2539 = vrot.lane.b32.xlu0 %v2538, 12
  %v2540 = vpop.permute.xlu0 %2539
  %vm2541 = vcmask 130144
  %s2542 = scalar_lea.vmem %s1, 56
  %2543 = vst.msk [vmem:[%s2542] sm:$0xff] %vm2541, %v2540
  %s2544 = scalar_lea.vmem %s0, 2
  %s2545 = smov 3
  %v2546 = vld [vmem:[%s2544] ss:$16 sm:%s2545]
  %s2547 = scalar_lea.vmem %s0, 2
  %s2548 = smov 12
  %v2549 = vld [vmem:[%s2547] ss:$16 sm:%s2548]
  %vm2550 = vcmask 1043458
  %v2551 = vsel %vm2550, %v2549, %v2546
  %s2552 = scalar_lea.vmem %s0, 2
  %s2553 = smov 48
  %v2554 = vld [vmem:[%s2552] ss:$16 sm:%s2553]
  %vm2555 = vcmask 1045508
  %v2556 = vsel %vm2555, %v2554, %v2551
  %s2557 = scalar_lea.vmem %s0, 2
  %s2558 = smov 192
  %v2559 = vld [vmem:[%s2557] ss:$16 sm:%s2558]
  %vm2560 = vcmask 1047558
  %v2561 = vsel %vm2560, %v2559, %v2556
  %2562 = vrot.lane.b32.xlu0 %v2561, 8
  %v2563 = vpop.permute.xlu0 %2562
  %vm2564 = vcmask 97344
  %2565 = vst.msk [vmem:[%s1] sm:$0xff] %vm2564, %v2563
  %s2566 = scalar_lea.vmem %s0, 514
  %s2567 = smov 3
  %v2568 = vld [vmem:[%s2566] ss:$16 sm:%s2567]
  %s2569 = scalar_lea.vmem %s0, 514
  %s2570 = smov 12
  %v2571 = vld [vmem:[%s2569] ss:$16 sm:%s2570]
  %vm2572 = vcmask 1043458
  %v2573 = vsel %vm2572, %v2571, %v2568
  %s2574 = scalar_lea.vmem %s0, 514
  %s2575 = smov 48
  %v2576 = vld [vmem:[%s2574] ss:$16 sm:%s2575]
  %vm2577 = vcmask 1045508
  %v2578 = vsel %vm2577, %v2576, %v2573
  %s2579 = scalar_lea.vmem %s0, 514
  %s2580 = smov 192
  %v2581 = vld [vmem:[%s2579] ss:$16 sm:%s2580]
  %vm2582 = vcmask 1047558
  %v2583 = vsel %vm2582, %v2581, %v2578
  %2584 = vrot.lane.b32.xlu0 %v2583, 8
  %v2585 = vpop.permute.xlu0 %2584
  %vm2586 = vcmask 97344
  %s2587 = scalar_lea.vmem %s1, 32
  %2588 = vst.msk [vmem:[%s2587] sm:$0xff] %vm2586, %v2585
  %s2589 = scalar_lea.vmem %s0, 130
  %s2590 = smov 3
  %v2591 = vld [vmem:[%s2589] ss:$16 sm:%s2590]
  %s2592 = scalar_lea.vmem %s0, 130
  %s2593 = smov 12
  %v2594 = vld [vmem:[%s2592] ss:$16 sm:%s2593]
  %vm2595 = vcmask 1043458
  %v2596 = vsel %vm2595, %v2594, %v2591
  %s2597 = scalar_lea.vmem %s0, 130
  %s2598 = smov 48
  %v2599 = vld [vmem:[%s2597] ss:$16 sm:%s2598]
  %vm2600 = vcmask 1045508
  %v2601 = vsel %vm2600, %v2599, %v2596
  %s2602 = scalar_lea.vmem %s0, 130
  %s2603 = smov 192
  %v2604 = vld [vmem:[%s2602] ss:$16 sm:%s2603]
  %vm2605 = vcmask 1047558
  %v2606 = vsel %vm2605, %v2604, %v2601
  %2607 = vrot.lane.b32.xlu0 %v2606, 8
  %v2608 = vpop.permute.xlu0 %2607
  %vm2609 = vcmask 97344
  %s2610 = scalar_lea.vmem %s1, 8
  %2611 = vst.msk [vmem:[%s2610] sm:$0xff] %vm2609, %v2608
  %s2612 = scalar_lea.vmem %s0, 642
  %s2613 = smov 3
  %v2614 = vld [vmem:[%s2612] ss:$16 sm:%s2613]
  %s2615 = scalar_lea.vmem %s0, 642
  %s2616 = smov 12
  %v2617 = vld [vmem:[%s2615] ss:$16 sm:%s2616]
  %vm2618 = vcmask 1043458
  %v2619 = vsel %vm2618, %v2617, %v2614
  %s2620 = scalar_lea.vmem %s0, 642
  %s2621 = smov 48
  %v2622 = vld [vmem:[%s2620] ss:$16 sm:%s2621]
  %vm2623 = vcmask 1045508
  %v2624 = vsel %vm2623, %v2622, %v2619
  %s2625 = scalar_lea.vmem %s0, 642
  %s2626 = smov 192
  %v2627 = vld [vmem:[%s2625] ss:$16 sm:%s2626]
  %vm2628 = vcmask 1047558
  %v2629 = vsel %vm2628, %v2627, %v2624
  %2630 = vrot.lane.b32.xlu0 %v2629, 8
  %v2631 = vpop.permute.xlu0 %2630
  %vm2632 = vcmask 97344
  %s2633 = scalar_lea.vmem %s1, 40
  %2634 = vst.msk [vmem:[%s2633] sm:$0xff] %vm2632, %v2631
  %s2635 = scalar_lea.vmem %s0, 258
  %s2636 = smov 3
  %v2637 = vld [vmem:[%s2635] ss:$16 sm:%s2636]
  %s2638 = scalar_lea.vmem %s0, 258
  %s2639 = smov 12
  %v2640 = vld [vmem:[%s2638] ss:$16 sm:%s2639]
  %vm2641 = vcmask 1043458
  %v2642 = vsel %vm2641, %v2640, %v2637
  %s2643 = scalar_lea.vmem %s0, 258
  %s2644 = smov 48
  %v2645 = vld [vmem:[%s2643] ss:$16 sm:%s2644]
  %vm2646 = vcmask 1045508
  %v2647 = vsel %vm2646, %v2645, %v2642
  %s2648 = scalar_lea.vmem %s0, 258
  %s2649 = smov 192
  %v2650 = vld [vmem:[%s2648] ss:$16 sm:%s2649]
  %vm2651 = vcmask 1047558
  %v2652 = vsel %vm2651, %v2650, %v2647
  %2653 = vrot.lane.b32.xlu0 %v2652, 8
  %v2654 = vpop.permute.xlu0 %2653
  %vm2655 = vcmask 97344
  %s2656 = scalar_lea.vmem %s1, 16
  %2657 = vst.msk [vmem:[%s2656] sm:$0xff] %vm2655, %v2654
  %s2658 = scalar_lea.vmem %s0, 770
  %s2659 = smov 3
  %v2660 = vld [vmem:[%s2658] ss:$16 sm:%s2659]
  %s2661 = scalar_lea.vmem %s0, 770
  %s2662 = smov 12
  %v2663 = vld [vmem:[%s2661] ss:$16 sm:%s2662]
  %vm2664 = vcmask 1043458
  %v2665 = vsel %vm2664, %v2663, %v2660
  %s2666 = scalar_lea.vmem %s0, 770
  %s2667 = smov 48
  %v2668 = vld [vmem:[%s2666] ss:$16 sm:%s2667]
  %vm2669 = vcmask 1045508
  %v2670 = vsel %vm2669, %v2668, %v2665
  %s2671 = scalar_lea.vmem %s0, 770
  %s2672 = smov 192
  %v2673 = vld [vmem:[%s2671] ss:$16 sm:%s2672]
  %vm2674 = vcmask 1047558
  %v2675 = vsel %vm2674, %v2673, %v2670
  %2676 = vrot.lane.b32.xlu0 %v2675, 8
  %v2677 = vpop.permute.xlu0 %2676
  %vm2678 = vcmask 97344
  %s2679 = scalar_lea.vmem %s1, 48
  %2680 = vst.msk [vmem:[%s2679] sm:$0xff] %vm2678, %v2677
  %s2681 = scalar_lea.vmem %s0, 386
  %s2682 = smov 3
  %v2683 = vld [vmem:[%s2681] ss:$16 sm:%s2682]
  %s2684 = scalar_lea.vmem %s0, 386
  %s2685 = smov 12
  %v2686 = vld [vmem:[%s2684] ss:$16 sm:%s2685]
  %vm2687 = vcmask 1043458
  %v2688 = vsel %vm2687, %v2686, %v2683
  %s2689 = scalar_lea.vmem %s0, 386
  %s2690 = smov 48
  %v2691 = vld [vmem:[%s2689] ss:$16 sm:%s2690]
  %vm2692 = vcmask 1045508
  %v2693 = vsel %vm2692, %v2691, %v2688
  %s2694 = scalar_lea.vmem %s0, 386
  %s2695 = smov 192
  %v2696 = vld [vmem:[%s2694] ss:$16 sm:%s2695]
  %vm2697 = vcmask 1047558
  %v2698 = vsel %vm2697, %v2696, %v2693
  %2699 = vrot.lane.b32.xlu0 %v2698, 8
  %v2700 = vpop.permute.xlu0 %2699
  %vm2701 = vcmask 97344
  %s2702 = scalar_lea.vmem %s1, 24
  %2703 = vst.msk [vmem:[%s2702] sm:$0xff] %vm2701, %v2700
  %s2704 = scalar_lea.vmem %s0, 898
  %s2705 = smov 3
  %v2706 = vld [vmem:[%s2704] ss:$16 sm:%s2705]
  %s2707 = scalar_lea.vmem %s0, 898
  %s2708 = smov 12
  %v2709 = vld [vmem:[%s2707] ss:$16 sm:%s2708]
  %vm2710 = vcmask 1043458
  %v2711 = vsel %vm2710, %v2709, %v2706
  %s2712 = scalar_lea.vmem %s0, 898
  %s2713 = smov 48
  %v2714 = vld [vmem:[%s2712] ss:$16 sm:%s2713]
  %vm2715 = vcmask 1045508
  %v2716 = vsel %vm2715, %v2714, %v2711
  %s2717 = scalar_lea.vmem %s0, 898
  %s2718 = smov 192
  %v2719 = vld [vmem:[%s2717] ss:$16 sm:%s2718]
  %vm2720 = vcmask 1047558
  %v2721 = vsel %vm2720, %v2719, %v2716
  %2722 = vrot.lane.b32.xlu0 %v2721, 8
  %v2723 = vpop.permute.xlu0 %2722
  %vm2724 = vcmask 97344
  %s2725 = scalar_lea.vmem %s1, 56
  %2726 = vst.msk [vmem:[%s2725] sm:$0xff] %vm2724, %v2723
  %s2727 = scalar_lea.vmem %s0, 1
  %s2728 = smov 3
  %v2729 = vld [vmem:[%s2727] ss:$16 sm:%s2728]
  %s2730 = scalar_lea.vmem %s0, 1
  %s2731 = smov 12
  %v2732 = vld [vmem:[%s2730] ss:$16 sm:%s2731]
  %vm2733 = vcmask 1043458
  %v2734 = vsel %vm2733, %v2732, %v2729
  %s2735 = scalar_lea.vmem %s0, 1
  %s2736 = smov 48
  %v2737 = vld [vmem:[%s2735] ss:$16 sm:%s2736]
  %vm2738 = vcmask 1045508
  %v2739 = vsel %vm2738, %v2737, %v2734
  %s2740 = scalar_lea.vmem %s0, 1
  %s2741 = smov 192
  %v2742 = vld [vmem:[%s2740] ss:$16 sm:%s2741]
  %vm2743 = vcmask 1047558
  %v2744 = vsel %vm2743, %v2742, %v2739
  %2745 = vrot.lane.b32.xlu0 %v2744, 4
  %v2746 = vpop.permute.xlu0 %2745
  %vm2747 = vcmask 64544
  %2748 = vst.msk [vmem:[%s1] sm:$0xff] %vm2747, %v2746
  %s2749 = scalar_lea.vmem %s0, 513
  %s2750 = smov 3
  %v2751 = vld [vmem:[%s2749] ss:$16 sm:%s2750]
  %s2752 = scalar_lea.vmem %s0, 513
  %s2753 = smov 12
  %v2754 = vld [vmem:[%s2752] ss:$16 sm:%s2753]
  %vm2755 = vcmask 1043458
  %v2756 = vsel %vm2755, %v2754, %v2751
  %s2757 = scalar_lea.vmem %s0, 513
  %s2758 = smov 48
  %v2759 = vld [vmem:[%s2757] ss:$16 sm:%s2758]
  %vm2760 = vcmask 1045508
  %v2761 = vsel %vm2760, %v2759, %v2756
  %s2762 = scalar_lea.vmem %s0, 513
  %s2763 = smov 192
  %v2764 = vld [vmem:[%s2762] ss:$16 sm:%s2763]
  %vm2765 = vcmask 1047558
  %v2766 = vsel %vm2765, %v2764, %v2761
  %2767 = vrot.lane.b32.xlu0 %v2766, 4
  %v2768 = vpop.permute.xlu0 %2767
  %vm2769 = vcmask 64544
  %s2770 = scalar_lea.vmem %s1, 32
  %2771 = vst.msk [vmem:[%s2770] sm:$0xff] %vm2769, %v2768
  %s2772 = scalar_lea.vmem %s0, 129
  %s2773 = smov 3
  %v2774 = vld [vmem:[%s2772] ss:$16 sm:%s2773]
  %s2775 = scalar_lea.vmem %s0, 129
  %s2776 = smov 12
  %v2777 = vld [vmem:[%s2775] ss:$16 sm:%s2776]
  %vm2778 = vcmask 1043458
  %v2779 = vsel %vm2778, %v2777, %v2774
  %s2780 = scalar_lea.vmem %s0, 129
  %s2781 = smov 48
  %v2782 = vld [vmem:[%s2780] ss:$16 sm:%s2781]
  %vm2783 = vcmask 1045508
  %v2784 = vsel %vm2783, %v2782, %v2779
  %s2785 = scalar_lea.vmem %s0, 129
  %s2786 = smov 192
  %v2787 = vld [vmem:[%s2785] ss:$16 sm:%s2786]
  %vm2788 = vcmask 1047558
  %v2789 = vsel %vm2788, %v2787, %v2784
  %2790 = vrot.lane.b32.xlu0 %v2789, 4
  %v2791 = vpop.permute.xlu0 %2790
  %vm2792 = vcmask 64544
  %s2793 = scalar_lea.vmem %s1, 8
  %2794 = vst.msk [vmem:[%s2793] sm:$0xff] %vm2792, %v2791
  %s2795 = scalar_lea.vmem %s0, 641
  %s2796 = smov 3
  %v2797 = vld [vmem:[%s2795] ss:$16 sm:%s2796]
  %s2798 = scalar_lea.vmem %s0, 641
  %s2799 = smov 12
  %v2800 = vld [vmem:[%s2798] ss:$16 sm:%s2799]
  %vm2801 = vcmask 1043458
  %v2802 = vsel %vm2801, %v2800, %v2797
  %s2803 = scalar_lea.vmem %s0, 641
  %s2804 = smov 48
  %v2805 = vld [vmem:[%s2803] ss:$16 sm:%s2804]
  %vm2806 = vcmask 1045508
  %v2807 = vsel %vm2806, %v2805, %v2802
  %s2808 = scalar_lea.vmem %s0, 641
  %s2809 = smov 192
  %v2810 = vld [vmem:[%s2808] ss:$16 sm:%s2809]
  %vm2811 = vcmask 1047558
  %v2812 = vsel %vm2811, %v2810, %v2807
  %2813 = vrot.lane.b32.xlu0 %v2812, 4
  %v2814 = vpop.permute.xlu0 %2813
  %vm2815 = vcmask 64544
  %s2816 = scalar_lea.vmem %s1, 40
  %2817 = vst.msk [vmem:[%s2816] sm:$0xff] %vm2815, %v2814
  %s2818 = scalar_lea.vmem %s0, 257
  %s2819 = smov 3
  %v2820 = vld [vmem:[%s2818] ss:$16 sm:%s2819]
  %s2821 = scalar_lea.vmem %s0, 257
  %s2822 = smov 12
  %v2823 = vld [vmem:[%s2821] ss:$16 sm:%s2822]
  %vm2824 = vcmask 1043458
  %v2825 = vsel %vm2824, %v2823, %v2820
  %s2826 = scalar_lea.vmem %s0, 257
  %s2827 = smov 48
  %v2828 = vld [vmem:[%s2826] ss:$16 sm:%s2827]
  %vm2829 = vcmask 1045508
  %v2830 = vsel %vm2829, %v2828, %v2825
  %s2831 = scalar_lea.vmem %s0, 257
  %s2832 = smov 192
  %v2833 = vld [vmem:[%s2831] ss:$16 sm:%s2832]
  %vm2834 = vcmask 1047558
  %v2835 = vsel %vm2834, %v2833, %v2830
  %2836 = vrot.lane.b32.xlu0 %v2835, 4
  %v2837 = vpop.permute.xlu0 %2836
  %vm2838 = vcmask 64544
  %s2839 = scalar_lea.vmem %s1, 16
  %2840 = vst.msk [vmem:[%s2839] sm:$0xff] %vm2838, %v2837
  %s2841 = scalar_lea.vmem %s0, 769
  %s2842 = smov 3
  %v2843 = vld [vmem:[%s2841] ss:$16 sm:%s2842]
  %s2844 = scalar_lea.vmem %s0, 769
  %s2845 = smov 12
  %v2846 = vld [vmem:[%s2844] ss:$16 sm:%s2845]
  %vm2847 = vcmask 1043458
  %v2848 = vsel %vm2847, %v2846, %v2843
  %s2849 = scalar_lea.vmem %s0, 769
  %s2850 = smov 48
  %v2851 = vld [vmem:[%s2849] ss:$16 sm:%s2850]
  %vm2852 = vcmask 1045508
  %v2853 = vsel %vm2852, %v2851, %v2848
  %s2854 = scalar_lea.vmem %s0, 769
  %s2855 = smov 192
  %v2856 = vld [vmem:[%s2854] ss:$16 sm:%s2855]
  %vm2857 = vcmask 1047558
  %v2858 = vsel %vm2857, %v2856, %v2853
  %2859 = vrot.lane.b32.xlu0 %v2858, 4
  %v2860 = vpop.permute.xlu0 %2859
  %vm2861 = vcmask 64544
  %s2862 = scalar_lea.vmem %s1, 48
  %2863 = vst.msk [vmem:[%s2862] sm:$0xff] %vm2861, %v2860
  %s2864 = scalar_lea.vmem %s0, 385
  %s2865 = smov 3
  %v2866 = vld [vmem:[%s2864] ss:$16 sm:%s2865]
  %s2867 = scalar_lea.vmem %s0, 385
  %s2868 = smov 12
  %v2869 = vld [vmem:[%s2867] ss:$16 sm:%s2868]
  %vm2870 = vcmask 1043458
  %v2871 = vsel %vm2870, %v2869, %v2866
  %s2872 = scalar_lea.vmem %s0, 385
  %s2873 = smov 48
  %v2874 = vld [vmem:[%s2872] ss:$16 sm:%s2873]
  %vm2875 = vcmask 1045508
  %v2876 = vsel %vm2875, %v2874, %v2871
  %s2877 = scalar_lea.vmem %s0, 385
  %s2878 = smov 192
  %v2879 = vld [vmem:[%s2877] ss:$16 sm:%s2878]
  %vm2880 = vcmask 1047558
  %v2881 = vsel %vm2880, %v2879, %v2876
  %2882 = vrot.lane.b32.xlu0 %v2881, 4
  %v2883 = vpop.permute.xlu0 %2882
  %vm2884 = vcmask 64544
  %s2885 = scalar_lea.vmem %s1, 24
  %2886 = vst.msk [vmem:[%s2885] sm:$0xff] %vm2884, %v2883
  %s2887 = scalar_lea.vmem %s0, 897
  %s2888 = smov 3
  %v2889 = vld [vmem:[%s2887] ss:$16 sm:%s2888]
  %s2890 = scalar_lea.vmem %s0, 897
  %s2891 = smov 12
  %v2892 = vld [vmem:[%s2890] ss:$16 sm:%s2891]
  %vm2893 = vcmask 1043458
  %v2894 = vsel %vm2893, %v2892, %v2889
  %s2895 = scalar_lea.vmem %s0, 897
  %s2896 = smov 48
  %v2897 = vld [vmem:[%s2895] ss:$16 sm:%s2896]
  %vm2898 = vcmask 1045508
  %v2899 = vsel %vm2898, %v2897, %v2894
  %s2900 = scalar_lea.vmem %s0, 897
  %s2901 = smov 192
  %v2902 = vld [vmem:[%s2900] ss:$16 sm:%s2901]
  %vm2903 = vcmask 1047558
  %v2904 = vsel %vm2903, %v2902, %v2899
  %2905 = vrot.lane.b32.xlu0 %v2904, 4
  %v2906 = vpop.permute.xlu0 %2905
  %vm2907 = vcmask 64544
  %s2908 = scalar_lea.vmem %s1, 56
  %2909 = vst.msk [vmem:[%s2908] sm:$0xff] %vm2907, %v2906

// kernel: tile.78
$region0: #{tile.78}
  #allocation0 [shape = 's32[1]{0}', space=sflag, size = 0x4, scoped, tag = 'scoped memory for tile.78']
  %s0 = inlined_call_operand.vmem [shape: f32[4], index: 0, kind: input, shape index: {}]
  %s1 = inlined_call_operand.vmem [shape: f32[32,4], index: 1, kind: output, shape index: {}]
  // Predicated region
  $region2: #{tile.78} parent=0 // pred_check
    _
  $region3: #{tile.78} parent=0 // pred_check_branch
    %3 = sbr.rel (0) target = $region5
  $region4: #{tile.78} parent=0 // pred_region
    _
  $region5: #{tile.78} parent=0 // pred_fallthru
    _
  %v4 = vld [vmem:[%s0] ss:$0 sm:$0xff]
  %5 = vst [vmem:[%s1] sm:$0xff] %v4
  %s6 = scalar_lea.vmem %s1, 8
  %7 = vst [vmem:[%s6] sm:$0xff] %v4
  %s8 = scalar_lea.vmem %s1, 16
  %9 = vst [vmem:[%s8] sm:$0xff] %v4
  %s10 = scalar_lea.vmem %s1, 24
  %11 = vst [vmem:[%s10] sm:$0xff] %v4

// kernel: tile.79
$region0: #{tile.79}
  %s0 = inlined_call_operand.vmem [shape: f32[32,4], index: 0, kind: input, shape index: {}]
  %s1 = inlined_call_operand.vmem [shape: f32[1,128], index: 1, kind: output, shape index: {}]
  $region1: #{tile.79} parent=0
    #allocation0 [shape = 'u8[4096]{0}', space=vmem, size = 0x1000, scoped, tag = 'scoped mem for output reshape']
    %v2 = vld [vmem:[%s0] sm:$0x1]
    %vm3 = vcmask 31744
    %4 = vst.msk [vmem:[#allocation0] sm:$0x1] %vm3, %v2
    %s5 = scalar_lea.vmem %s0, 31
    %v6 = vld [vmem:[%s5] sm:$0x1]
    %7 = vrot.lane.b32.xlu0 %v6, 124
    %v8 = vpop.permute.xlu0 %7
    %vm9 = vcmask 1048544
    %10 = vst.msk [vmem:[#allocation0] sm:$0x1] %vm9, %v8
    %s11 = scalar_lea.vmem %s0, 30
    %v12 = vld [vmem:[%s11] sm:$0x1]
    %13 = vrot.lane.b32.xlu0 %v12, 120
    %v14 = vpop.permute.xlu0 %13
    %vm15 = vcmask 1015744
    %16 = vst.msk [vmem:[#allocation0] sm:$0x1] %vm15, %v14
    %s17 = scalar_lea.vmem %s0, 29
    %v18 = vld [vmem:[%s17] sm:$0x1]
    %19 = vrot.lane.b32.xlu0 %v18, 116
    %v20 = vpop.permute.xlu0 %19
    %vm21 = vcmask 982944
    %22 = vst.msk [vmem:[#allocation0] sm:$0x1] %vm21, %v20
    %s23 = scalar_lea.vmem %s0, 28
    %v24 = vld [vmem:[%s23] sm:$0x1]
    %25 = vrot.lane.b32.xlu0 %v24, 112
    %v26 = vpop.permute.xlu0 %25
    %vm27 = vcmask 950144
    %28 = vst.msk [vmem:[#allocation0] sm:$0x1] %vm27, %v26
    %s29 = scalar_lea.vmem %s0, 27
    %v30 = vld [vmem:[%s29] sm:$0x1]
    %31 = vrot.lane.b32.xlu0 %v30, 108
    %v32 = vpop.permute.xlu0 %31
    %vm33 = vcmask 917344
    %34 = vst.msk [vmem:[#allocation0] sm:$0x1] %vm33, %v32
    %s35 = scalar_lea.vmem %s0, 26
    %v36 = vld [vmem:[%s35] sm:$0x1]
    %37 = vrot.lane.b32.xlu0 %v36, 104
    %v38 = vpop.permute.xlu0 %37
    %vm39 = vcmask 884544
    %40 = vst.msk [vmem:[#allocation0] sm:$0x1] %vm39, %v38
    %s41 = scalar_lea.vmem %s0, 25
    %v42 = vld [vmem:[%s41] sm:$0x1]
    %43 = vrot.lane.b32.xlu0 %v42, 100
    %v44 = vpop.permute.xlu0 %43
    %vm45 = vcmask 851744
    %46 = vst.msk [vmem:[#allocation0] sm:$0x1] %vm45, %v44
    %s47 = scalar_lea.vmem %s0, 24
    %v48 = vld [vmem:[%s47] sm:$0x1]
    %49 = vrot.lane.b32.xlu0 %v48, 96
    %v50 = vpop.permute.xlu0 %49
    %vm51 = vcmask 818944
    %52 = vst.msk [vmem:[#allocation0] sm:$0x1] %vm51, %v50
    %s53 = scalar_lea.vmem %s0, 23
    %v54 = vld [vmem:[%s53] sm:$0x1]
    %55 = vrot.lane.b32.xlu0 %v54, 92
    %v56 = vpop.permute.xlu0 %55
    %vm57 = vcmask 786144
    %58 = vst.msk [vmem:[#allocation0] sm:$0x1] %vm57, %v56
    %s59 = scalar_lea.vmem %s0, 22
    %v60 = vld [vmem:[%s59] sm:$0x1]
    %61 = vrot.lane.b32.xlu0 %v60, 88
    %v62 = vpop.permute.xlu0 %61
    %vm63 = vcmask 753344
    %64 = vst.msk [vmem:[#allocation0] sm:$0x1] %vm63, %v62
    %s65 = scalar_lea.vmem %s0, 21
    %v66 = vld [vmem:[%s65] sm:$0x1]
    %67 = vrot.lane.b32.xlu0 %v66, 84
    %v68 = vpop.permute.xlu0 %67
    %vm69 = vcmask 720544
    %70 = vst.msk [vmem:[#allocation0] sm:$0x1] %vm69, %v68
    %s71 = scalar_lea.vmem %s0, 20
    %v72 = vld [vmem:[%s71] sm:$0x1]
    %73 = vrot.lane.b32.xlu0 %v72, 80
    %v74 = vpop.permute.xlu0 %73
    %vm75 = vcmask 687744
    %76 = vst.msk [vmem:[#allocation0] sm:$0x1] %vm75, %v74
    %s77 = scalar_lea.vmem %s0, 19
    %v78 = vld [vmem:[%s77] sm:$0x1]
    %79 = vrot.lane.b32.xlu0 %v78, 76
    %v80 = vpop.permute.xlu0 %79
    %vm81 = vcmask 654944
    %82 = vst.msk [vmem:[#allocation0] sm:$0x1] %vm81, %v80
    %s83 = scalar_lea.vmem %s0, 18
    %v84 = vld [vmem:[%s83] sm:$0x1]
    %85 = vrot.lane.b32.xlu0 %v84, 72
    %v86 = vpop.permute.xlu0 %85
    %vm87 = vcmask 622144
    %88 = vst.msk [vmem:[#allocation0] sm:$0x1] %vm87, %v86
    %s89 = scalar_lea.vmem %s0, 17
    %v90 = vld [vmem:[%s89] sm:$0x1]
    %91 = vrot.lane.b32.xlu0 %v90, 68
    %v92 = vpop.permute.xlu0 %91
    %vm93 = vcmask 589344
    %94 = vst.msk [vmem:[#allocation0] sm:$0x1] %vm93, %v92
    %s95 = scalar_lea.vmem %s0, 16
    %v96 = vld [vmem:[%s95] sm:$0x1]
    %97 = vrot.lane.b32.xlu0 %v96, 64
    %v98 = vpop.permute.xlu0 %97
    %vm99 = vcmask 556544
    %100 = vst.msk [vmem:[#allocation0] sm:$0x1] %vm99, %v98
    %s101 = scalar_lea.vmem %s0, 15
    %v102 = vld [vmem:[%s101] sm:$0x1]
    %103 = vrot.lane.b32.xlu0 %v102, 60
    %v104 = vpop.permute.xlu0 %103
    %vm105 = vcmask 523744
    %106 = vst.msk [vmem:[#allocation0] sm:$0x1] %vm105, %v104
    %s107 = scalar_lea.vmem %s0, 14
    %v108 = vld [vmem:[%s107] sm:$0x1]
    %109 = vrot.lane.b32.xlu0 %v108, 56
    %v110 = vpop.permute.xlu0 %109
    %vm111 = vcmask 490944
    %112 = vst.msk [vmem:[#allocation0] sm:$0x1] %vm111, %v110
    %s113 = scalar_lea.vmem %s0, 13
    %v114 = vld [vmem:[%s113] sm:$0x1]
    %115 = vrot.lane.b32.xlu0 %v114, 52
    %v116 = vpop.permute.xlu0 %115
    %vm117 = vcmask 458144
    %118 = vst.msk [vmem:[#allocation0] sm:$0x1] %vm117, %v116
    %s119 = scalar_lea.vmem %s0, 12
    %v120 = vld [vmem:[%s119] sm:$0x1]
    %121 = vrot.lane.b32.xlu0 %v120, 48
    %v122 = vpop.permute.xlu0 %121
    %vm123 = vcmask 425344
    %124 = vst.msk [vmem:[#allocation0] sm:$0x1] %vm123, %v122
    %s125 = scalar_lea.vmem %s0, 11
    %v126 = vld [vmem:[%s125] sm:$0x1]
    %127 = vrot.lane.b32.xlu0 %v126, 44
    %v128 = vpop.permute.xlu0 %127
    %vm129 = vcmask 392544
    %130 = vst.msk [vmem:[#allocation0] sm:$0x1] %vm129, %v128
    %s131 = scalar_lea.vmem %s0, 10
    %v132 = vld [vmem:[%s131] sm:$0x1]
    %133 = vrot.lane.b32.xlu0 %v132, 40
    %v134 = vpop.permute.xlu0 %133
    %vm135 = vcmask 359744
    %136 = vst.msk [vmem:[#allocation0] sm:$0x1] %vm135, %v134
    %s137 = scalar_lea.vmem %s0, 9
    %v138 = vld [vmem:[%s137] sm:$0x1]
    %139 = vrot.lane.b32.xlu0 %v138, 36
    %v140 = vpop.permute.xlu0 %139
    %vm141 = vcmask 326944
    %142 = vst.msk [vmem:[#allocation0] sm:$0x1] %vm141, %v140
    %s143 = scalar_lea.vmem %s0, 8
    %v144 = vld [vmem:[%s143] sm:$0x1]
    %145 = vrot.lane.b32.xlu0 %v144, 32
    %v146 = vpop.permute.xlu0 %145
    %vm147 = vcmask 294144
    %148 = vst.msk [vmem:[#allocation0] sm:$0x1] %vm147, %v146
    %s149 = scalar_lea.vmem %s0, 7
    %v150 = vld [vmem:[%s149] sm:$0x1]
    %151 = vrot.lane.b32.xlu0 %v150, 28
    %v152 = vpop.permute.xlu0 %151
    %vm153 = vcmask 261344
    %154 = vst.msk [vmem:[#allocation0] sm:$0x1] %vm153, %v152
    %s155 = scalar_lea.vmem %s0, 6
    %v156 = vld [vmem:[%s155] sm:$0x1]
    %157 = vrot.lane.b32.xlu0 %v156, 24
    %v158 = vpop.permute.xlu0 %157
    %vm159 = vcmask 228544
    %160 = vst.msk [vmem:[#allocation0] sm:$0x1] %vm159, %v158
    %s161 = scalar_lea.vmem %s0, 5
    %v162 = vld [vmem:[%s161] sm:$0x1]
    %163 = vrot.lane.b32.xlu0 %v162, 20
    %v164 = vpop.permute.xlu0 %163
    %vm165 = vcmask 195744
    %166 = vst.msk [vmem:[#allocation0] sm:$0x1] %vm165, %v164
    %s167 = scalar_lea.vmem %s0, 4
    %v168 = vld [vmem:[%s167] sm:$0x1]
    %169 = vrot.lane.b32.xlu0 %v168, 16
    %v170 = vpop.permute.xlu0 %169
    %vm171 = vcmask 162944
    %172 = vst.msk [vmem:[#allocation0] sm:$0x1] %vm171, %v170
    %s173 = scalar_lea.vmem %s0, 3
    %v174 = vld [vmem:[%s173] sm:$0x1]
    %175 = vrot.lane.b32.xlu0 %v174, 12
    %v176 = vpop.permute.xlu0 %175
    %vm177 = vcmask 130144
    %178 = vst.msk [vmem:[#allocation0] sm:$0x1] %vm177, %v176
    %s179 = scalar_lea.vmem %s0, 2
    %v180 = vld [vmem:[%s179] sm:$0x1]
    %181 = vrot.lane.b32.xlu0 %v180, 8
    %v182 = vpop.permute.xlu0 %181
    %vm183 = vcmask 97344
    %184 = vst.msk [vmem:[#allocation0] sm:$0x1] %vm183, %v182
    %s185 = scalar_lea.vmem %s0, 1
    %v186 = vld [vmem:[%s185] sm:$0x1]
    %187 = vrot.lane.b32.xlu0 %v186, 4
    %v188 = vpop.permute.xlu0 %187
    %vm189 = vcmask 64544
    %190 = vst.msk [vmem:[#allocation0] sm:$0x1] %vm189, %v188
    %s192 = sshllo.u32 0, 1
    %v194 = vld [vmem:[#allocation0] sm:%s192]
    %s195 = sshllo.u32 0, 1
    %196 = vst [vmem:[%s1] sm:%s195] %v194

// kernel: up_block_forward.1
$region0: #{up_block_forward.1}
  #allocation0 [shape = 'u32[]', space=smem, size = 0x4, offset = 0x4, fixed_abs, tag = 'smem constant byte address 0x4 - core index']
  #allocation1 [shape = 'u32[144,128]{1,0:T(1,128)}', space=vmem, size = 0x12000, scoped, tag = 'internal scratch']
  #allocation2 [shape = 'f32[18,256]{1,0:T(8,128)}', space=vmem, size = 0x6000, scoped, tag = 'scratch operand']
  %s0 = inlined_call_operand.vmem [shape: f32[1,8,128], index: 0, kind: input, shape index: {}]
  %s1 = inlined_call_operand.vmem [shape: f32[1,16,128], index: 1, kind: input, shape index: {}]
  %s2 = inlined_call_operand.vmem [shape: f32[16,8], index: 2, kind: input, shape index: {}]
  %s3 = inlined_call_operand.vmem [shape: bf16[128,128], index: 3, kind: input, shape index: {}]
  %s4 = inlined_call_operand.vmem [shape: f32[1,128], index: 4, kind: input, shape index: {}]
  %s5 = inlined_call_operand.vmem [shape: f32[1,256], index: 5, kind: input, shape index: {}]
  %s6 = inlined_call_operand.vmem [shape: f32[1,256], index: 6, kind: input, shape index: {}]
  %s7 = inlined_call_operand.vmem [shape: bf16[3,256,128], index: 7, kind: input, shape index: {}]
  %s8 = inlined_call_operand.vmem [shape: f32[1,128], index: 8, kind: input, shape index: {}]
  %s9 = inlined_call_operand.vmem [shape: f32[1,128], index: 9, kind: input, shape index: {}]
  %s10 = inlined_call_operand.vmem [shape: bf16[3,128,128], index: 10, kind: input, shape index: {}]
  %s11 = inlined_call_operand.vmem [shape: f32[1,256], index: 11, kind: input, shape index: {}]
  %s12 = inlined_call_operand.vmem [shape: f32[1,256], index: 12, kind: input, shape index: {}]
  %s13 = inlined_call_operand.vmem [shape: bf16[256,128], index: 13, kind: input, shape index: {}]
  %s14 = inlined_call_operand.vmem [shape: f32[1,128], index: 14, kind: input, shape index: {}]
  %s15 = inlined_call_operand.vmem [shape: f32[1,128], index: 15, kind: input, shape index: {}]
  %s16 = inlined_call_operand.vmem [shape: bf16[3,128,128], index: 16, kind: input, shape index: {}]
  %s17 = inlined_call_operand.vmem [shape: f32[1,128], index: 17, kind: input, shape index: {}]
  %s18 = inlined_call_operand.vmem [shape: f32[1,128], index: 18, kind: input, shape index: {}]
  %s19 = inlined_call_operand.vmem [shape: bf16[3,128,128], index: 19, kind: input, shape index: {}]
  %s20 = inlined_call_operand.vmem [shape: f32[1,16,128], index: 20, kind: output, shape index: {}]
  %s21 = sld [smem:[#allocation0]]
  $region90: #{up_block_forward.1} parent=0
    _
  %s23 = ssub.s32 1, %s21
  %s24 = scalar_select 0, %s23, %s21
  // Predicated region
  $region2: #{up_block_forward.1} parent=0 // pred_check
    _
  $region3: #{up_block_forward.1} parent=0 // pred_check_branch
    %26 = sbr.rel (0) target = $region5
  $region4: #{up_block_forward.1} parent=0 // pred_region
    _
  $region5: #{up_block_forward.1} parent=0 // pred_fallthru
    _
  // Predicated region
  $region6: #{up_block_forward.1} parent=0 // pred_check
    _
  $region7: #{up_block_forward.1} parent=0 // pred_check_branch
    %28 = sbr.rel (0) target = $region9
  $region8: #{up_block_forward.1} parent=0 // pred_region
    _
  $region9: #{up_block_forward.1} parent=0 // pred_fallthru
    _
  // Predicated region
  $region10: #{up_block_forward.1} parent=0 // pred_check
    _
  $region11: #{up_block_forward.1} parent=0 // pred_check_branch
    %30 = sbr.rel (0) target = $region13
  $region12: #{up_block_forward.1} parent=0 // pred_region
    _
  $region13: #{up_block_forward.1} parent=0 // pred_fallthru
    _
  // Predicated region
  $region14: #{up_block_forward.1} parent=0 // pred_check
    _
  $region15: #{up_block_forward.1} parent=0 // pred_check_branch
    %32 = sbr.rel (0) target = $region17
  $region16: #{up_block_forward.1} parent=0 // pred_region
    _
  $region17: #{up_block_forward.1} parent=0 // pred_fallthru
    _
  // Predicated region
  $region18: #{up_block_forward.1} parent=0 // pred_check
    _
  $region19: #{up_block_forward.1} parent=0 // pred_check_branch
    %34 = sbr.rel (0) target = $region21
  $region20: #{up_block_forward.1} parent=0 // pred_region
    _
  $region21: #{up_block_forward.1} parent=0 // pred_fallthru
    _
  // Predicated region
  $region22: #{up_block_forward.1} parent=0 // pred_check
    _
  $region23: #{up_block_forward.1} parent=0 // pred_check_branch
    %36 = sbr.rel (0) target = $region25
  $region24: #{up_block_forward.1} parent=0 // pred_region
    _
  $region25: #{up_block_forward.1} parent=0 // pred_fallthru
    _
  // Predicated region
  $region26: #{up_block_forward.1} parent=0 // pred_check
    _
  $region27: #{up_block_forward.1} parent=0 // pred_check_branch
    %38 = sbr.rel (0) target = $region29
  $region28: #{up_block_forward.1} parent=0 // pred_region
    _
  $region29: #{up_block_forward.1} parent=0 // pred_fallthru
    _
  // Predicated region
  $region30: #{up_block_forward.1} parent=0 // pred_check
    _
  $region31: #{up_block_forward.1} parent=0 // pred_check_branch
    %40 = sbr.rel (0) target = $region33
  $region32: #{up_block_forward.1} parent=0 // pred_region
    _
  $region33: #{up_block_forward.1} parent=0 // pred_fallthru
    _
  // Predicated region
  $region34: #{up_block_forward.1} parent=0 // pred_check
    _
  $region35: #{up_block_forward.1} parent=0 // pred_check_branch
    %42 = sbr.rel (0) target = $region37
  $region36: #{up_block_forward.1} parent=0 // pred_region
    _
  $region37: #{up_block_forward.1} parent=0 // pred_fallthru
    _
  // Predicated region
  $region38: #{up_block_forward.1} parent=0 // pred_check
    _
  $region39: #{up_block_forward.1} parent=0 // pred_check_branch
    %44 = sbr.rel (0) target = $region41
  $region40: #{up_block_forward.1} parent=0 // pred_region
    _
  $region41: #{up_block_forward.1} parent=0 // pred_fallthru
    _
  // Predicated region
  $region42: #{up_block_forward.1} parent=0 // pred_check
    _
  $region43: #{up_block_forward.1} parent=0 // pred_check_branch
    %46 = sbr.rel (0) target = $region45
  $region44: #{up_block_forward.1} parent=0 // pred_region
    _
  $region45: #{up_block_forward.1} parent=0 // pred_fallthru
    _
  // Predicated region
  $region46: #{up_block_forward.1} parent=0 // pred_check
    _
  $region47: #{up_block_forward.1} parent=0 // pred_check_branch
    %48 = sbr.rel (0) target = $region49
  $region48: #{up_block_forward.1} parent=0 // pred_region
    _
  $region49: #{up_block_forward.1} parent=0 // pred_fallthru
    _
  // Predicated region
  $region50: #{up_block_forward.1} parent=0 // pred_check
    _
  $region51: #{up_block_forward.1} parent=0 // pred_check_branch
    %50 = sbr.rel (0) target = $region53
  $region52: #{up_block_forward.1} parent=0 // pred_region
    _
  $region53: #{up_block_forward.1} parent=0 // pred_fallthru
    _
  // Predicated region
  $region54: #{up_block_forward.1} parent=0 // pred_check
    _
  $region55: #{up_block_forward.1} parent=0 // pred_check_branch
    %52 = sbr.rel (0) target = $region57
  $region56: #{up_block_forward.1} parent=0 // pred_region
    _
  $region57: #{up_block_forward.1} parent=0 // pred_fallthru
    _
  // Predicated region
  $region58: #{up_block_forward.1} parent=0 // pred_check
    _
  $region59: #{up_block_forward.1} parent=0 // pred_check_branch
    %54 = sbr.rel (0) target = $region61
  $region60: #{up_block_forward.1} parent=0 // pred_region
    _
  $region61: #{up_block_forward.1} parent=0 // pred_fallthru
    _
  // Predicated region
  $region62: #{up_block_forward.1} parent=0 // pred_check
    _
  $region63: #{up_block_forward.1} parent=0 // pred_check_branch
    %56 = sbr.rel (0) target = $region65
  $region64: #{up_block_forward.1} parent=0 // pred_region
    _
  $region65: #{up_block_forward.1} parent=0 // pred_fallthru
    _
  // Predicated region
  $region66: #{up_block_forward.1} parent=0 // pred_check
    _
  $region67: #{up_block_forward.1} parent=0 // pred_check_branch
    %58 = sbr.rel (0) target = $region69
  $region68: #{up_block_forward.1} parent=0 // pred_region
    _
  $region69: #{up_block_forward.1} parent=0 // pred_fallthru
    _
  // Predicated region
  $region70: #{up_block_forward.1} parent=0 // pred_check
    _
  $region71: #{up_block_forward.1} parent=0 // pred_check_branch
    %60 = sbr.rel (0) target = $region73
  $region72: #{up_block_forward.1} parent=0 // pred_region
    _
  $region73: #{up_block_forward.1} parent=0 // pred_fallthru
    _
  // Predicated region
  $region74: #{up_block_forward.1} parent=0 // pred_check
    _
  $region75: #{up_block_forward.1} parent=0 // pred_check_branch
    %62 = sbr.rel (0) target = $region77
  $region76: #{up_block_forward.1} parent=0 // pred_region
    _
  $region77: #{up_block_forward.1} parent=0 // pred_fallthru
    _
  // Predicated region
  $region78: #{up_block_forward.1} parent=0 // pred_check
    _
  $region79: #{up_block_forward.1} parent=0 // pred_check_branch
    %64 = sbr.rel (0) target = $region81
  $region80: #{up_block_forward.1} parent=0 // pred_region
    _
  $region81: #{up_block_forward.1} parent=0 // pred_fallthru
    _
  %v66 = vlaneseq
  %vm67 = vcmp.ge.s32.totalorder %v66, 0
  %vm68 = vcmp.lt.s32.totalorder %v66, 256
  %vm69 = vmand %vm67, %vm68
  %70 = vst.msk [vmem:[#allocation2] ss:$8 sm:$0x3] %vm69, 0.0
  %71 = vst.msk [vmem:[#allocation2] ss:$8 sm:$0x0] %vm69, 0.0
  %s72 = scalar_lea.vmem [#allocation2], 33
  %73 = vst.msk [vmem:[%s72] ss:$8 sm:$0x3] %vm69, 0.0
  %74 = vst.msk [vmem:[%s72] ss:$8 sm:$0x0] %vm69, 0.0
  %v75 = vld [vmem:[%s0] sm:$0xff]
  %v76 = vpack.c.bf16 %v75, %v75
  %v77 = vld [vmem:[%s3] sm:$0xf]
  %v78 = vld [vmem:[%s3 + $0x4] sm:$0xf]
  %v79 = vld [vmem:[%s3 + $0x8] sm:$0xf]
  %v80 = vld [vmem:[%s3 + $0xc] sm:$0xf]
  %v81 = vld [vmem:[%s3 + $0x10] sm:$0xf]
  %v82 = vld [vmem:[%s3 + $0x14] sm:$0xf]
  %v83 = vld [vmem:[%s3 + $0x18] sm:$0xf]
  %v84 = vld [vmem:[%s3 + $0x1c] sm:$0xf]
  %v85 = vld [vmem:[%s3 + $0x20] sm:$0xf]
  %v86 = vld [vmem:[%s3 + $0x24] sm:$0xf]
  %v87 = vld [vmem:[%s3 + $0x28] sm:$0xf]
  %v88 = vld [vmem:[%s3 + $0x2c] sm:$0xf]
  %v89 = vld [vmem:[%s3 + $0x30] sm:$0xf]
  %v90 = vld [vmem:[%s3 + $0x34] sm:$0xf]
  %v91 = vld [vmem:[%s3 + $0x38] sm:$0xf]
  %v92 = vld [vmem:[%s3 + $0x3c] sm:$0xf]
  %v109 = vunpack.c.l.b16 %v77
  %v110 = vunpack.c.l.b16 %v78
  %v111 = vunpack.c.l.b16 %v79
  %v112 = vunpack.c.l.b16 %v80
  %v113 = vunpack.c.l.b16 %v81
  %v114 = vunpack.c.l.b16 %v82
  %v115 = vunpack.c.l.b16 %v83
  %v116 = vunpack.c.l.b16 %v84
  %v117 = vunpack.c.l.b16 %v85
  %v118 = vunpack.c.l.b16 %v86
  %v119 = vunpack.c.l.b16 %v87
  %v120 = vunpack.c.l.b16 %v88
  %v121 = vunpack.c.l.b16 %v89
  %v122 = vunpack.c.l.b16 %v90
  %v123 = vunpack.c.l.b16 %v91
  %v124 = vunpack.c.l.b16 %v92
  %v125 = vpack.c.b16 %v110, %v109
  %v126 = vpack.c.b16 %v112, %v111
  %v127 = vpack.c.b16 %v114, %v113
  %v128 = vpack.c.b16 %v116, %v115
  %v129 = vpack.c.b16 %v118, %v117
  %v130 = vpack.c.b16 %v120, %v119
  %v131 = vpack.c.b16 %v122, %v121
  %v132 = vpack.c.b16 %v124, %v123
  %141 = vmatprep.subr.bf16.mxu0 0
  %142 = vmatpush1.bf16.msra.mxu0 %v125
  %143 = vmatprep.subr.bf16.mxu0 0
  %144 = vmatpush1.bf16.msra.mxu0 %v126
  %145 = vmatprep.subr.bf16.mxu0 0
  %146 = vmatpush1.bf16.msra.mxu0 %v127
  %147 = vmatprep.subr.bf16.mxu0 0
  %148 = vmatpush1.bf16.msra.mxu0 %v128
  %149 = vmatprep.subr.bf16.mxu0 0
  %150 = vmatpush1.bf16.msra.mxu0 %v129
  %151 = vmatprep.subr.bf16.mxu0 0
  %152 = vmatpush1.bf16.msra.mxu0 %v130
  %153 = vmatprep.subr.bf16.mxu0 0
  %154 = vmatpush1.bf16.msra.mxu0 %v131
  %155 = vmatprep.subr.bf16.mxu0 0
  %156 = vmatpush1.bf16.msra.mxu0 %v132
  %157 = vmatprep.subr.bf16.mxu0 0
  %158 = vmatpush1.bf16.msra.mxu0 0
  %159 = vmatprep.subr.bf16.mxu0 0
  %160 = vmatpush1.bf16.msra.mxu0 0
  %161 = vmatprep.subr.bf16.mxu0 0
  %162 = vmatpush1.bf16.msra.mxu0 0
  %163 = vmatprep.subr.bf16.mxu0 0
  %164 = vmatpush1.bf16.msra.mxu0 0
  %165 = vmatprep.subr.bf16.mxu0 0
  %166 = vmatpush1.bf16.msra.mxu0 0
  %167 = vmatprep.subr.bf16.mxu0 0
  %168 = vmatpush1.bf16.msra.mxu0 0
  %169 = vmatprep.subr.bf16.mxu0 0
  %170 = vmatpush1.bf16.msra.mxu0 0
  %171 = vmatprep.subr.bf16.mxu0 0
  %172 = vmatpush1.bf16.msra.mxu0 0
  %173 = vmatprep.mubr.bf16.mxu0 0
  %174 = vmatmul.mubr.bf16.gmra.mrb[0].mxu0 %v76
  %v175 = vpop.f32.mrb[0].mxu0
  %v176 = vadd.f32 0.0, %v175
  %v177 = vpop.f32.mrb[0].mxu0
  %v178 = vpop.f32.mrb[0].mxu0
  %v179 = vpop.f32.mrb[0].mxu0
  %180 = vdwg.mxu0
  %v181 = vld [vmem:[%s2] sm:$0xff]
  %v182 = vld [vmem:[%s2 + $0x8] sm:$0xff]
  %v183 = vld [vmem:[%s4] sm:$0x1]
  %v185 = vlaneseq
  %v186 = vshrl.u32 %v185, 7
  %v187 = vsub.s32 0, %v186
  %v188 = vrot.slane %v183, %v187
  %vm190 = vcmask 64512
  %v192 = vsel %vm190, %v181, 0
  %v195 = vsel %vm190, %v182, 0
  %197 = vmatprep.subr.mxu0 0.0
  %198 = vmatpush1.msra.mxu0 %v176
  %199 = vmatprep.subr.mxu0 0.0
  %200 = vmatpush1.msra.mxu0 0.0
  %201 = vmatprep.subr.mxu0 0.0
  %202 = vmatpush1.msra.mxu0 0.0
  %203 = vmatprep.subr.mxu0 0.0
  %204 = vmatpush1.msra.mxu0 0.0
  %205 = vmatprep.subr.mxu0 0.0
  %206 = vmatpush1.msra.mxu0 0.0
  %207 = vmatprep.subr.mxu0 0.0
  %208 = vmatpush1.msra.mxu0 0.0
  %209 = vmatprep.subr.mxu0 0.0
  %210 = vmatpush1.msra.mxu0 0.0
  %211 = vmatprep.subr.mxu0 0.0
  %212 = vmatpush1.msra.mxu0 0.0
  %213 = vmatprep.subr.mxu0 0.0
  %214 = vmatpush1.msra.mxu0 0.0
  %215 = vmatprep.subr.mxu0 0.0
  %216 = vmatpush1.msra.mxu0 0.0
  %217 = vmatprep.subr.mxu0 0.0
  %218 = vmatpush1.msra.mxu0 0.0
  %219 = vmatprep.subr.mxu0 0.0
  %220 = vmatpush1.msra.mxu0 0.0
  %221 = vmatprep.subr.mxu0 0.0
  %222 = vmatpush1.msra.mxu0 0.0
  %223 = vmatprep.subr.mxu0 0.0
  %224 = vmatpush1.msra.mxu0 0.0
  %225 = vmatprep.subr.mxu0 0.0
  %226 = vmatpush1.msra.mxu0 0.0
  %227 = vmatprep.subr.mxu0 0.0
  %228 = vmatpush1.msra.mxu0 0.0
  %229 = vmatprep.subr.mxu0 0.0
  %230 = vmatpush1.msra.mxu0 0.0
  %231 = vmatprep.subr.mxu0 0.0
  %232 = vmatpush1.msra.mxu0 0.0
  %233 = vmatprep.subr.mxu0 0.0
  %234 = vmatpush1.msra.mxu0 0.0
  %235 = vmatprep.subr.mxu0 0.0
  %236 = vmatpush1.msra.mxu0 0.0
  %237 = vmatprep.subr.mxu0 0.0
  %238 = vmatpush1.msra.mxu0 0.0
  %239 = vmatprep.subr.mxu0 0.0
  %240 = vmatpush1.msra.mxu0 0.0
  %241 = vmatprep.subr.mxu0 0.0
  %242 = vmatpush1.msra.mxu0 0.0
  %243 = vmatprep.subr.mxu0 0.0
  %244 = vmatpush1.msra.mxu0 0.0
  %245 = vmatprep.subr.mxu0 0.0
  %246 = vmatpush1.msra.mxu0 0.0
  %247 = vmatprep.subr.mxu0 0.0
  %248 = vmatpush1.msra.mxu0 0.0
  %249 = vmatprep.subr.mxu0 0.0
  %250 = vmatpush1.msra.mxu0 0.0
  %251 = vmatprep.subr.mxu0 0.0
  %252 = vmatpush1.msra.mxu0 0.0
  %253 = vmatprep.subr.mxu0 0.0
  %254 = vmatpush1.msra.mxu0 0.0
  %255 = vmatprep.subr.mxu0 0.0
  %256 = vmatpush1.msra.mxu0 0.0
  %257 = vmatprep.subr.mxu0 0.0
  %258 = vmatpush1.msra.mxu0 0.0
  %259 = vmatprep.subr.mxu0 0.0
  %260 = vmatpush1.msra.mxu0 0.0
  %261 = vmatprep.mubr.f32.mxu0 0.0
  %262 = vmatmul.mubr.f32.gmra.mrb[0].mxu0 %v192
  %v263 = vpop.f32.mrb[0].mxu0
  %v264 = vadd.f32 %v188, %v263
  %v265 = vpop.f32.mrb[0].mxu0
  %266 = vmatprep.mubr.f32.mxu0 0.0
  %267 = vmatmul.mubr.f32.gmra.mrb[0].mxu0 %v195
  %v268 = vpop.f32.mrb[0].mxu0
  %v269 = vadd.f32 %v188, %v268
  %v270 = vpop.f32.mrb[0].mxu0
  %271 = vdwg.mxu0
  %v272 = vld [vmem:[%s1] sm:$0xff]
  %v273 = vld [vmem:[%s1 + $0x8] sm:$0xff]
  %v274 = vld [vmem:[%s5] sm:$0x3]
  %v276 = vlaneseq
  %v277 = vshrl.u32 %v276, 7
  %v278 = vsub.s32 0, %v277
  %v279 = vrot.slane %v274, %v278
  %v280 = vlaneseq
  %v281 = vshrl.u32 %v280, 7
  %v282 = vsub.s32 1, %v281
  %v283 = vrot.slane %v274, %v282
  %v286 = vmul.f32 %v272, %v279
  %v287 = vmul.f32 %v264, %v283
  %v288 = vmul.f32 %v273, %v279
  %v289 = vmul.f32 %v269, %v283
  %v290 = vld [vmem:[%s6] sm:$0x3]
  %v292 = vlaneseq
  %v293 = vshrl.u32 %v292, 7
  %v294 = vsub.s32 0, %v293
  %v295 = vrot.slane %v290, %v294
  %v296 = vlaneseq
  %v297 = vshrl.u32 %v296, 7
  %v298 = vsub.s32 1, %v297
  %v299 = vrot.slane %v290, %v298
  %v302 = vadd.f32 %v286, %v295
  %v303 = vadd.f32 %v287, %v299
  %v304 = vadd.f32 %v288, %v295
  %v305 = vadd.f32 %v289, %v299
  %v306 = vmax.f32 %v302, 0.0
  %v307 = vmax.f32 %v303, 0.0
  %v308 = vmax.f32 %v304, 0.0
  %v309 = vmax.f32 %v305, 0.0
  %vm314 = vcmask 1040384
  %v315 = vrot.slane %v306, 7
  %v316 = vrot.slane %v307, 7
  %v317 = vrot.slane %v308, 7
  %v318 = vsel %vm314, %v315, %v317
  %v319 = vrot.slane %v309, 7
  %v320 = vsel %vm314, %v316, %v319
  %327 = vst [vmem:[#allocation2] sm:$0xfe] %v315
  %328 = vst [vmem:[#allocation2 + $0x8] sm:$0xfe] %v316
  %329 = vst [vmem:[#allocation2 + $0x10] sm:$0xff] %v318
  %330 = vst [vmem:[#allocation2 + $0x18] sm:$0xff] %v320
  %331 = vst [vmem:[#allocation2 + $0x20] sm:$0x1] %v317
  %332 = vst [vmem:[#allocation2 + $0x28] sm:$0x1] %v319
  %v333 = vld [vmem:[#allocation2] sm:$0xff]
  %v334 = vld [vmem:[#allocation2 + $0x8] sm:$0xff]
  %v335 = vld [vmem:[#allocation2 + $0x10] sm:$0xff]
  %v336 = vld [vmem:[#allocation2 + $0x18] sm:$0xff]
  %v337 = vpack.c.bf16 %v335, %v333
  %v338 = vpack.c.bf16 %v336, %v334
  %v339 = vld [vmem:[%s7] sm:$0xf]
  %v340 = vld [vmem:[%s7 + $0x4] sm:$0xf]
  %v341 = vld [vmem:[%s7 + $0x8] sm:$0xf]
  %v342 = vld [vmem:[%s7 + $0xc] sm:$0xf]
  %v343 = vld [vmem:[%s7 + $0x10] sm:$0xf]
  %v344 = vld [vmem:[%s7 + $0x14] sm:$0xf]
  %v345 = vld [vmem:[%s7 + $0x18] sm:$0xf]
  %v346 = vld [vmem:[%s7 + $0x1c] sm:$0xf]
  %v347 = vld [vmem:[%s7 + $0x20] sm:$0xf]
  %v348 = vld [vmem:[%s7 + $0x24] sm:$0xf]
  %v349 = vld [vmem:[%s7 + $0x28] sm:$0xf]
  %v350 = vld [vmem:[%s7 + $0x2c] sm:$0xf]
  %v351 = vld [vmem:[%s7 + $0x30] sm:$0xf]
  %v352 = vld [vmem:[%s7 + $0x34] sm:$0xf]
  %v353 = vld [vmem:[%s7 + $0x38] sm:$0xf]
  %v354 = vld [vmem:[%s7 + $0x3c] sm:$0xf]
  %v355 = vld [vmem:[%s7 + $0x40] sm:$0xf]
  %v356 = vld [vmem:[%s7 + $0x44] sm:$0xf]
  %v357 = vld [vmem:[%s7 + $0x48] sm:$0xf]
  %v358 = vld [vmem:[%s7 + $0x4c] sm:$0xf]
  %v359 = vld [vmem:[%s7 + $0x50] sm:$0xf]
  %v360 = vld [vmem:[%s7 + $0x54] sm:$0xf]
  %v361 = vld [vmem:[%s7 + $0x58] sm:$0xf]
  %v362 = vld [vmem:[%s7 + $0x5c] sm:$0xf]
  %v363 = vld [vmem:[%s7 + $0x60] sm:$0xf]
  %v364 = vld [vmem:[%s7 + $0x64] sm:$0xf]
  %v365 = vld [vmem:[%s7 + $0x68] sm:$0xf]
  %v366 = vld [vmem:[%s7 + $0x6c] sm:$0xf]
  %v367 = vld [vmem:[%s7 + $0x70] sm:$0xf]
  %v368 = vld [vmem:[%s7 + $0x74] sm:$0xf]
  %v369 = vld [vmem:[%s7 + $0x78] sm:$0xf]
  %v370 = vld [vmem:[%s7 + $0x7c] sm:$0xf]
  %v371 = vld [vmem:[#allocation2] sm:$0xfe]
  %v372 = vld [vmem:[#allocation2 + $0x8] sm:$0xfe]
  %v373 = vld [vmem:[#allocation2 + $0x20] sm:$0x1]
  %v374 = vld [vmem:[#allocation2 + $0x28] sm:$0x1]
  %v375 = vpack.c.bf16 %v335, %v371
  %v376 = vpack.c.bf16 %v336, %v372
  %v377 = vpack.c.bf16 %v373, %v373
  %v378 = vpack.c.bf16 %v374, %v374
  %s379 = scalar_lea.vmem %s7, 128
  %v380 = vld [vmem:[%s379] sm:$0xf]
  %v381 = vld [vmem:[%s379 + $0x4] sm:$0xf]
  %v382 = vld [vmem:[%s379 + $0x8] sm:$0xf]
  %v383 = vld [vmem:[%s379 + $0xc] sm:$0xf]
  %v384 = vld [vmem:[%s379 + $0x10] sm:$0xf]
  %v385 = vld [vmem:[%s379 + $0x14] sm:$0xf]
  %v386 = vld [vmem:[%s379 + $0x18] sm:$0xf]
  %v387 = vld [vmem:[%s379 + $0x1c] sm:$0xf]
  %v388 = vld [vmem:[%s379 + $0x20] sm:$0xf]
  %v389 = vld [vmem:[%s379 + $0x24] sm:$0xf]
  %v390 = vld [vmem:[%s379 + $0x28] sm:$0xf]
  %v391 = vld [vmem:[%s379 + $0x2c] sm:$0xf]
  %v392 = vld [vmem:[%s379 + $0x30] sm:$0xf]
  %v393 = vld [vmem:[%s379 + $0x34] sm:$0xf]
  %v394 = vld [vmem:[%s379 + $0x38] sm:$0xf]
  %v395 = vld [vmem:[%s379 + $0x3c] sm:$0xf]
  %v396 = vld [vmem:[%s379 + $0x40] sm:$0xf]
  %v397 = vld [vmem:[%s379 + $0x44] sm:$0xf]
  %v398 = vld [vmem:[%s379 + $0x48] sm:$0xf]
  %v399 = vld [vmem:[%s379 + $0x4c] sm:$0xf]
  %v400 = vld [vmem:[%s379 + $0x50] sm:$0xf]
  %v401 = vld [vmem:[%s379 + $0x54] sm:$0xf]
  %v402 = vld [vmem:[%s379 + $0x58] sm:$0xf]
  %v403 = vld [vmem:[%s379 + $0x5c] sm:$0xf]
  %v404 = vld [vmem:[%s379 + $0x60] sm:$0xf]
  %v405 = vld [vmem:[%s379 + $0x64] sm:$0xf]
  %v406 = vld [vmem:[%s379 + $0x68] sm:$0xf]
  %v407 = vld [vmem:[%s379 + $0x6c] sm:$0xf]
  %v408 = vld [vmem:[%s379 + $0x70] sm:$0xf]
  %v409 = vld [vmem:[%s379 + $0x74] sm:$0xf]
  %v410 = vld [vmem:[%s379 + $0x78] sm:$0xf]
  %v411 = vld [vmem:[%s379 + $0x7c] sm:$0xf]
  %vm412 = vsmask.f32 7424
  %v414 = vshrl.u32 %v375, 16
  %v416 = vshll.u32 %v375, 16
  %v418 = vrot.slane %v416, 1
  %v419 = vor.u32 %v414, %v418
  %v421 = vshll.u32 %v377, 16
  %v423 = vrot.slane %v421, 1
  %v424 = vsel %vm412, %v419, %v423
  %v426 = vshrl.u32 %v376, 16
  %v428 = vshll.u32 %v376, 16
  %v430 = vrot.slane %v428, 1
  %v431 = vor.u32 %v426, %v430
  %v433 = vshll.u32 %v378, 16
  %v435 = vrot.slane %v433, 1
  %v436 = vsel %vm412, %v431, %v435
  %v471 = vunpack.c.l.b16 %v380
  %v472 = vunpack.c.l.b16 %v381
  %v473 = vunpack.c.l.b16 %v382
  %v474 = vunpack.c.l.b16 %v383
  %v475 = vunpack.c.l.b16 %v384
  %v476 = vunpack.c.l.b16 %v385
  %v477 = vunpack.c.l.b16 %v386
  %v478 = vunpack.c.l.b16 %v387
  %v479 = vunpack.c.l.b16 %v388
  %v480 = vunpack.c.l.b16 %v389
  %v481 = vunpack.c.l.b16 %v390
  %v482 = vunpack.c.l.b16 %v391
  %v483 = vunpack.c.l.b16 %v392
  %v484 = vunpack.c.l.b16 %v393
  %v485 = vunpack.c.l.b16 %v394
  %v486 = vunpack.c.l.b16 %v395
  %v487 = vunpack.c.l.b16 %v396
  %v488 = vunpack.c.l.b16 %v397
  %v489 = vunpack.c.l.b16 %v398
  %v490 = vunpack.c.l.b16 %v399
  %v491 = vunpack.c.l.b16 %v400
  %v492 = vunpack.c.l.b16 %v401
  %v493 = vunpack.c.l.b16 %v402
  %v494 = vunpack.c.l.b16 %v403
  %v495 = vunpack.c.l.b16 %v404
  %v496 = vunpack.c.l.b16 %v405
  %v497 = vunpack.c.l.b16 %v406
  %v498 = vunpack.c.l.b16 %v407
  %v499 = vunpack.c.l.b16 %v408
  %v500 = vunpack.c.l.b16 %v409
  %v501 = vunpack.c.l.b16 %v410
  %v502 = vunpack.c.l.b16 %v411
  %v503 = vpack.c.b16 %v472, %v471
  %v504 = vpack.c.b16 %v474, %v473
  %v505 = vpack.c.b16 %v476, %v475
  %v506 = vpack.c.b16 %v478, %v477
  %v507 = vpack.c.b16 %v480, %v479
  %v508 = vpack.c.b16 %v482, %v481
  %v509 = vpack.c.b16 %v484, %v483
  %v510 = vpack.c.b16 %v486, %v485
  %v511 = vpack.c.b16 %v488, %v487
  %v512 = vpack.c.b16 %v490, %v489
  %v513 = vpack.c.b16 %v492, %v491
  %v514 = vpack.c.b16 %v494, %v493
  %v515 = vpack.c.b16 %v496, %v495
  %v516 = vpack.c.b16 %v498, %v497
  %v517 = vpack.c.b16 %v500, %v499
  %v518 = vpack.c.b16 %v502, %v501
  %535 = vmatprep.subr.bf16.mxu0 0
  %536 = vmatpush1.bf16.msra.mxu0 %v503
  %537 = vmatprep.subr.bf16.mxu0 0
  %538 = vmatpush1.bf16.msra.mxu0 %v504
  %539 = vmatprep.subr.bf16.mxu0 0
  %540 = vmatpush1.bf16.msra.mxu0 %v505
  %541 = vmatprep.subr.bf16.mxu0 0
  %542 = vmatpush1.bf16.msra.mxu0 %v506
  %543 = vmatprep.subr.bf16.mxu0 0
  %544 = vmatpush1.bf16.msra.mxu0 %v507
  %545 = vmatprep.subr.bf16.mxu0 0
  %546 = vmatpush1.bf16.msra.mxu0 %v508
  %547 = vmatprep.subr.bf16.mxu0 0
  %548 = vmatpush1.bf16.msra.mxu0 %v509
  %549 = vmatprep.subr.bf16.mxu0 0
  %550 = vmatpush1.bf16.msra.mxu0 %v510
  %551 = vmatprep.subr.bf16.mxu0 0
  %552 = vmatpush1.bf16.msra.mxu0 %v511
  %553 = vmatprep.subr.bf16.mxu0 0
  %554 = vmatpush1.bf16.msra.mxu0 %v512
  %555 = vmatprep.subr.bf16.mxu0 0
  %556 = vmatpush1.bf16.msra.mxu0 %v513
  %557 = vmatprep.subr.bf16.mxu0 0
  %558 = vmatpush1.bf16.msra.mxu0 %v514
  %559 = vmatprep.subr.bf16.mxu0 0
  %560 = vmatpush1.bf16.msra.mxu0 %v515
  %561 = vmatprep.subr.bf16.mxu0 0
  %562 = vmatpush1.bf16.msra.mxu0 %v516
  %563 = vmatprep.subr.bf16.mxu0 0
  %564 = vmatpush1.bf16.msra.mxu0 %v517
  %565 = vmatprep.subr.bf16.mxu0 0
  %566 = vmatpush1.bf16.msra.mxu0 %v518
  %567 = vmatprep.mubr.bf16.mxu0 %v436
  %568 = vmatmul.mubr.bf16.gmra.mrb[0].mxu0 %v424
  %v569 = vpop.f32.mrb[0].mxu0
  %v570 = vadd.f32 0.0, %v569
  %v571 = vpop.f32.mrb[0].mxu0
  %v572 = vpop.f32.mrb[0].mxu0
  %v573 = vadd.f32 0.0, %v572
  %v574 = vpop.f32.mrb[0].mxu0
  %575 = vdwg.mxu0
  %v608 = vunpack.c.l.b16 %v339
  %v609 = vunpack.c.l.b16 %v340
  %v610 = vunpack.c.l.b16 %v341
  %v611 = vunpack.c.l.b16 %v342
  %v612 = vunpack.c.l.b16 %v343
  %v613 = vunpack.c.l.b16 %v344
  %v614 = vunpack.c.l.b16 %v345
  %v615 = vunpack.c.l.b16 %v346
  %v616 = vunpack.c.l.b16 %v347
  %v617 = vunpack.c.l.b16 %v348
  %v618 = vunpack.c.l.b16 %v349
  %v619 = vunpack.c.l.b16 %v350
  %v620 = vunpack.c.l.b16 %v351
  %v621 = vunpack.c.l.b16 %v352
  %v622 = vunpack.c.l.b16 %v353
  %v623 = vunpack.c.l.b16 %v354
  %v624 = vunpack.c.l.b16 %v355
  %v625 = vunpack.c.l.b16 %v356
  %v626 = vunpack.c.l.b16 %v357
  %v627 = vunpack.c.l.b16 %v358
  %v628 = vunpack.c.l.b16 %v359
  %v629 = vunpack.c.l.b16 %v360
  %v630 = vunpack.c.l.b16 %v361
  %v631 = vunpack.c.l.b16 %v362
  %v632 = vunpack.c.l.b16 %v363
  %v633 = vunpack.c.l.b16 %v364
  %v634 = vunpack.c.l.b16 %v365
  %v635 = vunpack.c.l.b16 %v366
  %v636 = vunpack.c.l.b16 %v367
  %v637 = vunpack.c.l.b16 %v368
  %v638 = vunpack.c.l.b16 %v369
  %v639 = vunpack.c.l.b16 %v370
  %v640 = vpack.c.b16 %v609, %v608
  %v641 = vpack.c.b16 %v611, %v610
  %v642 = vpack.c.b16 %v613, %v612
  %v643 = vpack.c.b16 %v615, %v614
  %v644 = vpack.c.b16 %v617, %v616
  %v645 = vpack.c.b16 %v619, %v618
  %v646 = vpack.c.b16 %v621, %v620
  %v647 = vpack.c.b16 %v623, %v622
  %v648 = vpack.c.b16 %v625, %v624
  %v649 = vpack.c.b16 %v627, %v626
  %v650 = vpack.c.b16 %v629, %v628
  %v651 = vpack.c.b16 %v631, %v630
  %v652 = vpack.c.b16 %v633, %v632
  %v653 = vpack.c.b16 %v635, %v634
  %v654 = vpack.c.b16 %v637, %v636
  %v655 = vpack.c.b16 %v639, %v638
  %672 = vmatprep.subr.bf16.mxu0 0
  %673 = vmatpush1.bf16.msra.mxu0 %v640
  %674 = vmatprep.subr.bf16.mxu0 0
  %675 = vmatpush1.bf16.msra.mxu0 %v641
  %676 = vmatprep.subr.bf16.mxu0 0
  %677 = vmatpush1.bf16.msra.mxu0 %v642
  %678 = vmatprep.subr.bf16.mxu0 0
  %679 = vmatpush1.bf16.msra.mxu0 %v643
  %680 = vmatprep.subr.bf16.mxu0 0
  %681 = vmatpush1.bf16.msra.mxu0 %v644
  %682 = vmatprep.subr.bf16.mxu0 0
  %683 = vmatpush1.bf16.msra.mxu0 %v645
  %684 = vmatprep.subr.bf16.mxu0 0
  %685 = vmatpush1.bf16.msra.mxu0 %v646
  %686 = vmatprep.subr.bf16.mxu0 0
  %687 = vmatpush1.bf16.msra.mxu0 %v647
  %688 = vmatprep.subr.bf16.mxu0 0
  %689 = vmatpush1.bf16.msra.mxu0 %v648
  %690 = vmatprep.subr.bf16.mxu0 0
  %691 = vmatpush1.bf16.msra.mxu0 %v649
  %692 = vmatprep.subr.bf16.mxu0 0
  %693 = vmatpush1.bf16.msra.mxu0 %v650
  %694 = vmatprep.subr.bf16.mxu0 0
  %695 = vmatpush1.bf16.msra.mxu0 %v651
  %696 = vmatprep.subr.bf16.mxu0 0
  %697 = vmatpush1.bf16.msra.mxu0 %v652
  %698 = vmatprep.subr.bf16.mxu0 0
  %699 = vmatpush1.bf16.msra.mxu0 %v653
  %700 = vmatprep.subr.bf16.mxu0 0
  %701 = vmatpush1.bf16.msra.mxu0 %v654
  %702 = vmatprep.subr.bf16.mxu0 0
  %703 = vmatpush1.bf16.msra.mxu0 %v655
  %704 = vmatprep.mubr.bf16.mxu0 %v338
  %705 = vmatmul.mubr.bf16.gmra.mrb[0].mxu0 %v337
  %v706 = vpop.f32.mrb[0].mxu0
  %v707 = vadd.f32 %v570, %v706
  %v708 = vpop.f32.mrb[0].mxu0
  %v709 = vpop.f32.mrb[0].mxu0
  %v710 = vadd.f32 %v573, %v709
  %v711 = vpop.f32.mrb[0].mxu0
  %712 = vdwg.mxu0
  %v713 = vld [vmem:[#allocation2] sm:$0xfc]
  %v714 = vld [vmem:[#allocation2 + $0x8] sm:$0xfc]
  %v715 = vld [vmem:[#allocation2 + $0x20] sm:$0x3]
  %v716 = vld [vmem:[#allocation2 + $0x28] sm:$0x3]
  %v717 = vpack.c.bf16 %v335, %v713
  %v718 = vpack.c.bf16 %v336, %v714
  %v719 = vpack.c.bf16 %v715, %v715
  %v720 = vpack.c.bf16 %v716, %v716
  %s721 = scalar_lea.vmem %s7, 256
  %v722 = vld [vmem:[%s721] sm:$0xf]
  %v723 = vld [vmem:[%s721 + $0x4] sm:$0xf]
  %v724 = vld [vmem:[%s721 + $0x8] sm:$0xf]
  %v725 = vld [vmem:[%s721 + $0xc] sm:$0xf]
  %v726 = vld [vmem:[%s721 + $0x10] sm:$0xf]
  %v727 = vld [vmem:[%s721 + $0x14] sm:$0xf]
  %v728 = vld [vmem:[%s721 + $0x18] sm:$0xf]
  %v729 = vld [vmem:[%s721 + $0x1c] sm:$0xf]
  %v730 = vld [vmem:[%s721 + $0x20] sm:$0xf]
  %v731 = vld [vmem:[%s721 + $0x24] sm:$0xf]
  %v732 = vld [vmem:[%s721 + $0x28] sm:$0xf]
  %v733 = vld [vmem:[%s721 + $0x2c] sm:$0xf]
  %v734 = vld [vmem:[%s721 + $0x30] sm:$0xf]
  %v735 = vld [vmem:[%s721 + $0x34] sm:$0xf]
  %v736 = vld [vmem:[%s721 + $0x38] sm:$0xf]
  %v737 = vld [vmem:[%s721 + $0x3c] sm:$0xf]
  %v738 = vld [vmem:[%s721 + $0x40] sm:$0xf]
  %v739 = vld [vmem:[%s721 + $0x44] sm:$0xf]
  %v740 = vld [vmem:[%s721 + $0x48] sm:$0xf]
  %v741 = vld [vmem:[%s721 + $0x4c] sm:$0xf]
  %v742 = vld [vmem:[%s721 + $0x50] sm:$0xf]
  %v743 = vld [vmem:[%s721 + $0x54] sm:$0xf]
  %v744 = vld [vmem:[%s721 + $0x58] sm:$0xf]
  %v745 = vld [vmem:[%s721 + $0x5c] sm:$0xf]
  %v746 = vld [vmem:[%s721 + $0x60] sm:$0xf]
  %v747 = vld [vmem:[%s721 + $0x64] sm:$0xf]
  %v748 = vld [vmem:[%s721 + $0x68] sm:$0xf]
  %v749 = vld [vmem:[%s721 + $0x6c] sm:$0xf]
  %v750 = vld [vmem:[%s721 + $0x70] sm:$0xf]
  %v751 = vld [vmem:[%s721 + $0x74] sm:$0xf]
  %v752 = vld [vmem:[%s721 + $0x78] sm:$0xf]
  %v753 = vld [vmem:[%s721 + $0x7c] sm:$0xf]
  %vm758 = vcmask 1046528
  %v759 = vrot.slane %v717, 1
  %v760 = vrot.slane %v719, 1
  %v761 = vsel %vm758, %v759, %v760
  %v762 = vrot.slane %v718, 1
  %v763 = vrot.slane %v720, 1
  %v764 = vsel %vm758, %v762, %v763
  %v799 = vunpack.c.l.b16 %v722
  %v800 = vunpack.c.l.b16 %v723
  %v801 = vunpack.c.l.b16 %v724
  %v802 = vunpack.c.l.b16 %v725
  %v803 = vunpack.c.l.b16 %v726
  %v804 = vunpack.c.l.b16 %v727
  %v805 = vunpack.c.l.b16 %v728
  %v806 = vunpack.c.l.b16 %v729
  %v807 = vunpack.c.l.b16 %v730
  %v808 = vunpack.c.l.b16 %v731
  %v809 = vunpack.c.l.b16 %v732
  %v810 = vunpack.c.l.b16 %v733
  %v811 = vunpack.c.l.b16 %v734
  %v812 = vunpack.c.l.b16 %v735
  %v813 = vunpack.c.l.b16 %v736
  %v814 = vunpack.c.l.b16 %v737
  %v815 = vunpack.c.l.b16 %v738
  %v816 = vunpack.c.l.b16 %v739
  %v817 = vunpack.c.l.b16 %v740
  %v818 = vunpack.c.l.b16 %v741
  %v819 = vunpack.c.l.b16 %v742
  %v820 = vunpack.c.l.b16 %v743
  %v821 = vunpack.c.l.b16 %v744
  %v822 = vunpack.c.l.b16 %v745
  %v823 = vunpack.c.l.b16 %v746
  %v824 = vunpack.c.l.b16 %v747
  %v825 = vunpack.c.l.b16 %v748
  %v826 = vunpack.c.l.b16 %v749
  %v827 = vunpack.c.l.b16 %v750
  %v828 = vunpack.c.l.b16 %v751
  %v829 = vunpack.c.l.b16 %v752
  %v830 = vunpack.c.l.b16 %v753
  %v831 = vpack.c.b16 %v800, %v799
  %v832 = vpack.c.b16 %v802, %v801
  %v833 = vpack.c.b16 %v804, %v803
  %v834 = vpack.c.b16 %v806, %v805
  %v835 = vpack.c.b16 %v808, %v807
  %v836 = vpack.c.b16 %v810, %v809
  %v837 = vpack.c.b16 %v812, %v811
  %v838 = vpack.c.b16 %v814, %v813
  %v839 = vpack.c.b16 %v816, %v815
  %v840 = vpack.c.b16 %v818, %v817
  %v841 = vpack.c.b16 %v820, %v819
  %v842 = vpack.c.b16 %v822, %v821
  %v843 = vpack.c.b16 %v824, %v823
  %v844 = vpack.c.b16 %v826, %v825
  %v845 = vpack.c.b16 %v828, %v827
  %v846 = vpack.c.b16 %v830, %v829
  %863 = vmatprep.subr.bf16.mxu0 0
  %864 = vmatpush1.bf16.msra.mxu0 %v831
  %865 = vmatprep.subr.bf16.mxu0 0
  %866 = vmatpush1.bf16.msra.mxu0 %v832
  %867 = vmatprep.subr.bf16.mxu0 0
  %868 = vmatpush1.bf16.msra.mxu0 %v833
  %869 = vmatprep.subr.bf16.mxu0 0
  %870 = vmatpush1.bf16.msra.mxu0 %v834
  %871 = vmatprep.subr.bf16.mxu0 0
  %872 = vmatpush1.bf16.msra.mxu0 %v835
  %873 = vmatprep.subr.bf16.mxu0 0
  %874 = vmatpush1.bf16.msra.mxu0 %v836
  %875 = vmatprep.subr.bf16.mxu0 0
  %876 = vmatpush1.bf16.msra.mxu0 %v837
  %877 = vmatprep.subr.bf16.mxu0 0
  %878 = vmatpush1.bf16.msra.mxu0 %v838
  %879 = vmatprep.subr.bf16.mxu0 0
  %880 = vmatpush1.bf16.msra.mxu0 %v839
  %881 = vmatprep.subr.bf16.mxu0 0
  %882 = vmatpush1.bf16.msra.mxu0 %v840
  %883 = vmatprep.subr.bf16.mxu0 0
  %884 = vmatpush1.bf16.msra.mxu0 %v841
  %885 = vmatprep.subr.bf16.mxu0 0
  %886 = vmatpush1.bf16.msra.mxu0 %v842
  %887 = vmatprep.subr.bf16.mxu0 0
  %888 = vmatpush1.bf16.msra.mxu0 %v843
  %889 = vmatprep.subr.bf16.mxu0 0
  %890 = vmatpush1.bf16.msra.mxu0 %v844
  %891 = vmatprep.subr.bf16.mxu0 0
  %892 = vmatpush1.bf16.msra.mxu0 %v845
  %893 = vmatprep.subr.bf16.mxu0 0
  %894 = vmatpush1.bf16.msra.mxu0 %v846
  %895 = vmatprep.mubr.bf16.mxu0 %v764
  %896 = vmatmul.mubr.bf16.gmra.mrb[0].mxu0 %v761
  %v897 = vpop.f32.mrb[0].mxu0
  %v898 = vadd.f32 0.0, %v897
  %v899 = vpop.f32.mrb[0].mxu0
  %v900 = vpop.f32.mrb[0].mxu0
  %v901 = vadd.f32 0.0, %v900
  %v902 = vpop.f32.mrb[0].mxu0
  %903 = vdwg.mxu0
  %v904 = vadd.f32 %v707, %v898
  %v905 = vadd.f32 %v710, %v901
  %v906 = vld [vmem:[%s8] sm:$0x1]
  %v908 = vlaneseq
  %v909 = vshrl.u32 %v908, 7
  %v910 = vsub.s32 0, %v909
  %v911 = vrot.slane %v906, %v910
  %v913 = vmul.f32 %v904, %v911
  %v914 = vmul.f32 %v905, %v911
  %v915 = vld [vmem:[%s9] sm:$0x1]
  %v917 = vlaneseq
  %v918 = vshrl.u32 %v917, 7
  %v919 = vsub.s32 0, %v918
  %v920 = vrot.slane %v915, %v919
  %v922 = vadd.f32 %v913, %v920
  %v923 = vadd.f32 %v914, %v920
  %v924 = vmax.f32 %v922, 0.0
  %v925 = vmax.f32 %v923, 0.0
  %v928 = vrot.slane %v924, 7
  %v929 = vrot.slane %v925, 7
  %v930 = vsel %vm314, %v928, %v929
  %934 = vst [vmem:[#allocation2] sm:$0xfe] %v928
  %935 = vst [vmem:[#allocation2 + $0x10] sm:$0xff] %v930
  %936 = vst [vmem:[#allocation2 + $0x20] sm:$0x1] %v929
  %v937 = vld [vmem:[#allocation2] sm:$0xff]
  %v938 = vld [vmem:[#allocation2 + $0x10] sm:$0xff]
  %v939 = vpack.c.bf16 %v938, %v937
  %v940 = vld [vmem:[%s10] sm:$0xf]
  %v941 = vld [vmem:[%s10 + $0x4] sm:$0xf]
  %v942 = vld [vmem:[%s10 + $0x8] sm:$0xf]
  %v943 = vld [vmem:[%s10 + $0xc] sm:$0xf]
  %v944 = vld [vmem:[%s10 + $0x10] sm:$0xf]
  %v945 = vld [vmem:[%s10 + $0x14] sm:$0xf]
  %v946 = vld [vmem:[%s10 + $0x18] sm:$0xf]
  %v947 = vld [vmem:[%s10 + $0x1c] sm:$0xf]
  %v948 = vld [vmem:[%s10 + $0x20] sm:$0xf]
  %v949 = vld [vmem:[%s10 + $0x24] sm:$0xf]
  %v950 = vld [vmem:[%s10 + $0x28] sm:$0xf]
  %v951 = vld [vmem:[%s10 + $0x2c] sm:$0xf]
  %v952 = vld [vmem:[%s10 + $0x30] sm:$0xf]
  %v953 = vld [vmem:[%s10 + $0x34] sm:$0xf]
  %v954 = vld [vmem:[%s10 + $0x38] sm:$0xf]
  %v955 = vld [vmem:[%s10 + $0x3c] sm:$0xf]
  %v956 = vld [vmem:[#allocation2] sm:$0xfe]
  %v957 = vld [vmem:[#allocation2 + $0x20] sm:$0x1]
  %v958 = vpack.c.bf16 %v938, %v956
  %v959 = vpack.c.bf16 %v957, %v957
  %s960 = scalar_lea.vmem %s10, 64
  %v961 = vld [vmem:[%s960] sm:$0xf]
  %v962 = vld [vmem:[%s960 + $0x4] sm:$0xf]
  %v963 = vld [vmem:[%s960 + $0x8] sm:$0xf]
  %v964 = vld [vmem:[%s960 + $0xc] sm:$0xf]
  %v965 = vld [vmem:[%s960 + $0x10] sm:$0xf]
  %v966 = vld [vmem:[%s960 + $0x14] sm:$0xf]
  %v967 = vld [vmem:[%s960 + $0x18] sm:$0xf]
  %v968 = vld [vmem:[%s960 + $0x1c] sm:$0xf]
  %v969 = vld [vmem:[%s960 + $0x20] sm:$0xf]
  %v970 = vld [vmem:[%s960 + $0x24] sm:$0xf]
  %v971 = vld [vmem:[%s960 + $0x28] sm:$0xf]
  %v972 = vld [vmem:[%s960 + $0x2c] sm:$0xf]
  %v973 = vld [vmem:[%s960 + $0x30] sm:$0xf]
  %v974 = vld [vmem:[%s960 + $0x34] sm:$0xf]
  %v975 = vld [vmem:[%s960 + $0x38] sm:$0xf]
  %v976 = vld [vmem:[%s960 + $0x3c] sm:$0xf]
  %v978 = vshrl.u32 %v958, 16
  %v980 = vshll.u32 %v958, 16
  %v982 = vrot.slane %v980, 1
  %v983 = vor.u32 %v978, %v982
  %v985 = vshll.u32 %v959, 16
  %v987 = vrot.slane %v985, 1
  %v988 = vsel %vm412, %v983, %v987
  %v1006 = vunpack.c.l.b16 %v961
  %v1007 = vunpack.c.l.b16 %v962
  %v1008 = vunpack.c.l.b16 %v963
  %v1009 = vunpack.c.l.b16 %v964
  %v1010 = vunpack.c.l.b16 %v965
  %v1011 = vunpack.c.l.b16 %v966
  %v1012 = vunpack.c.l.b16 %v967
  %v1013 = vunpack.c.l.b16 %v968
  %v1014 = vunpack.c.l.b16 %v969
  %v1015 = vunpack.c.l.b16 %v970
  %v1016 = vunpack.c.l.b16 %v971
  %v1017 = vunpack.c.l.b16 %v972
  %v1018 = vunpack.c.l.b16 %v973
  %v1019 = vunpack.c.l.b16 %v974
  %v1020 = vunpack.c.l.b16 %v975
  %v1021 = vunpack.c.l.b16 %v976
  %v1022 = vpack.c.b16 %v1007, %v1006
  %v1023 = vpack.c.b16 %v1009, %v1008
  %v1024 = vpack.c.b16 %v1011, %v1010
  %v1025 = vpack.c.b16 %v1013, %v1012
  %v1026 = vpack.c.b16 %v1015, %v1014
  %v1027 = vpack.c.b16 %v1017, %v1016
  %v1028 = vpack.c.b16 %v1019, %v1018
  %v1029 = vpack.c.b16 %v1021, %v1020
  %1038 = vmatprep.subr.bf16.mxu0 0
  %1039 = vmatpush1.bf16.msra.mxu0 %v1022
  %1040 = vmatprep.subr.bf16.mxu0 0
  %1041 = vmatpush1.bf16.msra.mxu0 %v1023
  %1042 = vmatprep.subr.bf16.mxu0 0
  %1043 = vmatpush1.bf16.msra.mxu0 %v1024
  %1044 = vmatprep.subr.bf16.mxu0 0
  %1045 = vmatpush1.bf16.msra.mxu0 %v1025
  %1046 = vmatprep.subr.bf16.mxu0 0
  %1047 = vmatpush1.bf16.msra.mxu0 %v1026
  %1048 = vmatprep.subr.bf16.mxu0 0
  %1049 = vmatpush1.bf16.msra.mxu0 %v1027
  %1050 = vmatprep.subr.bf16.mxu0 0
  %1051 = vmatpush1.bf16.msra.mxu0 %v1028
  %1052 = vmatprep.subr.bf16.mxu0 0
  %1053 = vmatpush1.bf16.msra.mxu0 %v1029
  %1054 = vmatprep.subr.bf16.mxu0 0
  %1055 = vmatpush1.bf16.msra.mxu0 0
  %1056 = vmatprep.subr.bf16.mxu0 0
  %1057 = vmatpush1.bf16.msra.mxu0 0
  %1058 = vmatprep.subr.bf16.mxu0 0
  %1059 = vmatpush1.bf16.msra.mxu0 0
  %1060 = vmatprep.subr.bf16.mxu0 0
  %1061 = vmatpush1.bf16.msra.mxu0 0
  %1062 = vmatprep.subr.bf16.mxu0 0
  %1063 = vmatpush1.bf16.msra.mxu0 0
  %1064 = vmatprep.subr.bf16.mxu0 0
  %1065 = vmatpush1.bf16.msra.mxu0 0
  %1066 = vmatprep.subr.bf16.mxu0 0
  %1067 = vmatpush1.bf16.msra.mxu0 0
  %1068 = vmatprep.subr.bf16.mxu0 0
  %1069 = vmatpush1.bf16.msra.mxu0 0
  %1070 = vmatprep.mubr.bf16.mxu0 0
  %1071 = vmatmul.mubr.bf16.gmra.mrb[0].mxu0 %v988
  %v1072 = vpop.f32.mrb[0].mxu0
  %v1073 = vadd.f32 0.0, %v1072
  %v1074 = vpop.f32.mrb[0].mxu0
  %v1075 = vpop.f32.mrb[0].mxu0
  %v1076 = vadd.f32 0.0, %v1075
  %v1077 = vpop.f32.mrb[0].mxu0
  %1078 = vdwg.mxu0
  %v1095 = vunpack.c.l.b16 %v940
  %v1096 = vunpack.c.l.b16 %v941
  %v1097 = vunpack.c.l.b16 %v942
  %v1098 = vunpack.c.l.b16 %v943
  %v1099 = vunpack.c.l.b16 %v944
  %v1100 = vunpack.c.l.b16 %v945
  %v1101 = vunpack.c.l.b16 %v946
  %v1102 = vunpack.c.l.b16 %v947
  %v1103 = vunpack.c.l.b16 %v948
  %v1104 = vunpack.c.l.b16 %v949
  %v1105 = vunpack.c.l.b16 %v950
  %v1106 = vunpack.c.l.b16 %v951
  %v1107 = vunpack.c.l.b16 %v952
  %v1108 = vunpack.c.l.b16 %v953
  %v1109 = vunpack.c.l.b16 %v954
  %v1110 = vunpack.c.l.b16 %v955
  %v1111 = vpack.c.b16 %v1096, %v1095
  %v1112 = vpack.c.b16 %v1098, %v1097
  %v1113 = vpack.c.b16 %v1100, %v1099
  %v1114 = vpack.c.b16 %v1102, %v1101
  %v1115 = vpack.c.b16 %v1104, %v1103
  %v1116 = vpack.c.b16 %v1106, %v1105
  %v1117 = vpack.c.b16 %v1108, %v1107
  %v1118 = vpack.c.b16 %v1110, %v1109
  %1127 = vmatprep.subr.bf16.mxu0 0
  %1128 = vmatpush1.bf16.msra.mxu0 %v1111
  %1129 = vmatprep.subr.bf16.mxu0 0
  %1130 = vmatpush1.bf16.msra.mxu0 %v1112
  %1131 = vmatprep.subr.bf16.mxu0 0
  %1132 = vmatpush1.bf16.msra.mxu0 %v1113
  %1133 = vmatprep.subr.bf16.mxu0 0
  %1134 = vmatpush1.bf16.msra.mxu0 %v1114
  %1135 = vmatprep.subr.bf16.mxu0 0
  %1136 = vmatpush1.bf16.msra.mxu0 %v1115
  %1137 = vmatprep.subr.bf16.mxu0 0
  %1138 = vmatpush1.bf16.msra.mxu0 %v1116
  %1139 = vmatprep.subr.bf16.mxu0 0
  %1140 = vmatpush1.bf16.msra.mxu0 %v1117
  %1141 = vmatprep.subr.bf16.mxu0 0
  %1142 = vmatpush1.bf16.msra.mxu0 %v1118
  %1143 = vmatprep.subr.bf16.mxu0 0
  %1144 = vmatpush1.bf16.msra.mxu0 0
  %1145 = vmatprep.subr.bf16.mxu0 0
  %1146 = vmatpush1.bf16.msra.mxu0 0
  %1147 = vmatprep.subr.bf16.mxu0 0
  %1148 = vmatpush1.bf16.msra.mxu0 0
  %1149 = vmatprep.subr.bf16.mxu0 0
  %1150 = vmatpush1.bf16.msra.mxu0 0
  %1151 = vmatprep.subr.bf16.mxu0 0
  %1152 = vmatpush1.bf16.msra.mxu0 0
  %1153 = vmatprep.subr.bf16.mxu0 0
  %1154 = vmatpush1.bf16.msra.mxu0 0
  %1155 = vmatprep.subr.bf16.mxu0 0
  %1156 = vmatpush1.bf16.msra.mxu0 0
  %1157 = vmatprep.subr.bf16.mxu0 0
  %1158 = vmatpush1.bf16.msra.mxu0 0
  %1159 = vmatprep.mubr.bf16.mxu0 0
  %1160 = vmatmul.mubr.bf16.gmra.mrb[0].mxu0 %v939
  %v1161 = vpop.f32.mrb[0].mxu0
  %v1162 = vadd.f32 %v1073, %v1161
  %v1163 = vpop.f32.mrb[0].mxu0
  %v1164 = vpop.f32.mrb[0].mxu0
  %v1165 = vadd.f32 %v1076, %v1164
  %v1166 = vpop.f32.mrb[0].mxu0
  %1167 = vdwg.mxu0
  %v1168 = vld [vmem:[#allocation2] sm:$0xfc]
  %v1169 = vld [vmem:[#allocation2 + $0x20] sm:$0x3]
  %v1170 = vpack.c.bf16 %v938, %v1168
  %v1171 = vpack.c.bf16 %v1169, %v1169
  %s1172 = scalar_lea.vmem %s10, 128
  %v1173 = vld [vmem:[%s1172] sm:$0xf]
  %v1174 = vld [vmem:[%s1172 + $0x4] sm:$0xf]
  %v1175 = vld [vmem:[%s1172 + $0x8] sm:$0xf]
  %v1176 = vld [vmem:[%s1172 + $0xc] sm:$0xf]
  %v1177 = vld [vmem:[%s1172 + $0x10] sm:$0xf]
  %v1178 = vld [vmem:[%s1172 + $0x14] sm:$0xf]
  %v1179 = vld [vmem:[%s1172 + $0x18] sm:$0xf]
  %v1180 = vld [vmem:[%s1172 + $0x1c] sm:$0xf]
  %v1181 = vld [vmem:[%s1172 + $0x20] sm:$0xf]
  %v1182 = vld [vmem:[%s1172 + $0x24] sm:$0xf]
  %v1183 = vld [vmem:[%s1172 + $0x28] sm:$0xf]
  %v1184 = vld [vmem:[%s1172 + $0x2c] sm:$0xf]
  %v1185 = vld [vmem:[%s1172 + $0x30] sm:$0xf]
  %v1186 = vld [vmem:[%s1172 + $0x34] sm:$0xf]
  %v1187 = vld [vmem:[%s1172 + $0x38] sm:$0xf]
  %v1188 = vld [vmem:[%s1172 + $0x3c] sm:$0xf]
  %v1191 = vrot.slane %v1170, 1
  %v1192 = vrot.slane %v1171, 1
  %v1193 = vsel %vm758, %v1191, %v1192
  %v1211 = vunpack.c.l.b16 %v1173
  %v1212 = vunpack.c.l.b16 %v1174
  %v1213 = vunpack.c.l.b16 %v1175
  %v1214 = vunpack.c.l.b16 %v1176
  %v1215 = vunpack.c.l.b16 %v1177
  %v1216 = vunpack.c.l.b16 %v1178
  %v1217 = vunpack.c.l.b16 %v1179
  %v1218 = vunpack.c.l.b16 %v1180
  %v1219 = vunpack.c.l.b16 %v1181
  %v1220 = vunpack.c.l.b16 %v1182
  %v1221 = vunpack.c.l.b16 %v1183
  %v1222 = vunpack.c.l.b16 %v1184
  %v1223 = vunpack.c.l.b16 %v1185
  %v1224 = vunpack.c.l.b16 %v1186
  %v1225 = vunpack.c.l.b16 %v1187
  %v1226 = vunpack.c.l.b16 %v1188
  %v1227 = vpack.c.b16 %v1212, %v1211
  %v1228 = vpack.c.b16 %v1214, %v1213
  %v1229 = vpack.c.b16 %v1216, %v1215
  %v1230 = vpack.c.b16 %v1218, %v1217
  %v1231 = vpack.c.b16 %v1220, %v1219
  %v1232 = vpack.c.b16 %v1222, %v1221
  %v1233 = vpack.c.b16 %v1224, %v1223
  %v1234 = vpack.c.b16 %v1226, %v1225
  %1243 = vmatprep.subr.bf16.mxu0 0
  %1244 = vmatpush1.bf16.msra.mxu0 %v1227
  %1245 = vmatprep.subr.bf16.mxu0 0
  %1246 = vmatpush1.bf16.msra.mxu0 %v1228
  %1247 = vmatprep.subr.bf16.mxu0 0
  %1248 = vmatpush1.bf16.msra.mxu0 %v1229
  %1249 = vmatprep.subr.bf16.mxu0 0
  %1250 = vmatpush1.bf16.msra.mxu0 %v1230
  %1251 = vmatprep.subr.bf16.mxu0 0
  %1252 = vmatpush1.bf16.msra.mxu0 %v1231
  %1253 = vmatprep.subr.bf16.mxu0 0
  %1254 = vmatpush1.bf16.msra.mxu0 %v1232
  %1255 = vmatprep.subr.bf16.mxu0 0
  %1256 = vmatpush1.bf16.msra.mxu0 %v1233
  %1257 = vmatprep.subr.bf16.mxu0 0
  %1258 = vmatpush1.bf16.msra.mxu0 %v1234
  %1259 = vmatprep.subr.bf16.mxu0 0
  %1260 = vmatpush1.bf16.msra.mxu0 0
  %1261 = vmatprep.subr.bf16.mxu0 0
  %1262 = vmatpush1.bf16.msra.mxu0 0
  %1263 = vmatprep.subr.bf16.mxu0 0
  %1264 = vmatpush1.bf16.msra.mxu0 0
  %1265 = vmatprep.subr.bf16.mxu0 0
  %1266 = vmatpush1.bf16.msra.mxu0 0
  %1267 = vmatprep.subr.bf16.mxu0 0
  %1268 = vmatpush1.bf16.msra.mxu0 0
  %1269 = vmatprep.subr.bf16.mxu0 0
  %1270 = vmatpush1.bf16.msra.mxu0 0
  %1271 = vmatprep.subr.bf16.mxu0 0
  %1272 = vmatpush1.bf16.msra.mxu0 0
  %1273 = vmatprep.subr.bf16.mxu0 0
  %1274 = vmatpush1.bf16.msra.mxu0 0
  %1275 = vmatprep.mubr.bf16.mxu0 0
  %1276 = vmatmul.mubr.bf16.gmra.mrb[0].mxu0 %v1193
  %v1277 = vpop.f32.mrb[0].mxu0
  %v1278 = vadd.f32 0.0, %v1277
  %v1279 = vpop.f32.mrb[0].mxu0
  %v1280 = vpop.f32.mrb[0].mxu0
  %v1281 = vadd.f32 0.0, %v1280
  %v1282 = vpop.f32.mrb[0].mxu0
  %1283 = vdwg.mxu0
  %v1284 = vadd.f32 %v1162, %v1278
  %v1285 = vadd.f32 %v1165, %v1281
  %v1286 = vld [vmem:[%s11] sm:$0x3]
  %v1288 = vlaneseq
  %v1289 = vshrl.u32 %v1288, 7
  %v1290 = vsub.s32 0, %v1289
  %v1291 = vrot.slane %v1286, %v1290
  %v1292 = vlaneseq
  %v1293 = vshrl.u32 %v1292, 7
  %v1294 = vsub.s32 1, %v1293
  %v1295 = vrot.slane %v1286, %v1294
  %v1298 = vmul.f32 %v272, %v1291
  %v1299 = vmul.f32 %v264, %v1295
  %v1300 = vmul.f32 %v273, %v1291
  %v1301 = vmul.f32 %v269, %v1295
  %v1302 = vld [vmem:[%s12] sm:$0x3]
  %v1304 = vlaneseq
  %v1305 = vshrl.u32 %v1304, 7
  %v1306 = vsub.s32 0, %v1305
  %v1307 = vrot.slane %v1302, %v1306
  %v1308 = vlaneseq
  %v1309 = vshrl.u32 %v1308, 7
  %v1310 = vsub.s32 1, %v1309
  %v1311 = vrot.slane %v1302, %v1310
  %v1314 = vadd.f32 %v1298, %v1307
  %v1315 = vadd.f32 %v1299, %v1311
  %v1316 = vadd.f32 %v1300, %v1307
  %v1317 = vadd.f32 %v1301, %v1311
  %v1318 = vmax.f32 %v1314, 0.0
  %v1319 = vmax.f32 %v1315, 0.0
  %v1320 = vmax.f32 %v1316, 0.0
  %v1321 = vmax.f32 %v1317, 0.0
  %v1322 = vpack.c.bf16 %v1320, %v1318
  %v1323 = vpack.c.bf16 %v1321, %v1319
  %v1324 = vld [vmem:[%s13] sm:$0xf]
  %v1325 = vld [vmem:[%s13 + $0x4] sm:$0xf]
  %v1326 = vld [vmem:[%s13 + $0x8] sm:$0xf]
  %v1327 = vld [vmem:[%s13 + $0xc] sm:$0xf]
  %v1328 = vld [vmem:[%s13 + $0x10] sm:$0xf]
  %v1329 = vld [vmem:[%s13 + $0x14] sm:$0xf]
  %v1330 = vld [vmem:[%s13 + $0x18] sm:$0xf]
  %v1331 = vld [vmem:[%s13 + $0x1c] sm:$0xf]
  %v1332 = vld [vmem:[%s13 + $0x20] sm:$0xf]
  %v1333 = vld [vmem:[%s13 + $0x24] sm:$0xf]
  %v1334 = vld [vmem:[%s13 + $0x28] sm:$0xf]
  %v1335 = vld [vmem:[%s13 + $0x2c] sm:$0xf]
  %v1336 = vld [vmem:[%s13 + $0x30] sm:$0xf]
  %v1337 = vld [vmem:[%s13 + $0x34] sm:$0xf]
  %v1338 = vld [vmem:[%s13 + $0x38] sm:$0xf]
  %v1339 = vld [vmem:[%s13 + $0x3c] sm:$0xf]
  %v1340 = vld [vmem:[%s13 + $0x40] sm:$0xf]
  %v1341 = vld [vmem:[%s13 + $0x44] sm:$0xf]
  %v1342 = vld [vmem:[%s13 + $0x48] sm:$0xf]
  %v1343 = vld [vmem:[%s13 + $0x4c] sm:$0xf]
  %v1344 = vld [vmem:[%s13 + $0x50] sm:$0xf]
  %v1345 = vld [vmem:[%s13 + $0x54] sm:$0xf]
  %v1346 = vld [vmem:[%s13 + $0x58] sm:$0xf]
  %v1347 = vld [vmem:[%s13 + $0x5c] sm:$0xf]
  %v1348 = vld [vmem:[%s13 + $0x60] sm:$0xf]
  %v1349 = vld [vmem:[%s13 + $0x64] sm:$0xf]
  %v1350 = vld [vmem:[%s13 + $0x68] sm:$0xf]
  %v1351 = vld [vmem:[%s13 + $0x6c] sm:$0xf]
  %v1352 = vld [vmem:[%s13 + $0x70] sm:$0xf]
  %v1353 = vld [vmem:[%s13 + $0x74] sm:$0xf]
  %v1354 = vld [vmem:[%s13 + $0x78] sm:$0xf]
  %v1355 = vld [vmem:[%s13 + $0x7c] sm:$0xf]
  %v1388 = vunpack.c.l.b16 %v1324
  %v1389 = vunpack.c.l.b16 %v1325
  %v1390 = vunpack.c.l.b16 %v1326
  %v1391 = vunpack.c.l.b16 %v1327
  %v1392 = vunpack.c.l.b16 %v1328
  %v1393 = vunpack.c.l.b16 %v1329
  %v1394 = vunpack.c.l.b16 %v1330
  %v1395 = vunpack.c.l.b16 %v1331
  %v1396 = vunpack.c.l.b16 %v1332
  %v1397 = vunpack.c.l.b16 %v1333
  %v1398 = vunpack.c.l.b16 %v1334
  %v1399 = vunpack.c.l.b16 %v1335
  %v1400 = vunpack.c.l.b16 %v1336
  %v1401 = vunpack.c.l.b16 %v1337
  %v1402 = vunpack.c.l.b16 %v1338
  %v1403 = vunpack.c.l.b16 %v1339
  %v1404 = vunpack.c.l.b16 %v1340
  %v1405 = vunpack.c.l.b16 %v1341
  %v1406 = vunpack.c.l.b16 %v1342
  %v1407 = vunpack.c.l.b16 %v1343
  %v1408 = vunpack.c.l.b16 %v1344
  %v1409 = vunpack.c.l.b16 %v1345
  %v1410 = vunpack.c.l.b16 %v1346
  %v1411 = vunpack.c.l.b16 %v1347
  %v1412 = vunpack.c.l.b16 %v1348
  %v1413 = vunpack.c.l.b16 %v1349
  %v1414 = vunpack.c.l.b16 %v1350
  %v1415 = vunpack.c.l.b16 %v1351
  %v1416 = vunpack.c.l.b16 %v1352
  %v1417 = vunpack.c.l.b16 %v1353
  %v1418 = vunpack.c.l.b16 %v1354
  %v1419 = vunpack.c.l.b16 %v1355
  %v1420 = vpack.c.b16 %v1389, %v1388
  %v1421 = vpack.c.b16 %v1391, %v1390
  %v1422 = vpack.c.b16 %v1393, %v1392
  %v1423 = vpack.c.b16 %v1395, %v1394
  %v1424 = vpack.c.b16 %v1397, %v1396
  %v1425 = vpack.c.b16 %v1399, %v1398
  %v1426 = vpack.c.b16 %v1401, %v1400
  %v1427 = vpack.c.b16 %v1403, %v1402
  %v1428 = vpack.c.b16 %v1405, %v1404
  %v1429 = vpack.c.b16 %v1407, %v1406
  %v1430 = vpack.c.b16 %v1409, %v1408
  %v1431 = vpack.c.b16 %v1411, %v1410
  %v1432 = vpack.c.b16 %v1413, %v1412
  %v1433 = vpack.c.b16 %v1415, %v1414
  %v1434 = vpack.c.b16 %v1417, %v1416
  %v1435 = vpack.c.b16 %v1419, %v1418
  %1452 = vmatprep.subr.bf16.mxu0 0
  %1453 = vmatpush1.bf16.msra.mxu0 %v1420
  %1454 = vmatprep.subr.bf16.mxu0 0
  %1455 = vmatpush1.bf16.msra.mxu0 %v1421
  %1456 = vmatprep.subr.bf16.mxu0 0
  %1457 = vmatpush1.bf16.msra.mxu0 %v1422
  %1458 = vmatprep.subr.bf16.mxu0 0
  %1459 = vmatpush1.bf16.msra.mxu0 %v1423
  %1460 = vmatprep.subr.bf16.mxu0 0
  %1461 = vmatpush1.bf16.msra.mxu0 %v1424
  %1462 = vmatprep.subr.bf16.mxu0 0
  %1463 = vmatpush1.bf16.msra.mxu0 %v1425
  %1464 = vmatprep.subr.bf16.mxu0 0
  %1465 = vmatpush1.bf16.msra.mxu0 %v1426
  %1466 = vmatprep.subr.bf16.mxu0 0
  %1467 = vmatpush1.bf16.msra.mxu0 %v1427
  %1468 = vmatprep.subr.bf16.mxu0 0
  %1469 = vmatpush1.bf16.msra.mxu0 %v1428
  %1470 = vmatprep.subr.bf16.mxu0 0
  %1471 = vmatpush1.bf16.msra.mxu0 %v1429
  %1472 = vmatprep.subr.bf16.mxu0 0
  %1473 = vmatpush1.bf16.msra.mxu0 %v1430
  %1474 = vmatprep.subr.bf16.mxu0 0
  %1475 = vmatpush1.bf16.msra.mxu0 %v1431
  %1476 = vmatprep.subr.bf16.mxu0 0
  %1477 = vmatpush1.bf16.msra.mxu0 %v1432
  %1478 = vmatprep.subr.bf16.mxu0 0
  %1479 = vmatpush1.bf16.msra.mxu0 %v1433
  %1480 = vmatprep.subr.bf16.mxu0 0
  %1481 = vmatpush1.bf16.msra.mxu0 %v1434
  %1482 = vmatprep.subr.bf16.mxu0 0
  %1483 = vmatpush1.bf16.msra.mxu0 %v1435
  %1484 = vmatprep.mubr.bf16.mxu0 %v1323
  %1485 = vmatmul.mubr.bf16.gmra.mrb[0].mxu0 %v1322
  %v1486 = vpop.f32.mrb[0].mxu0
  %v1487 = vadd.f32 0.0, %v1486
  %v1488 = vpop.f32.mrb[0].mxu0
  %v1489 = vpop.f32.mrb[0].mxu0
  %v1490 = vadd.f32 0.0, %v1489
  %v1491 = vpop.f32.mrb[0].mxu0
  %1492 = vdwg.mxu0
  %v1493 = vadd.f32 %v1284, %v1487
  %v1494 = vadd.f32 %v1285, %v1490
  %v1495 = vld [vmem:[%s14] sm:$0x1]
  %v1497 = vlaneseq
  %v1498 = vshrl.u32 %v1497, 7
  %v1499 = vsub.s32 0, %v1498
  %v1500 = vrot.slane %v1495, %v1499
  %v1502 = vmul.f32 %v1493, %v1500
  %v1503 = vmul.f32 %v1494, %v1500
  %v1504 = vld [vmem:[%s15] sm:$0x1]
  %v1506 = vlaneseq
  %v1507 = vshrl.u32 %v1506, 7
  %v1508 = vsub.s32 0, %v1507
  %v1509 = vrot.slane %v1504, %v1508
  %v1511 = vadd.f32 %v1502, %v1509
  %v1512 = vadd.f32 %v1503, %v1509
  %v1513 = vmax.f32 %v1511, 0.0
  %v1514 = vmax.f32 %v1512, 0.0
  %v1517 = vrot.slane %v1513, 7
  %v1518 = vrot.slane %v1514, 7
  %v1519 = vsel %vm314, %v1517, %v1518
  %1523 = vst [vmem:[#allocation2] sm:$0xfe] %v1517
  %1524 = vst [vmem:[#allocation2 + $0x10] sm:$0xff] %v1519
  %1525 = vst [vmem:[#allocation2 + $0x20] sm:$0x1] %v1518
  %v1526 = vld [vmem:[#allocation2] sm:$0xff]
  %v1527 = vld [vmem:[#allocation2 + $0x10] sm:$0xff]
  %v1528 = vpack.c.bf16 %v1527, %v1526
  %v1529 = vld [vmem:[%s16] sm:$0xf]
  %v1530 = vld [vmem:[%s16 + $0x4] sm:$0xf]
  %v1531 = vld [vmem:[%s16 + $0x8] sm:$0xf]
  %v1532 = vld [vmem:[%s16 + $0xc] sm:$0xf]
  %v1533 = vld [vmem:[%s16 + $0x10] sm:$0xf]
  %v1534 = vld [vmem:[%s16 + $0x14] sm:$0xf]
  %v1535 = vld [vmem:[%s16 + $0x18] sm:$0xf]
  %v1536 = vld [vmem:[%s16 + $0x1c] sm:$0xf]
  %v1537 = vld [vmem:[%s16 + $0x20] sm:$0xf]
  %v1538 = vld [vmem:[%s16 + $0x24] sm:$0xf]
  %v1539 = vld [vmem:[%s16 + $0x28] sm:$0xf]
  %v1540 = vld [vmem:[%s16 + $0x2c] sm:$0xf]
  %v1541 = vld [vmem:[%s16 + $0x30] sm:$0xf]
  %v1542 = vld [vmem:[%s16 + $0x34] sm:$0xf]
  %v1543 = vld [vmem:[%s16 + $0x38] sm:$0xf]
  %v1544 = vld [vmem:[%s16 + $0x3c] sm:$0xf]
  %v1545 = vld [vmem:[#allocation2] sm:$0xfe]
  %v1546 = vld [vmem:[#allocation2 + $0x20] sm:$0x1]
  %v1547 = vpack.c.bf16 %v1527, %v1545
  %v1548 = vpack.c.bf16 %v1546, %v1546
  %s1549 = scalar_lea.vmem %s16, 64
  %v1550 = vld [vmem:[%s1549] sm:$0xf]
  %v1551 = vld [vmem:[%s1549 + $0x4] sm:$0xf]
  %v1552 = vld [vmem:[%s1549 + $0x8] sm:$0xf]
  %v1553 = vld [vmem:[%s1549 + $0xc] sm:$0xf]
  %v1554 = vld [vmem:[%s1549 + $0x10] sm:$0xf]
  %v1555 = vld [vmem:[%s1549 + $0x14] sm:$0xf]
  %v1556 = vld [vmem:[%s1549 + $0x18] sm:$0xf]
  %v1557 = vld [vmem:[%s1549 + $0x1c] sm:$0xf]
  %v1558 = vld [vmem:[%s1549 + $0x20] sm:$0xf]
  %v1559 = vld [vmem:[%s1549 + $0x24] sm:$0xf]
  %v1560 = vld [vmem:[%s1549 + $0x28] sm:$0xf]
  %v1561 = vld [vmem:[%s1549 + $0x2c] sm:$0xf]
  %v1562 = vld [vmem:[%s1549 + $0x30] sm:$0xf]
  %v1563 = vld [vmem:[%s1549 + $0x34] sm:$0xf]
  %v1564 = vld [vmem:[%s1549 + $0x38] sm:$0xf]
  %v1565 = vld [vmem:[%s1549 + $0x3c] sm:$0xf]
  %v1567 = vshrl.u32 %v1547, 16
  %v1569 = vshll.u32 %v1547, 16
  %v1571 = vrot.slane %v1569, 1
  %v1572 = vor.u32 %v1567, %v1571
  %v1574 = vshll.u32 %v1548, 16
  %v1576 = vrot.slane %v1574, 1
  %v1577 = vsel %vm412, %v1572, %v1576
  %v1595 = vunpack.c.l.b16 %v1550
  %v1596 = vunpack.c.l.b16 %v1551
  %v1597 = vunpack.c.l.b16 %v1552
  %v1598 = vunpack.c.l.b16 %v1553
  %v1599 = vunpack.c.l.b16 %v1554
  %v1600 = vunpack.c.l.b16 %v1555
  %v1601 = vunpack.c.l.b16 %v1556
  %v1602 = vunpack.c.l.b16 %v1557
  %v1603 = vunpack.c.l.b16 %v1558
  %v1604 = vunpack.c.l.b16 %v1559
  %v1605 = vunpack.c.l.b16 %v1560
  %v1606 = vunpack.c.l.b16 %v1561
  %v1607 = vunpack.c.l.b16 %v1562
  %v1608 = vunpack.c.l.b16 %v1563
  %v1609 = vunpack.c.l.b16 %v1564
  %v1610 = vunpack.c.l.b16 %v1565
  %v1611 = vpack.c.b16 %v1596, %v1595
  %v1612 = vpack.c.b16 %v1598, %v1597
  %v1613 = vpack.c.b16 %v1600, %v1599
  %v1614 = vpack.c.b16 %v1602, %v1601
  %v1615 = vpack.c.b16 %v1604, %v1603
  %v1616 = vpack.c.b16 %v1606, %v1605
  %v1617 = vpack.c.b16 %v1608, %v1607
  %v1618 = vpack.c.b16 %v1610, %v1609
  %1627 = vmatprep.subr.bf16.mxu0 0
  %1628 = vmatpush1.bf16.msra.mxu0 %v1611
  %1629 = vmatprep.subr.bf16.mxu0 0
  %1630 = vmatpush1.bf16.msra.mxu0 %v1612
  %1631 = vmatprep.subr.bf16.mxu0 0
  %1632 = vmatpush1.bf16.msra.mxu0 %v1613
  %1633 = vmatprep.subr.bf16.mxu0 0
  %1634 = vmatpush1.bf16.msra.mxu0 %v1614
  %1635 = vmatprep.subr.bf16.mxu0 0
  %1636 = vmatpush1.bf16.msra.mxu0 %v1615
  %1637 = vmatprep.subr.bf16.mxu0 0
  %1638 = vmatpush1.bf16.msra.mxu0 %v1616
  %1639 = vmatprep.subr.bf16.mxu0 0
  %1640 = vmatpush1.bf16.msra.mxu0 %v1617
  %1641 = vmatprep.subr.bf16.mxu0 0
  %1642 = vmatpush1.bf16.msra.mxu0 %v1618
  %1643 = vmatprep.subr.bf16.mxu0 0
  %1644 = vmatpush1.bf16.msra.mxu0 0
  %1645 = vmatprep.subr.bf16.mxu0 0
  %1646 = vmatpush1.bf16.msra.mxu0 0
  %1647 = vmatprep.subr.bf16.mxu0 0
  %1648 = vmatpush1.bf16.msra.mxu0 0
  %1649 = vmatprep.subr.bf16.mxu0 0
  %1650 = vmatpush1.bf16.msra.mxu0 0
  %1651 = vmatprep.subr.bf16.mxu0 0
  %1652 = vmatpush1.bf16.msra.mxu0 0
  %1653 = vmatprep.subr.bf16.mxu0 0
  %1654 = vmatpush1.bf16.msra.mxu0 0
  %1655 = vmatprep.subr.bf16.mxu0 0
  %1656 = vmatpush1.bf16.msra.mxu0 0
  %1657 = vmatprep.subr.bf16.mxu0 0
  %1658 = vmatpush1.bf16.msra.mxu0 0
  %1659 = vmatprep.mubr.bf16.mxu0 0
  %1660 = vmatmul.mubr.bf16.gmra.mrb[0].mxu0 %v1577
  %v1661 = vpop.f32.mrb[0].mxu0
  %v1662 = vadd.f32 0.0, %v1661
  %v1663 = vpop.f32.mrb[0].mxu0
  %v1664 = vpop.f32.mrb[0].mxu0
  %v1665 = vadd.f32 0.0, %v1664
  %v1666 = vpop.f32.mrb[0].mxu0
  %1667 = vdwg.mxu0
  %v1684 = vunpack.c.l.b16 %v1529
  %v1685 = vunpack.c.l.b16 %v1530
  %v1686 = vunpack.c.l.b16 %v1531
  %v1687 = vunpack.c.l.b16 %v1532
  %v1688 = vunpack.c.l.b16 %v1533
  %v1689 = vunpack.c.l.b16 %v1534
  %v1690 = vunpack.c.l.b16 %v1535
  %v1691 = vunpack.c.l.b16 %v1536
  %v1692 = vunpack.c.l.b16 %v1537
  %v1693 = vunpack.c.l.b16 %v1538
  %v1694 = vunpack.c.l.b16 %v1539
  %v1695 = vunpack.c.l.b16 %v1540
  %v1696 = vunpack.c.l.b16 %v1541
  %v1697 = vunpack.c.l.b16 %v1542
  %v1698 = vunpack.c.l.b16 %v1543
  %v1699 = vunpack.c.l.b16 %v1544
  %v1700 = vpack.c.b16 %v1685, %v1684
  %v1701 = vpack.c.b16 %v1687, %v1686
  %v1702 = vpack.c.b16 %v1689, %v1688
  %v1703 = vpack.c.b16 %v1691, %v1690
  %v1704 = vpack.c.b16 %v1693, %v1692
  %v1705 = vpack.c.b16 %v1695, %v1694
  %v1706 = vpack.c.b16 %v1697, %v1696
  %v1707 = vpack.c.b16 %v1699, %v1698
  %1716 = vmatprep.subr.bf16.mxu0 0
  %1717 = vmatpush1.bf16.msra.mxu0 %v1700
  %1718 = vmatprep.subr.bf16.mxu0 0
  %1719 = vmatpush1.bf16.msra.mxu0 %v1701
  %1720 = vmatprep.subr.bf16.mxu0 0
  %1721 = vmatpush1.bf16.msra.mxu0 %v1702
  %1722 = vmatprep.subr.bf16.mxu0 0
  %1723 = vmatpush1.bf16.msra.mxu0 %v1703
  %1724 = vmatprep.subr.bf16.mxu0 0
  %1725 = vmatpush1.bf16.msra.mxu0 %v1704
  %1726 = vmatprep.subr.bf16.mxu0 0
  %1727 = vmatpush1.bf16.msra.mxu0 %v1705
  %1728 = vmatprep.subr.bf16.mxu0 0
  %1729 = vmatpush1.bf16.msra.mxu0 %v1706
  %1730 = vmatprep.subr.bf16.mxu0 0
  %1731 = vmatpush1.bf16.msra.mxu0 %v1707
  %1732 = vmatprep.subr.bf16.mxu0 0
  %1733 = vmatpush1.bf16.msra.mxu0 0
  %1734 = vmatprep.subr.bf16.mxu0 0
  %1735 = vmatpush1.bf16.msra.mxu0 0
  %1736 = vmatprep.subr.bf16.mxu0 0
  %1737 = vmatpush1.bf16.msra.mxu0 0
  %1738 = vmatprep.subr.bf16.mxu0 0
  %1739 = vmatpush1.bf16.msra.mxu0 0
  %1740 = vmatprep.subr.bf16.mxu0 0
  %1741 = vmatpush1.bf16.msra.mxu0 0
  %1742 = vmatprep.subr.bf16.mxu0 0
  %1743 = vmatpush1.bf16.msra.mxu0 0
  %1744 = vmatprep.subr.bf16.mxu0 0
  %1745 = vmatpush1.bf16.msra.mxu0 0
  %1746 = vmatprep.subr.bf16.mxu0 0
  %1747 = vmatpush1.bf16.msra.mxu0 0
  %1748 = vmatprep.mubr.bf16.mxu0 0
  %1749 = vmatmul.mubr.bf16.gmra.mrb[0].mxu0 %v1528
  %v1750 = vpop.f32.mrb[0].mxu0
  %v1751 = vadd.f32 %v1662, %v1750
  %v1752 = vpop.f32.mrb[0].mxu0
  %v1753 = vpop.f32.mrb[0].mxu0
  %v1754 = vadd.f32 %v1665, %v1753
  %v1755 = vpop.f32.mrb[0].mxu0
  %1756 = vdwg.mxu0
  %v1757 = vld [vmem:[#allocation2] sm:$0xfc]
  %v1758 = vld [vmem:[#allocation2 + $0x20] sm:$0x3]
  %v1759 = vpack.c.bf16 %v1527, %v1757
  %v1760 = vpack.c.bf16 %v1758, %v1758
  %s1761 = scalar_lea.vmem %s16, 128
  %v1762 = vld [vmem:[%s1761] sm:$0xf]
  %v1763 = vld [vmem:[%s1761 + $0x4] sm:$0xf]
  %v1764 = vld [vmem:[%s1761 + $0x8] sm:$0xf]
  %v1765 = vld [vmem:[%s1761 + $0xc] sm:$0xf]
  %v1766 = vld [vmem:[%s1761 + $0x10] sm:$0xf]
  %v1767 = vld [vmem:[%s1761 + $0x14] sm:$0xf]
  %v1768 = vld [vmem:[%s1761 + $0x18] sm:$0xf]
  %v1769 = vld [vmem:[%s1761 + $0x1c] sm:$0xf]
  %v1770 = vld [vmem:[%s1761 + $0x20] sm:$0xf]
  %v1771 = vld [vmem:[%s1761 + $0x24] sm:$0xf]
  %v1772 = vld [vmem:[%s1761 + $0x28] sm:$0xf]
  %v1773 = vld [vmem:[%s1761 + $0x2c] sm:$0xf]
  %v1774 = vld [vmem:[%s1761 + $0x30] sm:$0xf]
  %v1775 = vld [vmem:[%s1761 + $0x34] sm:$0xf]
  %v1776 = vld [vmem:[%s1761 + $0x38] sm:$0xf]
  %v1777 = vld [vmem:[%s1761 + $0x3c] sm:$0xf]
  %v1780 = vrot.slane %v1759, 1
  %v1781 = vrot.slane %v1760, 1
  %v1782 = vsel %vm758, %v1780, %v1781
  %v1800 = vunpack.c.l.b16 %v1762
  %v1801 = vunpack.c.l.b16 %v1763
  %v1802 = vunpack.c.l.b16 %v1764
  %v1803 = vunpack.c.l.b16 %v1765
  %v1804 = vunpack.c.l.b16 %v1766
  %v1805 = vunpack.c.l.b16 %v1767
  %v1806 = vunpack.c.l.b16 %v1768
  %v1807 = vunpack.c.l.b16 %v1769
  %v1808 = vunpack.c.l.b16 %v1770
  %v1809 = vunpack.c.l.b16 %v1771
  %v1810 = vunpack.c.l.b16 %v1772
  %v1811 = vunpack.c.l.b16 %v1773
  %v1812 = vunpack.c.l.b16 %v1774
  %v1813 = vunpack.c.l.b16 %v1775
  %v1814 = vunpack.c.l.b16 %v1776
  %v1815 = vunpack.c.l.b16 %v1777
  %v1816 = vpack.c.b16 %v1801, %v1800
  %v1817 = vpack.c.b16 %v1803, %v1802
  %v1818 = vpack.c.b16 %v1805, %v1804
  %v1819 = vpack.c.b16 %v1807, %v1806
  %v1820 = vpack.c.b16 %v1809, %v1808
  %v1821 = vpack.c.b16 %v1811, %v1810
  %v1822 = vpack.c.b16 %v1813, %v1812
  %v1823 = vpack.c.b16 %v1815, %v1814
  %1832 = vmatprep.subr.bf16.mxu0 0
  %1833 = vmatpush1.bf16.msra.mxu0 %v1816
  %1834 = vmatprep.subr.bf16.mxu0 0
  %1835 = vmatpush1.bf16.msra.mxu0 %v1817
  %1836 = vmatprep.subr.bf16.mxu0 0
  %1837 = vmatpush1.bf16.msra.mxu0 %v1818
  %1838 = vmatprep.subr.bf16.mxu0 0
  %1839 = vmatpush1.bf16.msra.mxu0 %v1819
  %1840 = vmatprep.subr.bf16.mxu0 0
  %1841 = vmatpush1.bf16.msra.mxu0 %v1820
  %1842 = vmatprep.subr.bf16.mxu0 0
  %1843 = vmatpush1.bf16.msra.mxu0 %v1821
  %1844 = vmatprep.subr.bf16.mxu0 0
  %1845 = vmatpush1.bf16.msra.mxu0 %v1822
  %1846 = vmatprep.subr.bf16.mxu0 0
  %1847 = vmatpush1.bf16.msra.mxu0 %v1823
  %1848 = vmatprep.subr.bf16.mxu0 0
  %1849 = vmatpush1.bf16.msra.mxu0 0
  %1850 = vmatprep.subr.bf16.mxu0 0
  %1851 = vmatpush1.bf16.msra.mxu0 0
  %1852 = vmatprep.subr.bf16.mxu0 0
  %1853 = vmatpush1.bf16.msra.mxu0 0
  %1854 = vmatprep.subr.bf16.mxu0 0
  %1855 = vmatpush1.bf16.msra.mxu0 0
  %1856 = vmatprep.subr.bf16.mxu0 0
  %1857 = vmatpush1.bf16.msra.mxu0 0
  %1858 = vmatprep.subr.bf16.mxu0 0
  %1859 = vmatpush1.bf16.msra.mxu0 0
  %1860 = vmatprep.subr.bf16.mxu0 0
  %1861 = vmatpush1.bf16.msra.mxu0 0
  %1862 = vmatprep.subr.bf16.mxu0 0
  %1863 = vmatpush1.bf16.msra.mxu0 0
  %1864 = vmatprep.mubr.bf16.mxu0 0
  %1865 = vmatmul.mubr.bf16.gmra.mrb[0].mxu0 %v1782
  %v1866 = vpop.f32.mrb[0].mxu0
  %v1867 = vadd.f32 0.0, %v1866
  %v1868 = vpop.f32.mrb[0].mxu0
  %v1869 = vpop.f32.mrb[0].mxu0
  %v1870 = vadd.f32 0.0, %v1869
  %v1871 = vpop.f32.mrb[0].mxu0
  %1872 = vdwg.mxu0
  %v1873 = vadd.f32 %v1751, %v1867
  %v1874 = vadd.f32 %v1754, %v1870
  %v1875 = vld [vmem:[%s17] sm:$0x1]
  %v1877 = vlaneseq
  %v1878 = vshrl.u32 %v1877, 7
  %v1879 = vsub.s32 0, %v1878
  %v1880 = vrot.slane %v1875, %v1879
  %v1882 = vmul.f32 %v1873, %v1880
  %v1883 = vmul.f32 %v1874, %v1880
  %v1884 = vld [vmem:[%s18] sm:$0x1]
  %v1886 = vlaneseq
  %v1887 = vshrl.u32 %v1886, 7
  %v1888 = vsub.s32 0, %v1887
  %v1889 = vrot.slane %v1884, %v1888
  %v1891 = vadd.f32 %v1882, %v1889
  %v1892 = vadd.f32 %v1883, %v1889
  %v1893 = vmax.f32 %v1891, 0.0
  %v1894 = vmax.f32 %v1892, 0.0
  %v1897 = vrot.slane %v1893, 7
  %v1898 = vrot.slane %v1894, 7
  %v1899 = vsel %vm314, %v1897, %v1898
  %1903 = vst [vmem:[#allocation2] sm:$0xfe] %v1897
  %1904 = vst [vmem:[#allocation2 + $0x10] sm:$0xff] %v1899
  %1905 = vst [vmem:[#allocation2 + $0x20] sm:$0x1] %v1898
  %v1906 = vld [vmem:[#allocation2] sm:$0xff]
  %v1907 = vld [vmem:[#allocation2 + $0x10] sm:$0xff]
  %v1908 = vpack.c.bf16 %v1907, %v1906
  %v1909 = vld [vmem:[%s19] sm:$0xf]
  %v1910 = vld [vmem:[%s19 + $0x4] sm:$0xf]
  %v1911 = vld [vmem:[%s19 + $0x8] sm:$0xf]
  %v1912 = vld [vmem:[%s19 + $0xc] sm:$0xf]
  %v1913 = vld [vmem:[%s19 + $0x10] sm:$0xf]
  %v1914 = vld [vmem:[%s19 + $0x14] sm:$0xf]
  %v1915 = vld [vmem:[%s19 + $0x18] sm:$0xf]
  %v1916 = vld [vmem:[%s19 + $0x1c] sm:$0xf]
  %v1917 = vld [vmem:[%s19 + $0x20] sm:$0xf]
  %v1918 = vld [vmem:[%s19 + $0x24] sm:$0xf]
  %v1919 = vld [vmem:[%s19 + $0x28] sm:$0xf]
  %v1920 = vld [vmem:[%s19 + $0x2c] sm:$0xf]
  %v1921 = vld [vmem:[%s19 + $0x30] sm:$0xf]
  %v1922 = vld [vmem:[%s19 + $0x34] sm:$0xf]
  %v1923 = vld [vmem:[%s19 + $0x38] sm:$0xf]
  %v1924 = vld [vmem:[%s19 + $0x3c] sm:$0xf]
  %v1925 = vld [vmem:[#allocation2] sm:$0xfe]
  %v1926 = vld [vmem:[#allocation2 + $0x20] sm:$0x1]
  %v1927 = vpack.c.bf16 %v1907, %v1925
  %v1928 = vpack.c.bf16 %v1926, %v1926
  %s1929 = scalar_lea.vmem %s19, 64
  %v1930 = vld [vmem:[%s1929] sm:$0xf]
  %v1931 = vld [vmem:[%s1929 + $0x4] sm:$0xf]
  %v1932 = vld [vmem:[%s1929 + $0x8] sm:$0xf]
  %v1933 = vld [vmem:[%s1929 + $0xc] sm:$0xf]
  %v1934 = vld [vmem:[%s1929 + $0x10] sm:$0xf]
  %v1935 = vld [vmem:[%s1929 + $0x14] sm:$0xf]
  %v1936 = vld [vmem:[%s1929 + $0x18] sm:$0xf]
  %v1937 = vld [vmem:[%s1929 + $0x1c] sm:$0xf]
  %v1938 = vld [vmem:[%s1929 + $0x20] sm:$0xf]
  %v1939 = vld [vmem:[%s1929 + $0x24] sm:$0xf]
  %v1940 = vld [vmem:[%s1929 + $0x28] sm:$0xf]
  %v1941 = vld [vmem:[%s1929 + $0x2c] sm:$0xf]
  %v1942 = vld [vmem:[%s1929 + $0x30] sm:$0xf]
  %v1943 = vld [vmem:[%s1929 + $0x34] sm:$0xf]
  %v1944 = vld [vmem:[%s1929 + $0x38] sm:$0xf]
  %v1945 = vld [vmem:[%s1929 + $0x3c] sm:$0xf]
  %v1947 = vshrl.u32 %v1927, 16
  %v1949 = vshll.u32 %v1927, 16
  %v1951 = vrot.slane %v1949, 1
  %v1952 = vor.u32 %v1947, %v1951
  %v1954 = vshll.u32 %v1928, 16
  %v1956 = vrot.slane %v1954, 1
  %v1957 = vsel %vm412, %v1952, %v1956
  %v1975 = vunpack.c.l.b16 %v1930
  %v1976 = vunpack.c.l.b16 %v1931
  %v1977 = vunpack.c.l.b16 %v1932
  %v1978 = vunpack.c.l.b16 %v1933
  %v1979 = vunpack.c.l.b16 %v1934
  %v1980 = vunpack.c.l.b16 %v1935
  %v1981 = vunpack.c.l.b16 %v1936
  %v1982 = vunpack.c.l.b16 %v1937
  %v1983 = vunpack.c.l.b16 %v1938
  %v1984 = vunpack.c.l.b16 %v1939
  %v1985 = vunpack.c.l.b16 %v1940
  %v1986 = vunpack.c.l.b16 %v1941
  %v1987 = vunpack.c.l.b16 %v1942
  %v1988 = vunpack.c.l.b16 %v1943
  %v1989 = vunpack.c.l.b16 %v1944
  %v1990 = vunpack.c.l.b16 %v1945
  %v1991 = vpack.c.b16 %v1976, %v1975
  %v1992 = vpack.c.b16 %v1978, %v1977
  %v1993 = vpack.c.b16 %v1980, %v1979
  %v1994 = vpack.c.b16 %v1982, %v1981
  %v1995 = vpack.c.b16 %v1984, %v1983
  %v1996 = vpack.c.b16 %v1986, %v1985
  %v1997 = vpack.c.b16 %v1988, %v1987
  %v1998 = vpack.c.b16 %v1990, %v1989
  %2007 = vmatprep.subr.bf16.mxu0 0
  %2008 = vmatpush1.bf16.msra.mxu0 %v1991
  %2009 = vmatprep.subr.bf16.mxu0 0
  %2010 = vmatpush1.bf16.msra.mxu0 %v1992
  %2011 = vmatprep.subr.bf16.mxu0 0
  %2012 = vmatpush1.bf16.msra.mxu0 %v1993
  %2013 = vmatprep.subr.bf16.mxu0 0
  %2014 = vmatpush1.bf16.msra.mxu0 %v1994
  %2015 = vmatprep.subr.bf16.mxu0 0
  %2016 = vmatpush1.bf16.msra.mxu0 %v1995
  %2017 = vmatprep.subr.bf16.mxu0 0
  %2018 = vmatpush1.bf16.msra.mxu0 %v1996
  %2019 = vmatprep.subr.bf16.mxu0 0
  %2020 = vmatpush1.bf16.msra.mxu0 %v1997
  %2021 = vmatprep.subr.bf16.mxu0 0
  %2022 = vmatpush1.bf16.msra.mxu0 %v1998
  %2023 = vmatprep.subr.bf16.mxu0 0
  %2024 = vmatpush1.bf16.msra.mxu0 0
  %2025 = vmatprep.subr.bf16.mxu0 0
  %2026 = vmatpush1.bf16.msra.mxu0 0
  %2027 = vmatprep.subr.bf16.mxu0 0
  %2028 = vmatpush1.bf16.msra.mxu0 0
  %2029 = vmatprep.subr.bf16.mxu0 0
  %2030 = vmatpush1.bf16.msra.mxu0 0
  %2031 = vmatprep.subr.bf16.mxu0 0
  %2032 = vmatpush1.bf16.msra.mxu0 0
  %2033 = vmatprep.subr.bf16.mxu0 0
  %2034 = vmatpush1.bf16.msra.mxu0 0
  %2035 = vmatprep.subr.bf16.mxu0 0
  %2036 = vmatpush1.bf16.msra.mxu0 0
  %2037 = vmatprep.subr.bf16.mxu0 0
  %2038 = vmatpush1.bf16.msra.mxu0 0
  %2039 = vmatprep.mubr.bf16.mxu0 0
  %2040 = vmatmul.mubr.bf16.gmra.mrb[0].mxu0 %v1957
  %v2041 = vpop.f32.mrb[0].mxu0
  %v2042 = vadd.f32 0.0, %v2041
  %v2043 = vpop.f32.mrb[0].mxu0
  %v2044 = vpop.f32.mrb[0].mxu0
  %v2045 = vadd.f32 0.0, %v2044
  %v2046 = vpop.f32.mrb[0].mxu0
  %2047 = vdwg.mxu0
  %v2064 = vunpack.c.l.b16 %v1909
  %v2065 = vunpack.c.l.b16 %v1910
  %v2066 = vunpack.c.l.b16 %v1911
  %v2067 = vunpack.c.l.b16 %v1912
  %v2068 = vunpack.c.l.b16 %v1913
  %v2069 = vunpack.c.l.b16 %v1914
  %v2070 = vunpack.c.l.b16 %v1915
  %v2071 = vunpack.c.l.b16 %v1916
  %v2072 = vunpack.c.l.b16 %v1917
  %v2073 = vunpack.c.l.b16 %v1918
  %v2074 = vunpack.c.l.b16 %v1919
  %v2075 = vunpack.c.l.b16 %v1920
  %v2076 = vunpack.c.l.b16 %v1921
  %v2077 = vunpack.c.l.b16 %v1922
  %v2078 = vunpack.c.l.b16 %v1923
  %v2079 = vunpack.c.l.b16 %v1924
  %v2080 = vpack.c.b16 %v2065, %v2064
  %v2081 = vpack.c.b16 %v2067, %v2066
  %v2082 = vpack.c.b16 %v2069, %v2068
  %v2083 = vpack.c.b16 %v2071, %v2070
  %v2084 = vpack.c.b16 %v2073, %v2072
  %v2085 = vpack.c.b16 %v2075, %v2074
  %v2086 = vpack.c.b16 %v2077, %v2076
  %v2087 = vpack.c.b16 %v2079, %v2078
  %2096 = vmatprep.subr.bf16.mxu0 0
  %2097 = vmatpush1.bf16.msra.mxu0 %v2080
  %2098 = vmatprep.subr.bf16.mxu0 0
  %2099 = vmatpush1.bf16.msra.mxu0 %v2081
  %2100 = vmatprep.subr.bf16.mxu0 0
  %2101 = vmatpush1.bf16.msra.mxu0 %v2082
  %2102 = vmatprep.subr.bf16.mxu0 0
  %2103 = vmatpush1.bf16.msra.mxu0 %v2083
  %2104 = vmatprep.subr.bf16.mxu0 0
  %2105 = vmatpush1.bf16.msra.mxu0 %v2084
  %2106 = vmatprep.subr.bf16.mxu0 0
  %2107 = vmatpush1.bf16.msra.mxu0 %v2085
  %2108 = vmatprep.subr.bf16.mxu0 0
  %2109 = vmatpush1.bf16.msra.mxu0 %v2086
  %2110 = vmatprep.subr.bf16.mxu0 0
  %2111 = vmatpush1.bf16.msra.mxu0 %v2087
  %2112 = vmatprep.subr.bf16.mxu0 0
  %2113 = vmatpush1.bf16.msra.mxu0 0
  %2114 = vmatprep.subr.bf16.mxu0 0
  %2115 = vmatpush1.bf16.msra.mxu0 0
  %2116 = vmatprep.subr.bf16.mxu0 0
  %2117 = vmatpush1.bf16.msra.mxu0 0
  %2118 = vmatprep.subr.bf16.mxu0 0
  %2119 = vmatpush1.bf16.msra.mxu0 0
  %2120 = vmatprep.subr.bf16.mxu0 0
  %2121 = vmatpush1.bf16.msra.mxu0 0
  %2122 = vmatprep.subr.bf16.mxu0 0
  %2123 = vmatpush1.bf16.msra.mxu0 0
  %2124 = vmatprep.subr.bf16.mxu0 0
  %2125 = vmatpush1.bf16.msra.mxu0 0
  %2126 = vmatprep.subr.bf16.mxu0 0
  %2127 = vmatpush1.bf16.msra.mxu0 0
  %2128 = vmatprep.mubr.bf16.mxu0 0
  %2129 = vmatmul.mubr.bf16.gmra.mrb[0].mxu0 %v1908
  %v2130 = vpop.f32.mrb[0].mxu0
  %v2131 = vadd.f32 %v2042, %v2130
  %v2132 = vpop.f32.mrb[0].mxu0
  %v2133 = vpop.f32.mrb[0].mxu0
  %v2134 = vadd.f32 %v2045, %v2133
  %v2135 = vpop.f32.mrb[0].mxu0
  %2136 = vdwg.mxu0
  %v2137 = vld [vmem:[#allocation2] sm:$0xfc]
  %v2138 = vld [vmem:[#allocation2 + $0x20] sm:$0x3]
  %v2139 = vpack.c.bf16 %v1907, %v2137
  %v2140 = vpack.c.bf16 %v2138, %v2138
  %s2141 = scalar_lea.vmem %s19, 128
  %v2142 = vld [vmem:[%s2141] sm:$0xf]
  %v2143 = vld [vmem:[%s2141 + $0x4] sm:$0xf]
  %v2144 = vld [vmem:[%s2141 + $0x8] sm:$0xf]
  %v2145 = vld [vmem:[%s2141 + $0xc] sm:$0xf]
  %v2146 = vld [vmem:[%s2141 + $0x10] sm:$0xf]
  %v2147 = vld [vmem:[%s2141 + $0x14] sm:$0xf]
  %v2148 = vld [vmem:[%s2141 + $0x18] sm:$0xf]
  %v2149 = vld [vmem:[%s2141 + $0x1c] sm:$0xf]
  %v2150 = vld [vmem:[%s2141 + $0x20] sm:$0xf]
  %v2151 = vld [vmem:[%s2141 + $0x24] sm:$0xf]
  %v2152 = vld [vmem:[%s2141 + $0x28] sm:$0xf]
  %v2153 = vld [vmem:[%s2141 + $0x2c] sm:$0xf]
  %v2154 = vld [vmem:[%s2141 + $0x30] sm:$0xf]
  %v2155 = vld [vmem:[%s2141 + $0x34] sm:$0xf]
  %v2156 = vld [vmem:[%s2141 + $0x38] sm:$0xf]
  %v2157 = vld [vmem:[%s2141 + $0x3c] sm:$0xf]
  %v2160 = vrot.slane %v2139, 1
  %v2161 = vrot.slane %v2140, 1
  %v2162 = vsel %vm758, %v2160, %v2161
  %v2180 = vunpack.c.l.b16 %v2142
  %v2181 = vunpack.c.l.b16 %v2143
  %v2182 = vunpack.c.l.b16 %v2144
  %v2183 = vunpack.c.l.b16 %v2145
  %v2184 = vunpack.c.l.b16 %v2146
  %v2185 = vunpack.c.l.b16 %v2147
  %v2186 = vunpack.c.l.b16 %v2148
  %v2187 = vunpack.c.l.b16 %v2149
  %v2188 = vunpack.c.l.b16 %v2150
  %v2189 = vunpack.c.l.b16 %v2151
  %v2190 = vunpack.c.l.b16 %v2152
  %v2191 = vunpack.c.l.b16 %v2153
  %v2192 = vunpack.c.l.b16 %v2154
  %v2193 = vunpack.c.l.b16 %v2155
  %v2194 = vunpack.c.l.b16 %v2156
  %v2195 = vunpack.c.l.b16 %v2157
  %v2196 = vpack.c.b16 %v2181, %v2180
  %v2197 = vpack.c.b16 %v2183, %v2182
  %v2198 = vpack.c.b16 %v2185, %v2184
  %v2199 = vpack.c.b16 %v2187, %v2186
  %v2200 = vpack.c.b16 %v2189, %v2188
  %v2201 = vpack.c.b16 %v2191, %v2190
  %v2202 = vpack.c.b16 %v2193, %v2192
  %v2203 = vpack.c.b16 %v2195, %v2194
  %2212 = vmatprep.subr.bf16.mxu0 0
  %2213 = vmatpush1.bf16.msra.mxu0 %v2196
  %2214 = vmatprep.subr.bf16.mxu0 0
  %2215 = vmatpush1.bf16.msra.mxu0 %v2197
  %2216 = vmatprep.subr.bf16.mxu0 0
  %2217 = vmatpush1.bf16.msra.mxu0 %v2198
  %2218 = vmatprep.subr.bf16.mxu0 0
  %2219 = vmatpush1.bf16.msra.mxu0 %v2199
  %2220 = vmatprep.subr.bf16.mxu0 0
  %2221 = vmatpush1.bf16.msra.mxu0 %v2200
  %2222 = vmatprep.subr.bf16.mxu0 0
  %2223 = vmatpush1.bf16.msra.mxu0 %v2201
  %2224 = vmatprep.subr.bf16.mxu0 0
  %2225 = vmatpush1.bf16.msra.mxu0 %v2202
  %2226 = vmatprep.subr.bf16.mxu0 0
  %2227 = vmatpush1.bf16.msra.mxu0 %v2203
  %2228 = vmatprep.subr.bf16.mxu0 0
  %2229 = vmatpush1.bf16.msra.mxu0 0
  %2230 = vmatprep.subr.bf16.mxu0 0
  %2231 = vmatpush1.bf16.msra.mxu0 0
  %2232 = vmatprep.subr.bf16.mxu0 0
  %2233 = vmatpush1.bf16.msra.mxu0 0
  %2234 = vmatprep.subr.bf16.mxu0 0
  %2235 = vmatpush1.bf16.msra.mxu0 0
  %2236 = vmatprep.subr.bf16.mxu0 0
  %2237 = vmatpush1.bf16.msra.mxu0 0
  %2238 = vmatprep.subr.bf16.mxu0 0
  %2239 = vmatpush1.bf16.msra.mxu0 0
  %2240 = vmatprep.subr.bf16.mxu0 0
  %2241 = vmatpush1.bf16.msra.mxu0 0
  %2242 = vmatprep.subr.bf16.mxu0 0
  %2243 = vmatpush1.bf16.msra.mxu0 0
  %2244 = vmatprep.mubr.bf16.mxu0 0
  %2245 = vmatmul.mubr.bf16.gmra.mrb[0].mxu0 %v2162
  %v2246 = vpop.f32.mrb[0].mxu0
  %v2247 = vadd.f32 0.0, %v2246
  %v2248 = vpop.f32.mrb[0].mxu0
  %v2249 = vpop.f32.mrb[0].mxu0
  %v2250 = vadd.f32 0.0, %v2249
  %v2251 = vpop.f32.mrb[0].mxu0
  %2252 = vdwg.mxu0
  %v2253 = vadd.f32 %v2131, %v2247
  %v2254 = vadd.f32 %v2134, %v2250
  %v2255 = vadd.f32 %v2253, %v1493
  %v2256 = vadd.f32 %v2254, %v1494
  %2257 = vst [vmem:[%s20] sm:$0xff] %v2255
  %2258 = vst [vmem:[%s20 + $0x8] sm:$0xff] %v2256
  // Predicated region
  $region82: #{up_block_forward.1} parent=0 // pred_check
    _
  $region83: #{up_block_forward.1} parent=0 // pred_check_branch
    %2260 = sbr.rel (0) target = $region85
  $region84: #{up_block_forward.1} parent=0 // pred_region
    _
  $region85: #{up_block_forward.1} parent=0 // pred_fallthru
    _
  // Predicated region
  $region86: #{up_block_forward.1} parent=0 // pred_check
    _
  $region87: #{up_block_forward.1} parent=0 // pred_check_branch
    %2262 = sbr.rel (0) target = $region89
  $region88: #{up_block_forward.1} parent=0 // pred_region
    _
  $region89: #{up_block_forward.1} parent=0 // pred_fallthru
    _

</llo_original>
